<compile_context>
chip_gen: v6e
topology: v6e:2x2x1
jax: 0.10.0
libtpu: 0.0.40
codegen_flags: <defaults>
</compile_context>

<pallas_src>
import functools
import math

import jax
import jax.numpy as jnp
import numpy as np
from jax.experimental import pallas as pl
from jax.experimental.pallas import tpu as pltpu


# ----------------------------- Pallas kernel ----------------------------------


def _layernorm(v, g, b, eps=1e-6):
    mu = jnp.mean(v, axis=-1, keepdims=True)
    var = jnp.mean((v - mu) ** 2, axis=-1, keepdims=True)
    return (v - mu) * jax.lax.rsqrt(var + eps) * g + b


def fused_encoder_kernel(L, H, dh,
                         x_ref, bias_ref,
                         g_att_ref, b_att_ref,
                         wq_ref, bq_ref, wk_ref, bk_ref, wv_ref, bv_ref,
                         wo_ref, bo_ref,
                         g_ffn_ref, b_ffn_ref,
                         w1_ref, b1_ref, w2_ref, b2_ref,
                         g_fin_ref, b_fin_ref,
                         o_ref):
    # x_ref:    (B*S, D)   activations, row = b*S + s
    # bias_ref: (B*S, B*S) additive attention bias (0 or -1e18); encodes both
    #           the pad-key mask and the block-diagonal batch structure.
    x = x_ref[...]
    bias = bias_ref[...]
    scale = 1.0 / math.sqrt(dh)

    for l in range(L):                       # static unroll over layers (L=2)
        # ---------------- self-attention sublayer (pre-norm) ----------------
        xn = _layernorm(x, g_att_ref[l], b_att_ref[l])
        q = (jnp.dot(xn, wq_ref[l], preferred_element_type=jnp.float32)
             + bq_ref[l]) * scale
        k = jnp.dot(xn, wk_ref[l], preferred_element_type=jnp.float32) + bk_ref[l]
        v = jnp.dot(xn, wv_ref[l], preferred_element_type=jnp.float32) + bv_ref[l]
        wo = wo_ref[l]

        attn = jnp.zeros_like(x)
        for h in range(H):                   # static unroll over heads (H=4)
            sl = slice(h * dh, (h + 1) * dh)
            # Scores over ALL B*S rows at once; cross-batch / pad entries are
            # killed by the precomputed additive bias.
            s = jnp.dot(q[:, sl], k[:, sl].T,
                        preferred_element_type=jnp.float32) + bias   # (BS, BS)
            s = s - jnp.max(s, axis=-1, keepdims=True)
            p = jnp.exp(s)
            p = p * pl.reciprocal(jnp.sum(p, axis=-1, keepdims=True), approx=True)
            ctx = jnp.dot(p, v[:, sl], preferred_element_type=jnp.float32)
            attn = attn + jnp.dot(ctx, wo[sl, :],
                                  preferred_element_type=jnp.float32)
        x = x + attn + bo_ref[l]             # dropout == identity (eval mode)

        # ---------------- feed-forward sublayer (pre-norm) -------------------
        xn2 = _layernorm(x, g_ffn_ref[l], b_ffn_ref[l])
        hid = jnp.dot(xn2, w1_ref[l], preferred_element_type=jnp.float32) + b1_ref[l]
        hid = jnp.maximum(hid, 0.0)
        x = x + jnp.dot(hid, w2_ref[l], preferred_element_type=jnp.float32) + b2_ref[l]

    # final LayerNorm (MyTransformerEncoder.layer_norm)
    o_ref[...] = _layernorm(x, g_fin_ref[...], b_fin_ref[...])


# ----------------------------- wrapper ----------------------------------------


def _full_spec(arr):
    nd = arr.ndim
    return pl.BlockSpec(arr.shape, lambda i, _nd=nd: (0,) * _nd)


def encoder_forward(src, emb_table, layer_params, final_g, final_b, pad_id, heads):
    S, B = src.shape
    D = emb_table.shape[1]
    L = len(layer_params)
    dh = D // heads

    # Embedding lookup + layout plumbing (plain XLA glue around the one kernel).
    emb = jnp.take(emb_table, src, axis=0)                  # (S, B, D)
    x0 = jnp.transpose(emb, (1, 0, 2)).reshape(B * S, D)    # (B*S, D)

    # Precompute the additive attention bias once: -1e18 where the key is a pad
    # token OR belongs to a different batch element (block-diagonal structure),
    # 0 elsewhere.
    words = src.T                                           # (B, S)
    key_pad = (words == pad_id).reshape(B * S)              # (B*S,)
    row_batch = jnp.repeat(jnp.arange(B, dtype=jnp.int32), S)
    cross_batch = row_batch[:, None] != row_batch[None, :]
    bias_full = jnp.where(cross_batch | key_pad[None, :],
                          jnp.float32(-1e18), jnp.float32(0.0))   # (B*S, B*S)

    # Stack per-layer weights along a leading L axis.
    names = ("g_att", "b_att", "wq", "bq", "wk", "bk", "wv", "bv",
             "wo", "bo", "g_ffn", "b_ffn", "w1", "b1", "w2", "b2")
    weights = [jnp.stack([p[n] for p in layer_params], axis=0) for n in names]

    inputs = [x0, bias_full] + weights + [final_g, final_b]

    out_flat = pl.pallas_call(
        functools.partial(fused_encoder_kernel, L, heads, dh),
        out_shape=jax.ShapeDtypeStruct((B * S, D), jnp.float32),
        grid=(1,),                                          # single fused step
        in_specs=[_full_spec(a) for a in inputs],
        out_specs=pl.BlockSpec((B * S, D), lambda i: (0, 0)),
        compiler_params=pltpu.CompilerParams(dimension_semantics=("arbitrary",)),
    )(*inputs)

    out_sbd = jnp.transpose(out_flat.reshape(B, S, D), (1, 0, 2))   # (S, B, D)
    return None, out_sbd, emb


# ----------------------------- pure-JAX reference -----------------------------


def reference_forward(src, emb_table, layer_params, final_g, final_b, pad_id, heads):
    emb = jnp.take(emb_table, src, axis=0)
    out = jnp.transpose(emb, (1, 0, 2))
    words = src.T
    pad = (words == pad_id)[:, None, None, :]          # (B,1,1,S)

    def ln(v, g, b):
        mu = v.mean(-1, keepdims=True)
        var = ((v - mu) ** 2).mean(-1, keepdims=True)
        return (v - mu) / jnp.sqrt(var + 1e-6) * g + b

    B, S, D = out.shape
    dh = D // heads
    for p in layer_params:
        xn = ln(out, p["g_att"], p["b_att"])
        q = xn @ p["wq"] + p["bq"]
        k = xn @ p["wk"] + p["bk"]
        v = xn @ p["wv"] + p["bv"]
        qh = q.reshape(B, S, heads, dh).transpose(0, 2, 1, 3) / math.sqrt(dh)
        kh = k.reshape(B, S, heads, dh).transpose(0, 2, 1, 3)
        vh = v.reshape(B, S, heads, dh).transpose(0, 2, 1, 3)
        s = jnp.einsum("bhqd,bhkd->bhqk", qh, kh)
        s = jnp.where(pad, -1e18, s)
        pr = jax.nn.softmax(s, axis=-1)
        ctx = jnp.einsum("bhqk,bhkd->bhqd", pr, vh).transpose(0, 2, 1, 3).reshape(B, S, D)
        out = out + (ctx @ p["wo"] + p["bo"])
        xn2 = ln(out, p["g_ffn"], p["b_ffn"])
        out = out + (jnp.maximum(xn2 @ p["w1"] + p["b1"], 0.0) @ p["w2"] + p["b2"])
    out = ln(out, final_g, final_b)
    return jnp.transpose(out, (1, 0, 2))


# ----------------------------- main -------------------------------------------

if __name__ == "__main__":
    S, B, V, D, H, F, L = 8, 2, 16, 32, 4, 64, 2   # seq, batch, vocab, d_model, heads, d_ff, layers
    PAD = 0

    key = jax.random.PRNGKey(0)

    def xavier(k, shape):
        lim = math.sqrt(6.0 / (shape[0] + shape[1]))
        return jax.random.uniform(k, shape, jnp.float32, -lim, lim)

    key, k_emb, k_src = jax.random.split(key, 3)
    emb_table = 0.1 * jax.random.normal(k_emb, (V, D), jnp.float32)
    emb_table = emb_table.at[PAD].set(0.0)          # nn.Embedding padding_idx row

    src = jax.random.randint(k_src, (S, B), 1, V).astype(jnp.int32)
    src = src.at[6:, 0].set(PAD)                    # some padding in batch 0

    layer_params = []
    for _ in range(L):
        keys = jax.random.split(key, 16)
        key = keys[0]
        p = dict(
            g_att=1.0 + 0.05 * jax.random.normal(keys[1], (1, D), jnp.float32),
            b_att=0.05 * jax.random.normal(keys[2], (1, D), jnp.float32),
            wq=xavier(keys[3], (D, D)), bq=0.02 * jax.random.normal(keys[4], (1, D)),
            wk=xavier(keys[5], (D, D)), bk=0.02 * jax.random.normal(keys[6], (1, D)),
            wv=xavier(keys[7], (D, D)), bv=0.02 * jax.random.normal(keys[8], (1, D)),
            wo=xavier(keys[9], (D, D)), bo=0.02 * jax.random.normal(keys[10], (1, D)),
            g_ffn=1.0 + 0.05 * jax.random.normal(keys[11], (1, D), jnp.float32),
            b_ffn=0.05 * jax.random.normal(keys[12], (1, D), jnp.float32),
            w1=xavier(keys[13], (D, F)), b1=0.02 * jax.random.normal(keys[14], (1, F)),
            w2=xavier(keys[15], (F, D)), b2=jnp.zeros((1, D), jnp.float32),
        )
        layer_params.append(p)

    key, kg, kb = jax.random.split(key, 3)
    final_g = 1.0 + 0.05 * jax.random.normal(kg, (1, D), jnp.float32)
    final_b = 0.05 * jax.random.normal(kb, (1, D), jnp.float32)

    none_out, out_sbd, emb = encoder_forward(src, emb_table, layer_params,
                                             final_g, final_b, PAD, H)
    out_sbd = jax.block_until_ready(out_sbd)
    emb = jax.block_until_ready(emb)

    # sanity: shapes + numerical check vs pure-JAX reference
    assert none_out is None
    assert out_sbd.shape == (S, B, D) and emb.shape == (S, B, D)
    ref = reference_forward(src, emb_table, layer_params, final_g, final_b, PAD, H)
    np.testing.assert_allclose(np.asarray(out_sbd), np.asarray(ref),
                               rtol=2e-2, atol=2e-2)

    print("KERNEL_OK")
</pallas_src>

<mosaic_0001>
module attributes {stable_mosaic.version = 11 : i64} {
  func.func @fused_encoder_kernel(%arg0: i32, %arg1: memref<16x32xf32, #tpu.memory_space<vmem>>, %arg2: memref<16x16xf32, #tpu.memory_space<vmem>>, %arg3: memref<2x1x32xf32, #tpu.memory_space<vmem>>, %arg4: memref<2x1x32xf32, #tpu.memory_space<vmem>>, %arg5: memref<2x32x32xf32, #tpu.memory_space<vmem>>, %arg6: memref<2x1x32xf32, #tpu.memory_space<vmem>>, %arg7: memref<2x32x32xf32, #tpu.memory_space<vmem>>, %arg8: memref<2x1x32xf32, #tpu.memory_space<vmem>>, %arg9: memref<2x32x32xf32, #tpu.memory_space<vmem>>, %arg10: memref<2x1x32xf32, #tpu.memory_space<vmem>>, %arg11: memref<2x32x32xf32, #tpu.memory_space<vmem>>, %arg12: memref<2x1x32xf32, #tpu.memory_space<vmem>>, %arg13: memref<2x1x32xf32, #tpu.memory_space<vmem>>, %arg14: memref<2x1x32xf32, #tpu.memory_space<vmem>>, %arg15: memref<2x32x64xf32, #tpu.memory_space<vmem>>, %arg16: memref<2x1x64xf32, #tpu.memory_space<vmem>>, %arg17: memref<2x64x32xf32, #tpu.memory_space<vmem>>, %arg18: memref<2x1x32xf32, #tpu.memory_space<vmem>>, %arg19: memref<1x32xf32, #tpu.memory_space<vmem>>, %arg20: memref<1x32xf32, #tpu.memory_space<vmem>>, %arg21: memref<16x32xf32, #tpu.memory_space<vmem>>) attributes {dimension_semantics = [#tpu.dimension_semantics<arbitrary>], iteration_bounds = array<i64: 1>, scalar_prefetch = 0 : i64, scratch_operands = 0 : i64, tpu.core_type = #tpu.core_type<tc>, window_params = [{pipeline_mode = #tpu.pipeline_mode<synchronous>, transform_indices = @transform_0, window_bounds = array<i64: 16, 32>}, {pipeline_mode = #tpu.pipeline_mode<synchronous>, transform_indices = @transform_1, window_bounds = array<i64: 16, 16>}, {pipeline_mode = #tpu.pipeline_mode<synchronous>, transform_indices = @transform_2, window_bounds = array<i64: 2, 1, 32>}, {pipeline_mode = #tpu.pipeline_mode<synchronous>, transform_indices = @transform_3, window_bounds = array<i64: 2, 1, 32>}, {pipeline_mode = #tpu.pipeline_mode<synchronous>, transform_indices = @transform_4, window_bounds = array<i64: 2, 32, 32>}, {pipeline_mode = #tpu.pipeline_mode<synchronous>, transform_indices = @transform_5, window_bounds = array<i64: 2, 1, 32>}, {pipeline_mode = #tpu.pipeline_mode<synchronous>, transform_indices = @transform_6, window_bounds = array<i64: 2, 32, 32>}, {pipeline_mode = #tpu.pipeline_mode<synchronous>, transform_indices = @transform_7, window_bounds = array<i64: 2, 1, 32>}, {pipeline_mode = #tpu.pipeline_mode<synchronous>, transform_indices = @transform_8, window_bounds = array<i64: 2, 32, 32>}, {pipeline_mode = #tpu.pipeline_mode<synchronous>, transform_indices = @transform_9, window_bounds = array<i64: 2, 1, 32>}, {pipeline_mode = #tpu.pipeline_mode<synchronous>, transform_indices = @transform_10, window_bounds = array<i64: 2, 32, 32>}, {pipeline_mode = #tpu.pipeline_mode<synchronous>, transform_indices = @transform_11, window_bounds = array<i64: 2, 1, 32>}, {pipeline_mode = #tpu.pipeline_mode<synchronous>, transform_indices = @transform_12, window_bounds = array<i64: 2, 1, 32>}, {pipeline_mode = #tpu.pipeline_mode<synchronous>, transform_indices = @transform_13, window_bounds = array<i64: 2, 1, 32>}, {pipeline_mode = #tpu.pipeline_mode<synchronous>, transform_indices = @transform_14, window_bounds = array<i64: 2, 32, 64>}, {pipeline_mode = #tpu.pipeline_mode<synchronous>, transform_indices = @transform_15, window_bounds = array<i64: 2, 1, 64>}, {pipeline_mode = #tpu.pipeline_mode<synchronous>, transform_indices = @transform_16, window_bounds = array<i64: 2, 64, 32>}, {pipeline_mode = #tpu.pipeline_mode<synchronous>, transform_indices = @transform_17, window_bounds = array<i64: 2, 1, 32>}, {pipeline_mode = #tpu.pipeline_mode<synchronous>, transform_indices = @transform_18, window_bounds = array<i64: 1, 32>}, {pipeline_mode = #tpu.pipeline_mode<synchronous>, transform_indices = @transform_19, window_bounds = array<i64: 1, 32>}, {pipeline_mode = #tpu.pipeline_mode<synchronous>, transform_indices = @transform_20, window_bounds = array<i64: 16, 32>}]} {
    %c0 = arith.constant 0 : index
    %c0_0 = arith.constant 0 : index
    %0 = vector.load %arg1[%c0, %c0_0] : memref<16x32xf32, #tpu.memory_space<vmem>>, vector<16x32xf32>
    %c0_1 = arith.constant 0 : index
    %c0_2 = arith.constant 0 : index
    %1 = vector.load %arg2[%c0_1, %c0_2] : memref<16x16xf32, #tpu.memory_space<vmem>>, vector<16x16xf32>
    %c0_3 = arith.constant 0 : index
    %c0_4 = arith.constant 0 : index
    %c0_5 = arith.constant 0 : index
    %2 = vector.load %arg3[%c0_3, %c0_4, %c0_5] : memref<2x1x32xf32, #tpu.memory_space<vmem>>, vector<1x1x32xf32>
    %3 = vector.shape_cast %2 : vector<1x1x32xf32> to vector<1x32xf32>
    %c0_6 = arith.constant 0 : index
    %c0_7 = arith.constant 0 : index
    %c0_8 = arith.constant 0 : index
    %4 = vector.load %arg4[%c0_6, %c0_7, %c0_8] : memref<2x1x32xf32, #tpu.memory_space<vmem>>, vector<1x1x32xf32>
    %5 = vector.shape_cast %4 : vector<1x1x32xf32> to vector<1x32xf32>
    %cst = arith.constant dense<0.000000e+00> : vector<16xf32>
    %6 = vector.multi_reduction <add>, %0, %cst [1] : vector<16x32xf32> to vector<16xf32>
    %7 = vector.shape_cast %6 : vector<16xf32> to vector<16x1xf32>
    %cst_9 = arith.constant 3.200000e+01 : f32
    %8 = vector.broadcast %cst_9 : f32 to vector<16x1xf32>
    %9 = arith.divf %7, %8 : vector<16x1xf32>
    %10 = vector.broadcast %9 : vector<16x1xf32> to vector<16x32xf32>
    %11 = arith.subf %0, %10 : vector<16x32xf32>
    %12 = arith.mulf %11, %11 : vector<16x32xf32>
    %cst_10 = arith.constant dense<0.000000e+00> : vector<16xf32>
    %13 = vector.multi_reduction <add>, %12, %cst_10 [1] : vector<16x32xf32> to vector<16xf32>
    %14 = vector.shape_cast %13 : vector<16xf32> to vector<16x1xf32>
    %cst_11 = arith.constant 3.200000e+01 : f32
    %15 = vector.broadcast %cst_11 : f32 to vector<16x1xf32>
    %16 = arith.divf %14, %15 : vector<16x1xf32>
    %17 = vector.broadcast %9 : vector<16x1xf32> to vector<16x32xf32>
    %18 = arith.subf %0, %17 : vector<16x32xf32>
    %cst_12 = arith.constant 9.99999997E-7 : f32
    %19 = vector.broadcast %cst_12 : f32 to vector<16x1xf32>
    %20 = arith.addf %16, %19 : vector<16x1xf32>
    %21 = math.rsqrt %20 : vector<16x1xf32>
    %22 = vector.broadcast %21 : vector<16x1xf32> to vector<16x32xf32>
    %23 = arith.mulf %18, %22 : vector<16x32xf32>
    %24 = vector.broadcast %3 : vector<1x32xf32> to vector<16x32xf32>
    %25 = arith.mulf %23, %24 : vector<16x32xf32>
    %26 = vector.broadcast %5 : vector<1x32xf32> to vector<16x32xf32>
    %27 = arith.addf %25, %26 : vector<16x32xf32>
    %c0_13 = arith.constant 0 : index
    %c0_14 = arith.constant 0 : index
    %c0_15 = arith.constant 0 : index
    %28 = vector.load %arg5[%c0_13, %c0_14, %c0_15] : memref<2x32x32xf32, #tpu.memory_space<vmem>>, vector<1x32x32xf32>
    %29 = vector.shape_cast %28 : vector<1x32x32xf32> to vector<32x32xf32>
    %cst_16 = arith.constant dense<0.000000e+00> : vector<16x32xf32>
    %30 = tpu.matmul %27, %29, %cst_16 {dimension_numbers = #tpu.dot_dimension_numbers<[1], [0], [0], [1], [0, 0, 1, 1], [], []>} : vector<16x32xf32>, vector<32x32xf32>, vector<16x32xf32> -> vector<16x32xf32>
    %c0_17 = arith.constant 0 : index
    %c0_18 = arith.constant 0 : index
    %c0_19 = arith.constant 0 : index
    %31 = vector.load %arg6[%c0_17, %c0_18, %c0_19] : memref<2x1x32xf32, #tpu.memory_space<vmem>>, vector<1x1x32xf32>
    %32 = vector.shape_cast %31 : vector<1x1x32xf32> to vector<1x32xf32>
    %33 = vector.broadcast %32 : vector<1x32xf32> to vector<16x32xf32>
    %34 = arith.addf %30, %33 : vector<16x32xf32>
    %cst_20 = arith.constant 0.353553385 : f32
    %35 = vector.broadcast %cst_20 : f32 to vector<16x32xf32>
    %36 = arith.mulf %34, %35 : vector<16x32xf32>
    %c0_21 = arith.constant 0 : index
    %c0_22 = arith.constant 0 : index
    %c0_23 = arith.constant 0 : index
    %37 = vector.load %arg7[%c0_21, %c0_22, %c0_23] : memref<2x32x32xf32, #tpu.memory_space<vmem>>, vector<1x32x32xf32>
    %38 = vector.shape_cast %37 : vector<1x32x32xf32> to vector<32x32xf32>
    %cst_24 = arith.constant dense<0.000000e+00> : vector<16x32xf32>
    %39 = tpu.matmul %27, %38, %cst_24 {dimension_numbers = #tpu.dot_dimension_numbers<[1], [0], [0], [1], [0, 0, 1, 1], [], []>} : vector<16x32xf32>, vector<32x32xf32>, vector<16x32xf32> -> vector<16x32xf32>
    %c0_25 = arith.constant 0 : index
    %c0_26 = arith.constant 0 : index
    %c0_27 = arith.constant 0 : index
    %40 = vector.load %arg8[%c0_25, %c0_26, %c0_27] : memref<2x1x32xf32, #tpu.memory_space<vmem>>, vector<1x1x32xf32>
    %41 = vector.shape_cast %40 : vector<1x1x32xf32> to vector<1x32xf32>
    %42 = vector.broadcast %41 : vector<1x32xf32> to vector<16x32xf32>
    %43 = arith.addf %39, %42 : vector<16x32xf32>
    %c0_28 = arith.constant 0 : index
    %c0_29 = arith.constant 0 : index
    %c0_30 = arith.constant 0 : index
    %44 = vector.load %arg9[%c0_28, %c0_29, %c0_30] : memref<2x32x32xf32, #tpu.memory_space<vmem>>, vector<1x32x32xf32>
    %45 = vector.shape_cast %44 : vector<1x32x32xf32> to vector<32x32xf32>
    %cst_31 = arith.constant dense<0.000000e+00> : vector<16x32xf32>
    %46 = tpu.matmul %27, %45, %cst_31 {dimension_numbers = #tpu.dot_dimension_numbers<[1], [0], [0], [1], [0, 0, 1, 1], [], []>} : vector<16x32xf32>, vector<32x32xf32>, vector<16x32xf32> -> vector<16x32xf32>
    %c0_32 = arith.constant 0 : index
    %c0_33 = arith.constant 0 : index
    %c0_34 = arith.constant 0 : index
    %47 = vector.load %arg10[%c0_32, %c0_33, %c0_34] : memref<2x1x32xf32, #tpu.memory_space<vmem>>, vector<1x1x32xf32>
    %48 = vector.shape_cast %47 : vector<1x1x32xf32> to vector<1x32xf32>
    %49 = vector.broadcast %48 : vector<1x32xf32> to vector<16x32xf32>
    %50 = arith.addf %46, %49 : vector<16x32xf32>
    %c0_35 = arith.constant 0 : index
    %c0_36 = arith.constant 0 : index
    %c0_37 = arith.constant 0 : index
    %51 = vector.load %arg11[%c0_35, %c0_36, %c0_37] : memref<2x32x32xf32, #tpu.memory_space<vmem>>, vector<1x32x32xf32>
    %52 = vector.shape_cast %51 : vector<1x32x32xf32> to vector<32x32xf32>
    %cst_38 = arith.constant 0.000000e+00 : f32
    %53 = vector.broadcast %cst_38 : f32 to vector<16x32xf32>
    %54 = vector.extract_strided_slice %36 {offsets = [0, 0], sizes = [16, 8], strides = [1, 1]} : vector<16x32xf32> to vector<16x8xf32>
    %55 = vector.extract_strided_slice %43 {offsets = [0, 0], sizes = [16, 8], strides = [1, 1]} : vector<16x32xf32> to vector<16x8xf32>
    %56 = tpu.transpose %55, [1, 0] : vector<16x8xf32> -> vector<8x16xf32>
    %cst_39 = arith.constant dense<0.000000e+00> : vector<16x16xf32>
    %57 = tpu.matmul %54, %56, %cst_39 {dimension_numbers = #tpu.dot_dimension_numbers<[1], [0], [0], [1], [0, 0, 1, 1], [], []>} : vector<16x8xf32>, vector<8x16xf32>, vector<16x16xf32> -> vector<16x16xf32>
    %58 = arith.addf %57, %1 : vector<16x16xf32>
    %cst_40 = arith.constant dense<0xFF800000> : vector<16xf32>
    %59 = vector.multi_reduction <maximumf>, %58, %cst_40 [1] : vector<16x16xf32> to vector<16xf32>
    %60 = vector.shape_cast %59 : vector<16xf32> to vector<16x1xf32>
    %61 = vector.broadcast %60 : vector<16x1xf32> to vector<16x16xf32>
    %62 = arith.subf %58, %61 : vector<16x16xf32>
    %63 = math.exp %62 : vector<16x16xf32>
    %cst_41 = arith.constant dense<0.000000e+00> : vector<16xf32>
    %64 = vector.multi_reduction <add>, %63, %cst_41 [1] : vector<16x16xf32> to vector<16xf32>
    %65 = vector.shape_cast %64 : vector<16xf32> to vector<16x1xf32>
    %66 = tpu.reciprocal %65 {approx = true} : vector<16x1xf32> -> vector<16x1xf32>
    %67 = vector.broadcast %66 : vector<16x1xf32> to vector<16x16xf32>
    %68 = arith.mulf %63, %67 : vector<16x16xf32>
    %69 = vector.extract_strided_slice %50 {offsets = [0, 0], sizes = [16, 8], strides = [1, 1]} : vector<16x32xf32> to vector<16x8xf32>
    %cst_42 = arith.constant dense<0.000000e+00> : vector<16x8xf32>
    %70 = tpu.matmul %68, %69, %cst_42 {dimension_numbers = #tpu.dot_dimension_numbers<[1], [0], [0], [1], [0, 0, 1, 1], [], []>} : vector<16x16xf32>, vector<16x8xf32>, vector<16x8xf32> -> vector<16x8xf32>
    %71 = vector.extract_strided_slice %52 {offsets = [0, 0], sizes = [8, 32], strides = [1, 1]} : vector<32x32xf32> to vector<8x32xf32>
    %cst_43 = arith.constant dense<0.000000e+00> : vector<16x32xf32>
    %72 = tpu.matmul %70, %71, %cst_43 {dimension_numbers = #tpu.dot_dimension_numbers<[1], [0], [0], [1], [0, 0, 1, 1], [], []>} : vector<16x8xf32>, vector<8x32xf32>, vector<16x32xf32> -> vector<16x32xf32>
    %73 = arith.addf %53, %72 : vector<16x32xf32>
    %74 = vector.extract_strided_slice %36 {offsets = [0, 8], sizes = [16, 8], strides = [1, 1]} : vector<16x32xf32> to vector<16x8xf32>
    %75 = vector.extract_strided_slice %43 {offsets = [0, 8], sizes = [16, 8], strides = [1, 1]} : vector<16x32xf32> to vector<16x8xf32>
    %76 = tpu.transpose %75, [1, 0] : vector<16x8xf32> -> vector<8x16xf32>
    %cst_44 = arith.constant dense<0.000000e+00> : vector<16x16xf32>
    %77 = tpu.matmul %74, %76, %cst_44 {dimension_numbers = #tpu.dot_dimension_numbers<[1], [0], [0], [1], [0, 0, 1, 1], [], []>} : vector<16x8xf32>, vector<8x16xf32>, vector<16x16xf32> -> vector<16x16xf32>
    %78 = arith.addf %77, %1 : vector<16x16xf32>
    %cst_45 = arith.constant dense<0xFF800000> : vector<16xf32>
    %79 = vector.multi_reduction <maximumf>, %78, %cst_45 [1] : vector<16x16xf32> to vector<16xf32>
    %80 = vector.shape_cast %79 : vector<16xf32> to vector<16x1xf32>
    %81 = vector.broadcast %80 : vector<16x1xf32> to vector<16x16xf32>
    %82 = arith.subf %78, %81 : vector<16x16xf32>
    %83 = math.exp %82 : vector<16x16xf32>
    %cst_46 = arith.constant dense<0.000000e+00> : vector<16xf32>
    %84 = vector.multi_reduction <add>, %83, %cst_46 [1] : vector<16x16xf32> to vector<16xf32>
    %85 = vector.shape_cast %84 : vector<16xf32> to vector<16x1xf32>
    %86 = tpu.reciprocal %85 {approx = true} : vector<16x1xf32> -> vector<16x1xf32>
    %87 = vector.broadcast %86 : vector<16x1xf32> to vector<16x16xf32>
    %88 = arith.mulf %83, %87 : vector<16x16xf32>
    %89 = vector.extract_strided_slice %50 {offsets = [0, 8], sizes = [16, 8], strides = [1, 1]} : vector<16x32xf32> to vector<16x8xf32>
    %cst_47 = arith.constant dense<0.000000e+00> : vector<16x8xf32>
    %90 = tpu.matmul %88, %89, %cst_47 {dimension_numbers = #tpu.dot_dimension_numbers<[1], [0], [0], [1], [0, 0, 1, 1], [], []>} : vector<16x16xf32>, vector<16x8xf32>, vector<16x8xf32> -> vector<16x8xf32>
    %91 = vector.extract_strided_slice %52 {offsets = [8, 0], sizes = [8, 32], strides = [1, 1]} : vector<32x32xf32> to vector<8x32xf32>
    %cst_48 = arith.constant dense<0.000000e+00> : vector<16x32xf32>
    %92 = tpu.matmul %90, %91, %cst_48 {dimension_numbers = #tpu.dot_dimension_numbers<[1], [0], [0], [1], [0, 0, 1, 1], [], []>} : vector<16x8xf32>, vector<8x32xf32>, vector<16x32xf32> -> vector<16x32xf32>
    %93 = arith.addf %73, %92 : vector<16x32xf32>
    %94 = vector.extract_strided_slice %36 {offsets = [0, 16], sizes = [16, 8], strides = [1, 1]} : vector<16x32xf32> to vector<16x8xf32>
    %95 = vector.extract_strided_slice %43 {offsets = [0, 16], sizes = [16, 8], strides = [1, 1]} : vector<16x32xf32> to vector<16x8xf32>
    %96 = tpu.transpose %95, [1, 0] : vector<16x8xf32> -> vector<8x16xf32>
    %cst_49 = arith.constant dense<0.000000e+00> : vector<16x16xf32>
    %97 = tpu.matmul %94, %96, %cst_49 {dimension_numbers = #tpu.dot_dimension_numbers<[1], [0], [0], [1], [0, 0, 1, 1], [], []>} : vector<16x8xf32>, vector<8x16xf32>, vector<16x16xf32> -> vector<16x16xf32>
    %98 = arith.addf %97, %1 : vector<16x16xf32>
    %cst_50 = arith.constant dense<0xFF800000> : vector<16xf32>
    %99 = vector.multi_reduction <maximumf>, %98, %cst_50 [1] : vector<16x16xf32> to vector<16xf32>
    %100 = vector.shape_cast %99 : vector<16xf32> to vector<16x1xf32>
    %101 = vector.broadcast %100 : vector<16x1xf32> to vector<16x16xf32>
    %102 = arith.subf %98, %101 : vector<16x16xf32>
    %103 = math.exp %102 : vector<16x16xf32>
    %cst_51 = arith.constant dense<0.000000e+00> : vector<16xf32>
    %104 = vector.multi_reduction <add>, %103, %cst_51 [1] : vector<16x16xf32> to vector<16xf32>
    %105 = vector.shape_cast %104 : vector<16xf32> to vector<16x1xf32>
    %106 = tpu.reciprocal %105 {approx = true} : vector<16x1xf32> -> vector<16x1xf32>
    %107 = vector.broadcast %106 : vector<16x1xf32> to vector<16x16xf32>
    %108 = arith.mulf %103, %107 : vector<16x16xf32>
    %109 = vector.extract_strided_slice %50 {offsets = [0, 16], sizes = [16, 8], strides = [1, 1]} : vector<16x32xf32> to vector<16x8xf32>
    %cst_52 = arith.constant dense<0.000000e+00> : vector<16x8xf32>
    %110 = tpu.matmul %108, %109, %cst_52 {dimension_numbers = #tpu.dot_dimension_numbers<[1], [0], [0], [1], [0, 0, 1, 1], [], []>} : vector<16x16xf32>, vector<16x8xf32>, vector<16x8xf32> -> vector<16x8xf32>
    %111 = vector.extract_strided_slice %52 {offsets = [16, 0], sizes = [8, 32], strides = [1, 1]} : vector<32x32xf32> to vector<8x32xf32>
    %cst_53 = arith.constant dense<0.000000e+00> : vector<16x32xf32>
    %112 = tpu.matmul %110, %111, %cst_53 {dimension_numbers = #tpu.dot_dimension_numbers<[1], [0], [0], [1], [0, 0, 1, 1], [], []>} : vector<16x8xf32>, vector<8x32xf32>, vector<16x32xf32> -> vector<16x32xf32>
    %113 = arith.addf %93, %112 : vector<16x32xf32>
    %114 = vector.extract_strided_slice %36 {offsets = [0, 24], sizes = [16, 8], strides = [1, 1]} : vector<16x32xf32> to vector<16x8xf32>
    %115 = vector.extract_strided_slice %43 {offsets = [0, 24], sizes = [16, 8], strides = [1, 1]} : vector<16x32xf32> to vector<16x8xf32>
    %116 = tpu.transpose %115, [1, 0] : vector<16x8xf32> -> vector<8x16xf32>
    %cst_54 = arith.constant dense<0.000000e+00> : vector<16x16xf32>
    %117 = tpu.matmul %114, %116, %cst_54 {dimension_numbers = #tpu.dot_dimension_numbers<[1], [0], [0], [1], [0, 0, 1, 1], [], []>} : vector<16x8xf32>, vector<8x16xf32>, vector<16x16xf32> -> vector<16x16xf32>
    %118 = arith.addf %117, %1 : vector<16x16xf32>
    %cst_55 = arith.constant dense<0xFF800000> : vector<16xf32>
    %119 = vector.multi_reduction <maximumf>, %118, %cst_55 [1] : vector<16x16xf32> to vector<16xf32>
    %120 = vector.shape_cast %119 : vector<16xf32> to vector<16x1xf32>
    %121 = vector.broadcast %120 : vector<16x1xf32> to vector<16x16xf32>
    %122 = arith.subf %118, %121 : vector<16x16xf32>
    %123 = math.exp %122 : vector<16x16xf32>
    %cst_56 = arith.constant dense<0.000000e+00> : vector<16xf32>
    %124 = vector.multi_reduction <add>, %123, %cst_56 [1] : vector<16x16xf32> to vector<16xf32>
    %125 = vector.shape_cast %124 : vector<16xf32> to vector<16x1xf32>
    %126 = tpu.reciprocal %125 {approx = true} : vector<16x1xf32> -> vector<16x1xf32>
    %127 = vector.broadcast %126 : vector<16x1xf32> to vector<16x16xf32>
    %128 = arith.mulf %123, %127 : vector<16x16xf32>
    %129 = vector.extract_strided_slice %50 {offsets = [0, 24], sizes = [16, 8], strides = [1, 1]} : vector<16x32xf32> to vector<16x8xf32>
    %cst_57 = arith.constant dense<0.000000e+00> : vector<16x8xf32>
    %130 = tpu.matmul %128, %129, %cst_57 {dimension_numbers = #tpu.dot_dimension_numbers<[1], [0], [0], [1], [0, 0, 1, 1], [], []>} : vector<16x16xf32>, vector<16x8xf32>, vector<16x8xf32> -> vector<16x8xf32>
    %131 = vector.extract_strided_slice %52 {offsets = [24, 0], sizes = [8, 32], strides = [1, 1]} : vector<32x32xf32> to vector<8x32xf32>
    %cst_58 = arith.constant dense<0.000000e+00> : vector<16x32xf32>
    %132 = tpu.matmul %130, %131, %cst_58 {dimension_numbers = #tpu.dot_dimension_numbers<[1], [0], [0], [1], [0, 0, 1, 1], [], []>} : vector<16x8xf32>, vector<8x32xf32>, vector<16x32xf32> -> vector<16x32xf32>
    %133 = arith.addf %113, %132 : vector<16x32xf32>
    %134 = arith.addf %0, %133 : vector<16x32xf32>
    %c0_59 = arith.constant 0 : index
    %c0_60 = arith.constant 0 : index
    %c0_61 = arith.constant 0 : index
    %135 = vector.load %arg12[%c0_59, %c0_60, %c0_61] : memref<2x1x32xf32, #tpu.memory_space<vmem>>, vector<1x1x32xf32>
    %136 = vector.shape_cast %135 : vector<1x1x32xf32> to vector<1x32xf32>
    %137 = vector.broadcast %136 : vector<1x32xf32> to vector<16x32xf32>
    %138 = arith.addf %134, %137 : vector<16x32xf32>
    %c0_62 = arith.constant 0 : index
    %c0_63 = arith.constant 0 : index
    %c0_64 = arith.constant 0 : index
    %139 = vector.load %arg13[%c0_62, %c0_63, %c0_64] : memref<2x1x32xf32, #tpu.memory_space<vmem>>, vector<1x1x32xf32>
    %140 = vector.shape_cast %139 : vector<1x1x32xf32> to vector<1x32xf32>
    %c0_65 = arith.constant 0 : index
    %c0_66 = arith.constant 0 : index
    %c0_67 = arith.constant 0 : index
    %141 = vector.load %arg14[%c0_65, %c0_66, %c0_67] : memref<2x1x32xf32, #tpu.memory_space<vmem>>, vector<1x1x32xf32>
    %142 = vector.shape_cast %141 : vector<1x1x32xf32> to vector<1x32xf32>
    %cst_68 = arith.constant dense<0.000000e+00> : vector<16xf32>
    %143 = vector.multi_reduction <add>, %138, %cst_68 [1] : vector<16x32xf32> to vector<16xf32>
    %144 = vector.shape_cast %143 : vector<16xf32> to vector<16x1xf32>
    %cst_69 = arith.constant 3.200000e+01 : f32
    %145 = vector.broadcast %cst_69 : f32 to vector<16x1xf32>
    %146 = arith.divf %144, %145 : vector<16x1xf32>
    %147 = vector.broadcast %146 : vector<16x1xf32> to vector<16x32xf32>
    %148 = arith.subf %138, %147 : vector<16x32xf32>
    %149 = arith.mulf %148, %148 : vector<16x32xf32>
    %cst_70 = arith.constant dense<0.000000e+00> : vector<16xf32>
    %150 = vector.multi_reduction <add>, %149, %cst_70 [1] : vector<16x32xf32> to vector<16xf32>
    %151 = vector.shape_cast %150 : vector<16xf32> to vector<16x1xf32>
    %cst_71 = arith.constant 3.200000e+01 : f32
    %152 = vector.broadcast %cst_71 : f32 to vector<16x1xf32>
    %153 = arith.divf %151, %152 : vector<16x1xf32>
    %154 = vector.broadcast %146 : vector<16x1xf32> to vector<16x32xf32>
    %155 = arith.subf %138, %154 : vector<16x32xf32>
    %cst_72 = arith.constant 9.99999997E-7 : f32
    %156 = vector.broadcast %cst_72 : f32 to vector<16x1xf32>
    %157 = arith.addf %153, %156 : vector<16x1xf32>
    %158 = math.rsqrt %157 : vector<16x1xf32>
    %159 = vector.broadcast %158 : vector<16x1xf32> to vector<16x32xf32>
    %160 = arith.mulf %155, %159 : vector<16x32xf32>
    %161 = vector.broadcast %140 : vector<1x32xf32> to vector<16x32xf32>
    %162 = arith.mulf %160, %161 : vector<16x32xf32>
    %163 = vector.broadcast %142 : vector<1x32xf32> to vector<16x32xf32>
    %164 = arith.addf %162, %163 : vector<16x32xf32>
    %c0_73 = arith.constant 0 : index
    %c0_74 = arith.constant 0 : index
    %c0_75 = arith.constant 0 : index
    %165 = vector.load %arg15[%c0_73, %c0_74, %c0_75] : memref<2x32x64xf32, #tpu.memory_space<vmem>>, vector<1x32x64xf32>
    %166 = vector.shape_cast %165 : vector<1x32x64xf32> to vector<32x64xf32>
    %cst_76 = arith.constant dense<0.000000e+00> : vector<16x64xf32>
    %167 = tpu.matmul %164, %166, %cst_76 {dimension_numbers = #tpu.dot_dimension_numbers<[1], [0], [0], [1], [0, 0, 1, 1], [], []>} : vector<16x32xf32>, vector<32x64xf32>, vector<16x64xf32> -> vector<16x64xf32>
    %c0_77 = arith.constant 0 : index
    %c0_78 = arith.constant 0 : index
    %c0_79 = arith.constant 0 : index
    %168 = vector.load %arg16[%c0_77, %c0_78, %c0_79] : memref<2x1x64xf32, #tpu.memory_space<vmem>>, vector<1x1x64xf32>
    %169 = vector.shape_cast %168 : vector<1x1x64xf32> to vector<1x64xf32>
    %170 = vector.broadcast %169 : vector<1x64xf32> to vector<16x64xf32>
    %171 = arith.addf %167, %170 : vector<16x64xf32>
    %cst_80 = arith.constant 0.000000e+00 : f32
    %172 = vector.broadcast %cst_80 : f32 to vector<16x64xf32>
    %173 = arith.maximumf %171, %172 : vector<16x64xf32>
    %c0_81 = arith.constant 0 : index
    %c0_82 = arith.constant 0 : index
    %c0_83 = arith.constant 0 : index
    %174 = vector.load %arg17[%c0_81, %c0_82, %c0_83] : memref<2x64x32xf32, #tpu.memory_space<vmem>>, vector<1x64x32xf32>
    %175 = vector.shape_cast %174 : vector<1x64x32xf32> to vector<64x32xf32>
    %cst_84 = arith.constant dense<0.000000e+00> : vector<16x32xf32>
    %176 = tpu.matmul %173, %175, %cst_84 {dimension_numbers = #tpu.dot_dimension_numbers<[1], [0], [0], [1], [0, 0, 1, 1], [], []>} : vector<16x64xf32>, vector<64x32xf32>, vector<16x32xf32> -> vector<16x32xf32>
    %177 = arith.addf %138, %176 : vector<16x32xf32>
    %c0_85 = arith.constant 0 : index
    %c0_86 = arith.constant 0 : index
    %c0_87 = arith.constant 0 : index
    %178 = vector.load %arg18[%c0_85, %c0_86, %c0_87] : memref<2x1x32xf32, #tpu.memory_space<vmem>>, vector<1x1x32xf32>
    %179 = vector.shape_cast %178 : vector<1x1x32xf32> to vector<1x32xf32>
    %180 = vector.broadcast %179 : vector<1x32xf32> to vector<16x32xf32>
    %181 = arith.addf %177, %180 : vector<16x32xf32>
    %c1 = arith.constant 1 : index
    %c0_88 = arith.constant 0 : index
    %c0_89 = arith.constant 0 : index
    %182 = vector.load %arg3[%c1, %c0_88, %c0_89] : memref<2x1x32xf32, #tpu.memory_space<vmem>>, vector<1x1x32xf32>
    %183 = vector.shape_cast %182 : vector<1x1x32xf32> to vector<1x32xf32>
    %c1_90 = arith.constant 1 : index
    %c0_91 = arith.constant 0 : index
    %c0_92 = arith.constant 0 : index
    %184 = vector.load %arg4[%c1_90, %c0_91, %c0_92] : memref<2x1x32xf32, #tpu.memory_space<vmem>>, vector<1x1x32xf32>
    %185 = vector.shape_cast %184 : vector<1x1x32xf32> to vector<1x32xf32>
    %cst_93 = arith.constant dense<0.000000e+00> : vector<16xf32>
    %186 = vector.multi_reduction <add>, %181, %cst_93 [1] : vector<16x32xf32> to vector<16xf32>
    %187 = vector.shape_cast %186 : vector<16xf32> to vector<16x1xf32>
    %cst_94 = arith.constant 3.200000e+01 : f32
    %188 = vector.broadcast %cst_94 : f32 to vector<16x1xf32>
    %189 = arith.divf %187, %188 : vector<16x1xf32>
    %190 = vector.broadcast %189 : vector<16x1xf32> to vector<16x32xf32>
    %191 = arith.subf %181, %190 : vector<16x32xf32>
    %192 = arith.mulf %191, %191 : vector<16x32xf32>
    %cst_95 = arith.constant dense<0.000000e+00> : vector<16xf32>
    %193 = vector.multi_reduction <add>, %192, %cst_95 [1] : vector<16x32xf32> to vector<16xf32>
    %194 = vector.shape_cast %193 : vector<16xf32> to vector<16x1xf32>
    %cst_96 = arith.constant 3.200000e+01 : f32
    %195 = vector.broadcast %cst_96 : f32 to vector<16x1xf32>
    %196 = arith.divf %194, %195 : vector<16x1xf32>
    %197 = vector.broadcast %189 : vector<16x1xf32> to vector<16x32xf32>
    %198 = arith.subf %181, %197 : vector<16x32xf32>
    %cst_97 = arith.constant 9.99999997E-7 : f32
    %199 = vector.broadcast %cst_97 : f32 to vector<16x1xf32>
    %200 = arith.addf %196, %199 : vector<16x1xf32>
    %201 = math.rsqrt %200 : vector<16x1xf32>
    %202 = vector.broadcast %201 : vector<16x1xf32> to vector<16x32xf32>
    %203 = arith.mulf %198, %202 : vector<16x32xf32>
    %204 = vector.broadcast %183 : vector<1x32xf32> to vector<16x32xf32>
    %205 = arith.mulf %203, %204 : vector<16x32xf32>
    %206 = vector.broadcast %185 : vector<1x32xf32> to vector<16x32xf32>
    %207 = arith.addf %205, %206 : vector<16x32xf32>
    %c1_98 = arith.constant 1 : index
    %c0_99 = arith.constant 0 : index
    %c0_100 = arith.constant 0 : index
    %208 = vector.load %arg5[%c1_98, %c0_99, %c0_100] : memref<2x32x32xf32, #tpu.memory_space<vmem>>, vector<1x32x32xf32>
    %209 = vector.shape_cast %208 : vector<1x32x32xf32> to vector<32x32xf32>
    %cst_101 = arith.constant dense<0.000000e+00> : vector<16x32xf32>
    %210 = tpu.matmul %207, %209, %cst_101 {dimension_numbers = #tpu.dot_dimension_numbers<[1], [0], [0], [1], [0, 0, 1, 1], [], []>} : vector<16x32xf32>, vector<32x32xf32>, vector<16x32xf32> -> vector<16x32xf32>
    %c1_102 = arith.constant 1 : index
    %c0_103 = arith.constant 0 : index
    %c0_104 = arith.constant 0 : index
    %211 = vector.load %arg6[%c1_102, %c0_103, %c0_104] : memref<2x1x32xf32, #tpu.memory_space<vmem>>, vector<1x1x32xf32>
    %212 = vector.shape_cast %211 : vector<1x1x32xf32> to vector<1x32xf32>
    %213 = vector.broadcast %212 : vector<1x32xf32> to vector<16x32xf32>
    %214 = arith.addf %210, %213 : vector<16x32xf32>
    %cst_105 = arith.constant 0.353553385 : f32
    %215 = vector.broadcast %cst_105 : f32 to vector<16x32xf32>
    %216 = arith.mulf %214, %215 : vector<16x32xf32>
    %c1_106 = arith.constant 1 : index
    %c0_107 = arith.constant 0 : index
    %c0_108 = arith.constant 0 : index
    %217 = vector.load %arg7[%c1_106, %c0_107, %c0_108] : memref<2x32x32xf32, #tpu.memory_space<vmem>>, vector<1x32x32xf32>
    %218 = vector.shape_cast %217 : vector<1x32x32xf32> to vector<32x32xf32>
    %cst_109 = arith.constant dense<0.000000e+00> : vector<16x32xf32>
    %219 = tpu.matmul %207, %218, %cst_109 {dimension_numbers = #tpu.dot_dimension_numbers<[1], [0], [0], [1], [0, 0, 1, 1], [], []>} : vector<16x32xf32>, vector<32x32xf32>, vector<16x32xf32> -> vector<16x32xf32>
    %c1_110 = arith.constant 1 : index
    %c0_111 = arith.constant 0 : index
    %c0_112 = arith.constant 0 : index
    %220 = vector.load %arg8[%c1_110, %c0_111, %c0_112] : memref<2x1x32xf32, #tpu.memory_space<vmem>>, vector<1x1x32xf32>
    %221 = vector.shape_cast %220 : vector<1x1x32xf32> to vector<1x32xf32>
    %222 = vector.broadcast %221 : vector<1x32xf32> to vector<16x32xf32>
    %223 = arith.addf %219, %222 : vector<16x32xf32>
    %c1_113 = arith.constant 1 : index
    %c0_114 = arith.constant 0 : index
    %c0_115 = arith.constant 0 : index
    %224 = vector.load %arg9[%c1_113, %c0_114, %c0_115] : memref<2x32x32xf32, #tpu.memory_space<vmem>>, vector<1x32x32xf32>
    %225 = vector.shape_cast %224 : vector<1x32x32xf32> to vector<32x32xf32>
    %cst_116 = arith.constant dense<0.000000e+00> : vector<16x32xf32>
    %226 = tpu.matmul %207, %225, %cst_116 {dimension_numbers = #tpu.dot_dimension_numbers<[1], [0], [0], [1], [0, 0, 1, 1], [], []>} : vector<16x32xf32>, vector<32x32xf32>, vector<16x32xf32> -> vector<16x32xf32>
    %c1_117 = arith.constant 1 : index
    %c0_118 = arith.constant 0 : index
    %c0_119 = arith.constant 0 : index
    %227 = vector.load %arg10[%c1_117, %c0_118, %c0_119] : memref<2x1x32xf32, #tpu.memory_space<vmem>>, vector<1x1x32xf32>
    %228 = vector.shape_cast %227 : vector<1x1x32xf32> to vector<1x32xf32>
    %229 = vector.broadcast %228 : vector<1x32xf32> to vector<16x32xf32>
    %230 = arith.addf %226, %229 : vector<16x32xf32>
    %c1_120 = arith.constant 1 : index
    %c0_121 = arith.constant 0 : index
    %c0_122 = arith.constant 0 : index
    %231 = vector.load %arg11[%c1_120, %c0_121, %c0_122] : memref<2x32x32xf32, #tpu.memory_space<vmem>>, vector<1x32x32xf32>
    %232 = vector.shape_cast %231 : vector<1x32x32xf32> to vector<32x32xf32>
    %cst_123 = arith.constant 0.000000e+00 : f32
    %233 = vector.broadcast %cst_123 : f32 to vector<16x32xf32>
    %234 = vector.extract_strided_slice %216 {offsets = [0, 0], sizes = [16, 8], strides = [1, 1]} : vector<16x32xf32> to vector<16x8xf32>
    %235 = vector.extract_strided_slice %223 {offsets = [0, 0], sizes = [16, 8], strides = [1, 1]} : vector<16x32xf32> to vector<16x8xf32>
    %236 = tpu.transpose %235, [1, 0] : vector<16x8xf32> -> vector<8x16xf32>
    %cst_124 = arith.constant dense<0.000000e+00> : vector<16x16xf32>
    %237 = tpu.matmul %234, %236, %cst_124 {dimension_numbers = #tpu.dot_dimension_numbers<[1], [0], [0], [1], [0, 0, 1, 1], [], []>} : vector<16x8xf32>, vector<8x16xf32>, vector<16x16xf32> -> vector<16x16xf32>
    %238 = arith.addf %237, %1 : vector<16x16xf32>
    %cst_125 = arith.constant dense<0xFF800000> : vector<16xf32>
    %239 = vector.multi_reduction <maximumf>, %238, %cst_125 [1] : vector<16x16xf32> to vector<16xf32>
    %240 = vector.shape_cast %239 : vector<16xf32> to vector<16x1xf32>
    %241 = vector.broadcast %240 : vector<16x1xf32> to vector<16x16xf32>
    %242 = arith.subf %238, %241 : vector<16x16xf32>
    %243 = math.exp %242 : vector<16x16xf32>
    %cst_126 = arith.constant dense<0.000000e+00> : vector<16xf32>
    %244 = vector.multi_reduction <add>, %243, %cst_126 [1] : vector<16x16xf32> to vector<16xf32>
    %245 = vector.shape_cast %244 : vector<16xf32> to vector<16x1xf32>
    %246 = tpu.reciprocal %245 {approx = true} : vector<16x1xf32> -> vector<16x1xf32>
    %247 = vector.broadcast %246 : vector<16x1xf32> to vector<16x16xf32>
    %248 = arith.mulf %243, %247 : vector<16x16xf32>
    %249 = vector.extract_strided_slice %230 {offsets = [0, 0], sizes = [16, 8], strides = [1, 1]} : vector<16x32xf32> to vector<16x8xf32>
    %cst_127 = arith.constant dense<0.000000e+00> : vector<16x8xf32>
    %250 = tpu.matmul %248, %249, %cst_127 {dimension_numbers = #tpu.dot_dimension_numbers<[1], [0], [0], [1], [0, 0, 1, 1], [], []>} : vector<16x16xf32>, vector<16x8xf32>, vector<16x8xf32> -> vector<16x8xf32>
    %251 = vector.extract_strided_slice %232 {offsets = [0, 0], sizes = [8, 32], strides = [1, 1]} : vector<32x32xf32> to vector<8x32xf32>
    %cst_128 = arith.constant dense<0.000000e+00> : vector<16x32xf32>
    %252 = tpu.matmul %250, %251, %cst_128 {dimension_numbers = #tpu.dot_dimension_numbers<[1], [0], [0], [1], [0, 0, 1, 1], [], []>} : vector<16x8xf32>, vector<8x32xf32>, vector<16x32xf32> -> vector<16x32xf32>
    %253 = arith.addf %233, %252 : vector<16x32xf32>
    %254 = vector.extract_strided_slice %216 {offsets = [0, 8], sizes = [16, 8], strides = [1, 1]} : vector<16x32xf32> to vector<16x8xf32>
    %255 = vector.extract_strided_slice %223 {offsets = [0, 8], sizes = [16, 8], strides = [1, 1]} : vector<16x32xf32> to vector<16x8xf32>
    %256 = tpu.transpose %255, [1, 0] : vector<16x8xf32> -> vector<8x16xf32>
    %cst_129 = arith.constant dense<0.000000e+00> : vector<16x16xf32>
    %257 = tpu.matmul %254, %256, %cst_129 {dimension_numbers = #tpu.dot_dimension_numbers<[1], [0], [0], [1], [0, 0, 1, 1], [], []>} : vector<16x8xf32>, vector<8x16xf32>, vector<16x16xf32> -> vector<16x16xf32>
    %258 = arith.addf %257, %1 : vector<16x16xf32>
    %cst_130 = arith.constant dense<0xFF800000> : vector<16xf32>
    %259 = vector.multi_reduction <maximumf>, %258, %cst_130 [1] : vector<16x16xf32> to vector<16xf32>
    %260 = vector.shape_cast %259 : vector<16xf32> to vector<16x1xf32>
    %261 = vector.broadcast %260 : vector<16x1xf32> to vector<16x16xf32>
    %262 = arith.subf %258, %261 : vector<16x16xf32>
    %263 = math.exp %262 : vector<16x16xf32>
    %cst_131 = arith.constant dense<0.000000e+00> : vector<16xf32>
    %264 = vector.multi_reduction <add>, %263, %cst_131 [1] : vector<16x16xf32> to vector<16xf32>
    %265 = vector.shape_cast %264 : vector<16xf32> to vector<16x1xf32>
    %266 = tpu.reciprocal %265 {approx = true} : vector<16x1xf32> -> vector<16x1xf32>
    %267 = vector.broadcast %266 : vector<16x1xf32> to vector<16x16xf32>
    %268 = arith.mulf %263, %267 : vector<16x16xf32>
    %269 = vector.extract_strided_slice %230 {offsets = [0, 8], sizes = [16, 8], strides = [1, 1]} : vector<16x32xf32> to vector<16x8xf32>
    %cst_132 = arith.constant dense<0.000000e+00> : vector<16x8xf32>
    %270 = tpu.matmul %268, %269, %cst_132 {dimension_numbers = #tpu.dot_dimension_numbers<[1], [0], [0], [1], [0, 0, 1, 1], [], []>} : vector<16x16xf32>, vector<16x8xf32>, vector<16x8xf32> -> vector<16x8xf32>
    %271 = vector.extract_strided_slice %232 {offsets = [8, 0], sizes = [8, 32], strides = [1, 1]} : vector<32x32xf32> to vector<8x32xf32>
    %cst_133 = arith.constant dense<0.000000e+00> : vector<16x32xf32>
    %272 = tpu.matmul %270, %271, %cst_133 {dimension_numbers = #tpu.dot_dimension_numbers<[1], [0], [0], [1], [0, 0, 1, 1], [], []>} : vector<16x8xf32>, vector<8x32xf32>, vector<16x32xf32> -> vector<16x32xf32>
    %273 = arith.addf %253, %272 : vector<16x32xf32>
    %274 = vector.extract_strided_slice %216 {offsets = [0, 16], sizes = [16, 8], strides = [1, 1]} : vector<16x32xf32> to vector<16x8xf32>
    %275 = vector.extract_strided_slice %223 {offsets = [0, 16], sizes = [16, 8], strides = [1, 1]} : vector<16x32xf32> to vector<16x8xf32>
    %276 = tpu.transpose %275, [1, 0] : vector<16x8xf32> -> vector<8x16xf32>
    %cst_134 = arith.constant dense<0.000000e+00> : vector<16x16xf32>
    %277 = tpu.matmul %274, %276, %cst_134 {dimension_numbers = #tpu.dot_dimension_numbers<[1], [0], [0], [1], [0, 0, 1, 1], [], []>} : vector<16x8xf32>, vector<8x16xf32>, vector<16x16xf32> -> vector<16x16xf32>
    %278 = arith.addf %277, %1 : vector<16x16xf32>
    %cst_135 = arith.constant dense<0xFF800000> : vector<16xf32>
    %279 = vector.multi_reduction <maximumf>, %278, %cst_135 [1] : vector<16x16xf32> to vector<16xf32>
    %280 = vector.shape_cast %279 : vector<16xf32> to vector<16x1xf32>
    %281 = vector.broadcast %280 : vector<16x1xf32> to vector<16x16xf32>
    %282 = arith.subf %278, %281 : vector<16x16xf32>
    %283 = math.exp %282 : vector<16x16xf32>
    %cst_136 = arith.constant dense<0.000000e+00> : vector<16xf32>
    %284 = vector.multi_reduction <add>, %283, %cst_136 [1] : vector<16x16xf32> to vector<16xf32>
    %285 = vector.shape_cast %284 : vector<16xf32> to vector<16x1xf32>
    %286 = tpu.reciprocal %285 {approx = true} : vector<16x1xf32> -> vector<16x1xf32>
    %287 = vector.broadcast %286 : vector<16x1xf32> to vector<16x16xf32>
    %288 = arith.mulf %283, %287 : vector<16x16xf32>
    %289 = vector.extract_strided_slice %230 {offsets = [0, 16], sizes = [16, 8], strides = [1, 1]} : vector<16x32xf32> to vector<16x8xf32>
    %cst_137 = arith.constant dense<0.000000e+00> : vector<16x8xf32>
    %290 = tpu.matmul %288, %289, %cst_137 {dimension_numbers = #tpu.dot_dimension_numbers<[1], [0], [0], [1], [0, 0, 1, 1], [], []>} : vector<16x16xf32>, vector<16x8xf32>, vector<16x8xf32> -> vector<16x8xf32>
    %291 = vector.extract_strided_slice %232 {offsets = [16, 0], sizes = [8, 32], strides = [1, 1]} : vector<32x32xf32> to vector<8x32xf32>
    %cst_138 = arith.constant dense<0.000000e+00> : vector<16x32xf32>
    %292 = tpu.matmul %290, %291, %cst_138 {dimension_numbers = #tpu.dot_dimension_numbers<[1], [0], [0], [1], [0, 0, 1, 1], [], []>} : vector<16x8xf32>, vector<8x32xf32>, vector<16x32xf32> -> vector<16x32xf32>
    %293 = arith.addf %273, %292 : vector<16x32xf32>
    %294 = vector.extract_strided_slice %216 {offsets = [0, 24], sizes = [16, 8], strides = [1, 1]} : vector<16x32xf32> to vector<16x8xf32>
    %295 = vector.extract_strided_slice %223 {offsets = [0, 24], sizes = [16, 8], strides = [1, 1]} : vector<16x32xf32> to vector<16x8xf32>
    %296 = tpu.transpose %295, [1, 0] : vector<16x8xf32> -> vector<8x16xf32>
    %cst_139 = arith.constant dense<0.000000e+00> : vector<16x16xf32>
    %297 = tpu.matmul %294, %296, %cst_139 {dimension_numbers = #tpu.dot_dimension_numbers<[1], [0], [0], [1], [0, 0, 1, 1], [], []>} : vector<16x8xf32>, vector<8x16xf32>, vector<16x16xf32> -> vector<16x16xf32>
    %298 = arith.addf %297, %1 : vector<16x16xf32>
    %cst_140 = arith.constant dense<0xFF800000> : vector<16xf32>
    %299 = vector.multi_reduction <maximumf>, %298, %cst_140 [1] : vector<16x16xf32> to vector<16xf32>
    %300 = vector.shape_cast %299 : vector<16xf32> to vector<16x1xf32>
    %301 = vector.broadcast %300 : vector<16x1xf32> to vector<16x16xf32>
    %302 = arith.subf %298, %301 : vector<16x16xf32>
    %303 = math.exp %302 : vector<16x16xf32>
    %cst_141 = arith.constant dense<0.000000e+00> : vector<16xf32>
    %304 = vector.multi_reduction <add>, %303, %cst_141 [1] : vector<16x16xf32> to vector<16xf32>
    %305 = vector.shape_cast %304 : vector<16xf32> to vector<16x1xf32>
    %306 = tpu.reciprocal %305 {approx = true} : vector<16x1xf32> -> vector<16x1xf32>
    %307 = vector.broadcast %306 : vector<16x1xf32> to vector<16x16xf32>
    %308 = arith.mulf %303, %307 : vector<16x16xf32>
    %309 = vector.extract_strided_slice %230 {offsets = [0, 24], sizes = [16, 8], strides = [1, 1]} : vector<16x32xf32> to vector<16x8xf32>
    %cst_142 = arith.constant dense<0.000000e+00> : vector<16x8xf32>
    %310 = tpu.matmul %308, %309, %cst_142 {dimension_numbers = #tpu.dot_dimension_numbers<[1], [0], [0], [1], [0, 0, 1, 1], [], []>} : vector<16x16xf32>, vector<16x8xf32>, vector<16x8xf32> -> vector<16x8xf32>
    %311 = vector.extract_strided_slice %232 {offsets = [24, 0], sizes = [8, 32], strides = [1, 1]} : vector<32x32xf32> to vector<8x32xf32>
    %cst_143 = arith.constant dense<0.000000e+00> : vector<16x32xf32>
    %312 = tpu.matmul %310, %311, %cst_143 {dimension_numbers = #tpu.dot_dimension_numbers<[1], [0], [0], [1], [0, 0, 1, 1], [], []>} : vector<16x8xf32>, vector<8x32xf32>, vector<16x32xf32> -> vector<16x32xf32>
    %313 = arith.addf %293, %312 : vector<16x32xf32>
    %314 = arith.addf %181, %313 : vector<16x32xf32>
    %c1_144 = arith.constant 1 : index
    %c0_145 = arith.constant 0 : index
    %c0_146 = arith.constant 0 : index
    %315 = vector.load %arg12[%c1_144, %c0_145, %c0_146] : memref<2x1x32xf32, #tpu.memory_space<vmem>>, vector<1x1x32xf32>
    %316 = vector.shape_cast %315 : vector<1x1x32xf32> to vector<1x32xf32>
    %317 = vector.broadcast %316 : vector<1x32xf32> to vector<16x32xf32>
    %318 = arith.addf %314, %317 : vector<16x32xf32>
    %c1_147 = arith.constant 1 : index
    %c0_148 = arith.constant 0 : index
    %c0_149 = arith.constant 0 : index
    %319 = vector.load %arg13[%c1_147, %c0_148, %c0_149] : memref<2x1x32xf32, #tpu.memory_space<vmem>>, vector<1x1x32xf32>
    %320 = vector.shape_cast %319 : vector<1x1x32xf32> to vector<1x32xf32>
    %c1_150 = arith.constant 1 : index
    %c0_151 = arith.constant 0 : index
    %c0_152 = arith.constant 0 : index
    %321 = vector.load %arg14[%c1_150, %c0_151, %c0_152] : memref<2x1x32xf32, #tpu.memory_space<vmem>>, vector<1x1x32xf32>
    %322 = vector.shape_cast %321 : vector<1x1x32xf32> to vector<1x32xf32>
    %cst_153 = arith.constant dense<0.000000e+00> : vector<16xf32>
    %323 = vector.multi_reduction <add>, %318, %cst_153 [1] : vector<16x32xf32> to vector<16xf32>
    %324 = vector.shape_cast %323 : vector<16xf32> to vector<16x1xf32>
    %cst_154 = arith.constant 3.200000e+01 : f32
    %325 = vector.broadcast %cst_154 : f32 to vector<16x1xf32>
    %326 = arith.divf %324, %325 : vector<16x1xf32>
    %327 = vector.broadcast %326 : vector<16x1xf32> to vector<16x32xf32>
    %328 = arith.subf %318, %327 : vector<16x32xf32>
    %329 = arith.mulf %328, %328 : vector<16x32xf32>
    %cst_155 = arith.constant dense<0.000000e+00> : vector<16xf32>
    %330 = vector.multi_reduction <add>, %329, %cst_155 [1] : vector<16x32xf32> to vector<16xf32>
    %331 = vector.shape_cast %330 : vector<16xf32> to vector<16x1xf32>
    %cst_156 = arith.constant 3.200000e+01 : f32
    %332 = vector.broadcast %cst_156 : f32 to vector<16x1xf32>
    %333 = arith.divf %331, %332 : vector<16x1xf32>
    %334 = vector.broadcast %326 : vector<16x1xf32> to vector<16x32xf32>
    %335 = arith.subf %318, %334 : vector<16x32xf32>
    %cst_157 = arith.constant 9.99999997E-7 : f32
    %336 = vector.broadcast %cst_157 : f32 to vector<16x1xf32>
    %337 = arith.addf %333, %336 : vector<16x1xf32>
    %338 = math.rsqrt %337 : vector<16x1xf32>
    %339 = vector.broadcast %338 : vector<16x1xf32> to vector<16x32xf32>
    %340 = arith.mulf %335, %339 : vector<16x32xf32>
    %341 = vector.broadcast %320 : vector<1x32xf32> to vector<16x32xf32>
    %342 = arith.mulf %340, %341 : vector<16x32xf32>
    %343 = vector.broadcast %322 : vector<1x32xf32> to vector<16x32xf32>
    %344 = arith.addf %342, %343 : vector<16x32xf32>
    %c1_158 = arith.constant 1 : index
    %c0_159 = arith.constant 0 : index
    %c0_160 = arith.constant 0 : index
    %345 = vector.load %arg15[%c1_158, %c0_159, %c0_160] : memref<2x32x64xf32, #tpu.memory_space<vmem>>, vector<1x32x64xf32>
    %346 = vector.shape_cast %345 : vector<1x32x64xf32> to vector<32x64xf32>
    %cst_161 = arith.constant dense<0.000000e+00> : vector<16x64xf32>
    %347 = tpu.matmul %344, %346, %cst_161 {dimension_numbers = #tpu.dot_dimension_numbers<[1], [0], [0], [1], [0, 0, 1, 1], [], []>} : vector<16x32xf32>, vector<32x64xf32>, vector<16x64xf32> -> vector<16x64xf32>
    %c1_162 = arith.constant 1 : index
    %c0_163 = arith.constant 0 : index
    %c0_164 = arith.constant 0 : index
    %348 = vector.load %arg16[%c1_162, %c0_163, %c0_164] : memref<2x1x64xf32, #tpu.memory_space<vmem>>, vector<1x1x64xf32>
    %349 = vector.shape_cast %348 : vector<1x1x64xf32> to vector<1x64xf32>
    %350 = vector.broadcast %349 : vector<1x64xf32> to vector<16x64xf32>
    %351 = arith.addf %347, %350 : vector<16x64xf32>
    %cst_165 = arith.constant 0.000000e+00 : f32
    %352 = vector.broadcast %cst_165 : f32 to vector<16x64xf32>
    %353 = arith.maximumf %351, %352 : vector<16x64xf32>
    %c1_166 = arith.constant 1 : index
    %c0_167 = arith.constant 0 : index
    %c0_168 = arith.constant 0 : index
    %354 = vector.load %arg17[%c1_166, %c0_167, %c0_168] : memref<2x64x32xf32, #tpu.memory_space<vmem>>, vector<1x64x32xf32>
    %355 = vector.shape_cast %354 : vector<1x64x32xf32> to vector<64x32xf32>
    %cst_169 = arith.constant dense<0.000000e+00> : vector<16x32xf32>
    %356 = tpu.matmul %353, %355, %cst_169 {dimension_numbers = #tpu.dot_dimension_numbers<[1], [0], [0], [1], [0, 0, 1, 1], [], []>} : vector<16x64xf32>, vector<64x32xf32>, vector<16x32xf32> -> vector<16x32xf32>
    %357 = arith.addf %318, %356 : vector<16x32xf32>
    %c1_170 = arith.constant 1 : index
    %c0_171 = arith.constant 0 : index
    %c0_172 = arith.constant 0 : index
    %358 = vector.load %arg18[%c1_170, %c0_171, %c0_172] : memref<2x1x32xf32, #tpu.memory_space<vmem>>, vector<1x1x32xf32>
    %359 = vector.shape_cast %358 : vector<1x1x32xf32> to vector<1x32xf32>
    %360 = vector.broadcast %359 : vector<1x32xf32> to vector<16x32xf32>
    %361 = arith.addf %357, %360 : vector<16x32xf32>
    %c0_173 = arith.constant 0 : index
    %c0_174 = arith.constant 0 : index
    %362 = vector.load %arg19[%c0_173, %c0_174] : memref<1x32xf32, #tpu.memory_space<vmem>>, vector<1x32xf32>
    %c0_175 = arith.constant 0 : index
    %c0_176 = arith.constant 0 : index
    %363 = vector.load %arg20[%c0_175, %c0_176] : memref<1x32xf32, #tpu.memory_space<vmem>>, vector<1x32xf32>
    %cst_177 = arith.constant dense<0.000000e+00> : vector<16xf32>
    %364 = vector.multi_reduction <add>, %361, %cst_177 [1] : vector<16x32xf32> to vector<16xf32>
    %365 = vector.shape_cast %364 : vector<16xf32> to vector<16x1xf32>
    %cst_178 = arith.constant 3.200000e+01 : f32
    %366 = vector.broadcast %cst_178 : f32 to vector<16x1xf32>
    %367 = arith.divf %365, %366 : vector<16x1xf32>
    %368 = vector.broadcast %367 : vector<16x1xf32> to vector<16x32xf32>
    %369 = arith.subf %361, %368 : vector<16x32xf32>
    %370 = arith.mulf %369, %369 : vector<16x32xf32>
    %cst_179 = arith.constant dense<0.000000e+00> : vector<16xf32>
    %371 = vector.multi_reduction <add>, %370, %cst_179 [1] : vector<16x32xf32> to vector<16xf32>
    %372 = vector.shape_cast %371 : vector<16xf32> to vector<16x1xf32>
    %cst_180 = arith.constant 3.200000e+01 : f32
    %373 = vector.broadcast %cst_180 : f32 to vector<16x1xf32>
    %374 = arith.divf %372, %373 : vector<16x1xf32>
    %375 = vector.broadcast %367 : vector<16x1xf32> to vector<16x32xf32>
    %376 = arith.subf %361, %375 : vector<16x32xf32>
    %cst_181 = arith.constant 9.99999997E-7 : f32
    %377 = vector.broadcast %cst_181 : f32 to vector<16x1xf32>
    %378 = arith.addf %374, %377 : vector<16x1xf32>
    %379 = math.rsqrt %378 : vector<16x1xf32>
    %380 = vector.broadcast %379 : vector<16x1xf32> to vector<16x32xf32>
    %381 = arith.mulf %376, %380 : vector<16x32xf32>
    %382 = vector.broadcast %362 : vector<1x32xf32> to vector<16x32xf32>
    %383 = arith.mulf %381, %382 : vector<16x32xf32>
    %384 = vector.broadcast %363 : vector<1x32xf32> to vector<16x32xf32>
    %385 = arith.addf %383, %384 : vector<16x32xf32>
    %c0_182 = arith.constant 0 : index
    %c0_183 = arith.constant 0 : index
    %386 = vector.load %arg21[%c0_182, %c0_183] : memref<16x32xf32, #tpu.memory_space<vmem>>, vector<16x32xf32>
    tpu.vector_store %arg21[%c0_182, %c0_183], %385 {strides = array<i32>} : memref<16x32xf32, #tpu.memory_space<vmem>>, vector<16x32xf32>,
    return
  }
  func.func @transform_0(%arg0: i32) -> (i32, i32) {
    %c0_i32 = arith.constant 0 : i32
    %c0_i32_0 = arith.constant 0 : i32
    %c0_i32_1 = arith.constant 0 : i32
    return %c0_i32, %c0_i32_0 : i32, i32
  }
  func.func @transform_1(%arg0: i32) -> (i32, i32) {
    %c0_i32 = arith.constant 0 : i32
    %c0_i32_0 = arith.constant 0 : i32
    %c0_i32_1 = arith.constant 0 : i32
    return %c0_i32, %c0_i32_0 : i32, i32
  }
  func.func @transform_2(%arg0: i32) -> (i32, i32, i32) {
    %c0_i32 = arith.constant 0 : i32
    %c0_i32_0 = arith.constant 0 : i32
    %c0_i32_1 = arith.constant 0 : i32
    %c0_i32_2 = arith.constant 0 : i32
    return %c0_i32, %c0_i32_0, %c0_i32_1 : i32, i32, i32
  }
  func.func @transform_3(%arg0: i32) -> (i32, i32, i32) {
    %c0_i32 = arith.constant 0 : i32
    %c0_i32_0 = arith.constant 0 : i32
    %c0_i32_1 = arith.constant 0 : i32
    %c0_i32_2 = arith.constant 0 : i32
    return %c0_i32, %c0_i32_0, %c0_i32_1 : i32, i32, i32
  }
  func.func @transform_4(%arg0: i32) -> (i32, i32, i32) {
    %c0_i32 = arith.constant 0 : i32
    %c0_i32_0 = arith.constant 0 : i32
    %c0_i32_1 = arith.constant 0 : i32
    %c0_i32_2 = arith.constant 0 : i32
    return %c0_i32, %c0_i32_0, %c0_i32_1 : i32, i32, i32
  }
  func.func @transform_5(%arg0: i32) -> (i32, i32, i32) {
    %c0_i32 = arith.constant 0 : i32
    %c0_i32_0 = arith.constant 0 : i32
    %c0_i32_1 = arith.constant 0 : i32
    %c0_i32_2 = arith.constant 0 : i32
    return %c0_i32, %c0_i32_0, %c0_i32_1 : i32, i32, i32
  }
  func.func @transform_6(%arg0: i32) -> (i32, i32, i32) {
    %c0_i32 = arith.constant 0 : i32
    %c0_i32_0 = arith.constant 0 : i32
    %c0_i32_1 = arith.constant 0 : i32
    %c0_i32_2 = arith.constant 0 : i32
    return %c0_i32, %c0_i32_0, %c0_i32_1 : i32, i32, i32
  }
  func.func @transform_7(%arg0: i32) -> (i32, i32, i32) {
    %c0_i32 = arith.constant 0 : i32
    %c0_i32_0 = arith.constant 0 : i32
    %c0_i32_1 = arith.constant 0 : i32
    %c0_i32_2 = arith.constant 0 : i32
    return %c0_i32, %c0_i32_0, %c0_i32_1 : i32, i32, i32
  }
  func.func @transform_8(%arg0: i32) -> (i32, i32, i32) {
    %c0_i32 = arith.constant 0 : i32
    %c0_i32_0 = arith.constant 0 : i32
    %c0_i32_1 = arith.constant 0 : i32
    %c0_i32_2 = arith.constant 0 : i32
    return %c0_i32, %c0_i32_0, %c0_i32_1 : i32, i32, i32
  }
  func.func @transform_9(%arg0: i32) -> (i32, i32, i32) {
    %c0_i32 = arith.constant 0 : i32
    %c0_i32_0 = arith.constant 0 : i32
    %c0_i32_1 = arith.constant 0 : i32
    %c0_i32_2 = arith.constant 0 : i32
    return %c0_i32, %c0_i32_0, %c0_i32_1 : i32, i32, i32
  }
  func.func @transform_10(%arg0: i32) -> (i32, i32, i32) {
    %c0_i32 = arith.constant 0 : i32
    %c0_i32_0 = arith.constant 0 : i32
    %c0_i32_1 = arith.constant 0 : i32
    %c0_i32_2 = arith.constant 0 : i32
    return %c0_i32, %c0_i32_0, %c0_i32_1 : i32, i32, i32
  }
  func.func @transform_11(%arg0: i32) -> (i32, i32, i32) {
    %c0_i32 = arith.constant 0 : i32
    %c0_i32_0 = arith.constant 0 : i32
    %c0_i32_1 = arith.constant 0 : i32
    %c0_i32_2 = arith.constant 0 : i32
    return %c0_i32, %c0_i32_0, %c0_i32_1 : i32, i32, i32
  }
  func.func @transform_12(%arg0: i32) -> (i32, i32, i32) {
    %c0_i32 = arith.constant 0 : i32
    %c0_i32_0 = arith.constant 0 : i32
    %c0_i32_1 = arith.constant 0 : i32
    %c0_i32_2 = arith.constant 0 : i32
    return %c0_i32, %c0_i32_0, %c0_i32_1 : i32, i32, i32
  }
  func.func @transform_13(%arg0: i32) -> (i32, i32, i32) {
    %c0_i32 = arith.constant 0 : i32
    %c0_i32_0 = arith.constant 0 : i32
    %c0_i32_1 = arith.constant 0 : i32
    %c0_i32_2 = arith.constant 0 : i32
    return %c0_i32, %c0_i32_0, %c0_i32_1 : i32, i32, i32
  }
  func.func @transform_14(%arg0: i32) -> (i32, i32, i32) {
    %c0_i32 = arith.constant 0 : i32
    %c0_i32_0 = arith.constant 0 : i32
    %c0_i32_1 = arith.constant 0 : i32
    %c0_i32_2 = arith.constant 0 : i32
    return %c0_i32, %c0_i32_0, %c0_i32_1 : i32, i32, i32
  }
  func.func @transform_15(%arg0: i32) -> (i32, i32, i32) {
    %c0_i32 = arith.constant 0 : i32
    %c0_i32_0 = arith.constant 0 : i32
    %c0_i32_1 = arith.constant 0 : i32
    %c0_i32_2 = arith.constant 0 : i32
    return %c0_i32, %c0_i32_0, %c0_i32_1 : i32, i32, i32
  }
  func.func @transform_16(%arg0: i32) -> (i32, i32, i32) {
    %c0_i32 = arith.constant 0 : i32
    %c0_i32_0 = arith.constant 0 : i32
    %c0_i32_1 = arith.constant 0 : i32
    %c0_i32_2 = arith.constant 0 : i32
    return %c0_i32, %c0_i32_0, %c0_i32_1 : i32, i32, i32
  }
  func.func @transform_17(%arg0: i32) -> (i32, i32, i32) {
    %c0_i32 = arith.constant 0 : i32
    %c0_i32_0 = arith.constant 0 : i32
    %c0_i32_1 = arith.constant 0 : i32
    %c0_i32_2 = arith.constant 0 : i32
    return %c0_i32, %c0_i32_0, %c0_i32_1 : i32, i32, i32
  }
  func.func @transform_18(%arg0: i32) -> (i32, i32) {
    %c0_i32 = arith.constant 0 : i32
    %c0_i32_0 = arith.constant 0 : i32
    %c0_i32_1 = arith.constant 0 : i32
    return %c0_i32, %c0_i32_0 : i32, i32
  }
  func.func @transform_19(%arg0: i32) -> (i32, i32) {
    %c0_i32 = arith.constant 0 : i32
    %c0_i32_0 = arith.constant 0 : i32
    %c0_i32_1 = arith.constant 0 : i32
    return %c0_i32, %c0_i32_0 : i32, i32
  }
  func.func @transform_20(%arg0: i32) -> (i32, i32) {
    %c0_i32 = arith.constant 0 : i32
    %c0_i32_0 = arith.constant 0 : i32
    %c0_i32_1 = arith.constant 0 : i32
    return %c0_i32, %c0_i32_0 : i32, i32
  }
}

</mosaic_0001>

<llo_original>
// kernel: tpu_custom_call.1
$region0: #{tpu_custom_call.1}
  #allocation0 [shape = 'u32[]', space=smem, size = 0x4, offset = 0x4, fixed_abs, tag = 'smem constant byte address 0x4 - core index']
  #allocation1 [shape = 'u32[144,128]{1,0:T(1,128)}', space=vmem, size = 0x12000, scoped, tag = 'internal scratch']
  %s0 = inlined_call_operand.hbm [shape: f32[16,32], index: 0, kind: input, shape index: {}]
  %s1 = inlined_call_operand.hbm [shape: f32[16,16], index: 1, kind: input, shape index: {}]
  %s2 = inlined_call_operand.vmem [shape: f32[2,1,32], index: 2, kind: input, shape index: {}]
  %s3 = inlined_call_operand.hbm [shape: f32[2,1,32], index: 3, kind: input, shape index: {}]
  %s4 = inlined_call_operand.vmem [shape: f32[2,32,32], index: 4, kind: input, shape index: {}]
  %s5 = inlined_call_operand.vmem [shape: f32[2,1,32], index: 5, kind: input, shape index: {}]
  %s6 = inlined_call_operand.vmem [shape: f32[2,32,32], index: 6, kind: input, shape index: {}]
  %s7 = inlined_call_operand.vmem [shape: f32[2,1,32], index: 7, kind: input, shape index: {}]
  %s8 = inlined_call_operand.vmem [shape: f32[2,32,32], index: 8, kind: input, shape index: {}]
  %s9 = inlined_call_operand.vmem [shape: f32[2,1,32], index: 9, kind: input, shape index: {}]
  %s10 = inlined_call_operand.hbm [shape: f32[2,32,32], index: 10, kind: input, shape index: {}]
  %s11 = inlined_call_operand.vmem [shape: f32[2,1,32], index: 11, kind: input, shape index: {}]
  %s12 = inlined_call_operand.vmem [shape: f32[2,1,32], index: 12, kind: input, shape index: {}]
  %s13 = inlined_call_operand.vmem [shape: f32[2,1,32], index: 13, kind: input, shape index: {}]
  %s14 = inlined_call_operand.hbm [shape: f32[2,32,64], index: 14, kind: input, shape index: {}]
  %s15 = inlined_call_operand.vmem [shape: f32[2,1,64], index: 15, kind: input, shape index: {}]
  %s16 = inlined_call_operand.vmem [shape: f32[2,64,32], index: 16, kind: input, shape index: {}]
  %s17 = inlined_call_operand.vmem [shape: f32[2,1,32], index: 17, kind: input, shape index: {}]
  %s18 = inlined_call_operand.vmem [shape: f32[1,32], index: 18, kind: input, shape index: {}]
  %s19 = inlined_call_operand.vmem [shape: f32[1,32], index: 19, kind: input, shape index: {}]
  %s20 = inlined_call_operand.hbm [shape: f32[16,32], index: 20, kind: output, shape index: {}]
  %s21 = sld [smem:[#allocation0]]
  $region110: #{tpu_custom_call.1} parent=0
    _
  %s23 = ssub.s32 1, %s21
  %s24 = scalar_select 0, %s23, %s21
  $region1: #{tpu_custom_call.1} parent=0
    #allocation2 [shape = 'u8[8192]{0}', space=vmem, size = 0x2000, scoped, tag = 'input window, operand 0, single buffered']
    #allocation3 [shape = 's32[1]{0}', space=sflag, size = 0x4, scoped, tag = 'scoped memory for tpu_custom_call.1']
    #allocation4 [shape = 's32[1]{0}', space=sflag, size = 0x4, scoped, tag = 'scoped memory for tpu_custom_call.1']
    #allocation5 [shape = 'u8[8192]{0}', space=vmem, size = 0x2000, scoped, tag = 'input window, operand 1, single buffered']
    #allocation6 [shape = 's32[1]{0}', space=sflag, size = 0x4, scoped, tag = 'scoped memory for tpu_custom_call.1']
    #allocation7 [shape = 'u8[1024]{0}', space=vmem, size = 0x400, scoped, tag = 'input window, operand 3, single buffered']
    #allocation8 [shape = 'u8[32768]{0}', space=vmem, size = 0x8000, scoped, tag = 'input window, operand 10, single buffered']
    #allocation9 [shape = 's32[1]{0}', space=sflag, size = 0x4, scoped, tag = 'scoped memory for tpu_custom_call.1']
    #allocation10 [shape = 'u8[32768]{0}', space=vmem, size = 0x8000, scoped, tag = 'input window, operand 14, single buffered']
    #allocation11 [shape = 'u8[8192]{0}', space=vmem, size = 0x2000, scoped, tag = 'output window, operand 0, single buffered']
    %25 = vsyncpa [#allocation3], 0
    %26 = vsyncpa [#allocation6], 0
    %27 = vsyncpa [#allocation9], 0
    %28 = vsyncpa [#allocation4], 0
    // Predicated region
    $region2: #{tpu_custom_call.1} parent=1 // pred_check
      _
    $region3: #{tpu_custom_call.1} parent=1 // pred_check_branch
      %30 = sbr.rel (0) target = $region5
    $region4: #{tpu_custom_call.1} parent=1 // pred_region
      %s32 = ssub.s32 256, 256
      %33 = vsyncadd [#allocation3], %s32
      %s34 = sshll.u32 [#allocation2], 4
      %s35 = int_to_ptr.vmem [resolvable:$true] %s34
      %40 = dma.hbm_to_vmem [thread:$0]  %s0, 256, %s35, [#allocation3], 128, 128, 8
    $region5: #{tpu_custom_call.1} parent=1 // pred_fallthru
      _
    // Predicated region
    $region6: #{tpu_custom_call.1} parent=1 // pred_check
      _
    $region7: #{tpu_custom_call.1} parent=1 // pred_check_branch
      %42 = sbr.rel (0) target = $region9
    $region8: #{tpu_custom_call.1} parent=1 // pred_region
      %s44 = ssub.s32 256, 256
      %45 = vsyncadd [#allocation6], %s44
      %s46 = sshll.u32 [#allocation5], 4
      %s47 = int_to_ptr.vmem [resolvable:$true] %s46
      %52 = dma.hbm_to_vmem [thread:$0]  %s1, 256, %s47, [#allocation6], 128, 128, 8
    $region9: #{tpu_custom_call.1} parent=1 // pred_fallthru
      _
    // Predicated region
    $region10: #{tpu_custom_call.1} parent=1 // pred_check
      _
    $region11: #{tpu_custom_call.1} parent=1 // pred_check_branch
      %54 = sbr.rel (0) target = $region13
    $region12: #{tpu_custom_call.1} parent=1 // pred_region
      _
    $region13: #{tpu_custom_call.1} parent=1 // pred_fallthru
      _
    // Predicated region
    $region14: #{tpu_custom_call.1} parent=1 // pred_check
      _
    $region15: #{tpu_custom_call.1} parent=1 // pred_check_branch
      %56 = sbr.rel (0) target = $region17
    $region16: #{tpu_custom_call.1} parent=1 // pred_region
      %s58 = ssub.s32 32, 32
      %59 = vsyncadd [#allocation6], %s58
      %s60 = sshll.u32 [#allocation7], 4
      %s61 = int_to_ptr.vmem [resolvable:$true] %s60
      %66 = dma.hbm_to_vmem [thread:$0]  %s3, 32, %s61, [#allocation6], 16, 16, 1
    $region17: #{tpu_custom_call.1} parent=1 // pred_fallthru
      _
    // Predicated region
    $region18: #{tpu_custom_call.1} parent=1 // pred_check
      _
    $region19: #{tpu_custom_call.1} parent=1 // pred_check_branch
      %68 = sbr.rel (0) target = $region21
    $region20: #{tpu_custom_call.1} parent=1 // pred_region
      _
    $region21: #{tpu_custom_call.1} parent=1 // pred_fallthru
      _
    // Predicated region
    $region22: #{tpu_custom_call.1} parent=1 // pred_check
      _
    $region23: #{tpu_custom_call.1} parent=1 // pred_check_branch
      %70 = sbr.rel (0) target = $region25
    $region24: #{tpu_custom_call.1} parent=1 // pred_region
      _
    $region25: #{tpu_custom_call.1} parent=1 // pred_fallthru
      _
    // Predicated region
    $region26: #{tpu_custom_call.1} parent=1 // pred_check
      _
    $region27: #{tpu_custom_call.1} parent=1 // pred_check_branch
      %72 = sbr.rel (0) target = $region29
    $region28: #{tpu_custom_call.1} parent=1 // pred_region
      _
    $region29: #{tpu_custom_call.1} parent=1 // pred_fallthru
      _
    // Predicated region
    $region30: #{tpu_custom_call.1} parent=1 // pred_check
      _
    $region31: #{tpu_custom_call.1} parent=1 // pred_check_branch
      %74 = sbr.rel (0) target = $region33
    $region32: #{tpu_custom_call.1} parent=1 // pred_region
      _
    $region33: #{tpu_custom_call.1} parent=1 // pred_fallthru
      _
    // Predicated region
    $region34: #{tpu_custom_call.1} parent=1 // pred_check
      _
    $region35: #{tpu_custom_call.1} parent=1 // pred_check_branch
      %76 = sbr.rel (0) target = $region37
    $region36: #{tpu_custom_call.1} parent=1 // pred_region
      _
    $region37: #{tpu_custom_call.1} parent=1 // pred_fallthru
      _
    // Predicated region
    $region38: #{tpu_custom_call.1} parent=1 // pred_check
      _
    $region39: #{tpu_custom_call.1} parent=1 // pred_check_branch
      %78 = sbr.rel (0) target = $region41
    $region40: #{tpu_custom_call.1} parent=1 // pred_region
      _
    $region41: #{tpu_custom_call.1} parent=1 // pred_fallthru
      _
    // Predicated region
    $region42: #{tpu_custom_call.1} parent=1 // pred_check
      _
    $region43: #{tpu_custom_call.1} parent=1 // pred_check_branch
      %80 = sbr.rel (0) target = $region45
    $region44: #{tpu_custom_call.1} parent=1 // pred_region
      %s82 = ssub.s32 1024, 1024
      %83 = vsyncadd [#allocation9], %s82
      %s84 = sshll.u32 [#allocation8], 4
      %s85 = int_to_ptr.vmem [resolvable:$true] %s84
      %90 = dma.hbm_to_vmem [thread:$0]  %s10, 1024, %s85, [#allocation9], 128, 128, 8
    $region45: #{tpu_custom_call.1} parent=1 // pred_fallthru
      _
    // Predicated region
    $region46: #{tpu_custom_call.1} parent=1 // pred_check
      _
    $region47: #{tpu_custom_call.1} parent=1 // pred_check_branch
      %92 = sbr.rel (0) target = $region49
    $region48: #{tpu_custom_call.1} parent=1 // pred_region
      _
    $region49: #{tpu_custom_call.1} parent=1 // pred_fallthru
      _
    // Predicated region
    $region50: #{tpu_custom_call.1} parent=1 // pred_check
      _
    $region51: #{tpu_custom_call.1} parent=1 // pred_check_branch
      %94 = sbr.rel (0) target = $region53
    $region52: #{tpu_custom_call.1} parent=1 // pred_region
      _
    $region53: #{tpu_custom_call.1} parent=1 // pred_fallthru
      _
    // Predicated region
    $region54: #{tpu_custom_call.1} parent=1 // pred_check
      _
    $region55: #{tpu_custom_call.1} parent=1 // pred_check_branch
      %96 = sbr.rel (0) target = $region57
    $region56: #{tpu_custom_call.1} parent=1 // pred_region
      _
    $region57: #{tpu_custom_call.1} parent=1 // pred_fallthru
      _
    // Predicated region
    $region58: #{tpu_custom_call.1} parent=1 // pred_check
      _
    $region59: #{tpu_custom_call.1} parent=1 // pred_check_branch
      %98 = sbr.rel (0) target = $region61
    $region60: #{tpu_custom_call.1} parent=1 // pred_region
      %s100 = ssub.s32 1024, 1024
      %101 = vsyncadd [#allocation9], %s100
      %s102 = sshll.u32 [#allocation10], 4
      %s103 = int_to_ptr.vmem [resolvable:$true] %s102
      %108 = dma.hbm_to_vmem [thread:$0]  %s14, 1024, %s103, [#allocation9], 128, 128, 8
    $region61: #{tpu_custom_call.1} parent=1 // pred_fallthru
      _
    // Predicated region
    $region62: #{tpu_custom_call.1} parent=1 // pred_check
      _
    $region63: #{tpu_custom_call.1} parent=1 // pred_check_branch
      %110 = sbr.rel (0) target = $region65
    $region64: #{tpu_custom_call.1} parent=1 // pred_region
      _
    $region65: #{tpu_custom_call.1} parent=1 // pred_fallthru
      _
    // Predicated region
    $region66: #{tpu_custom_call.1} parent=1 // pred_check
      _
    $region67: #{tpu_custom_call.1} parent=1 // pred_check_branch
      %112 = sbr.rel (0) target = $region69
    $region68: #{tpu_custom_call.1} parent=1 // pred_region
      _
    $region69: #{tpu_custom_call.1} parent=1 // pred_fallthru
      _
    // Predicated region
    $region70: #{tpu_custom_call.1} parent=1 // pred_check
      _
    $region71: #{tpu_custom_call.1} parent=1 // pred_check_branch
      %114 = sbr.rel (0) target = $region73
    $region72: #{tpu_custom_call.1} parent=1 // pred_region
      _
    $region73: #{tpu_custom_call.1} parent=1 // pred_fallthru
      _
    // Predicated region
    $region74: #{tpu_custom_call.1} parent=1 // pred_check
      _
    $region75: #{tpu_custom_call.1} parent=1 // pred_check_branch
      %116 = sbr.rel (0) target = $region77
    $region76: #{tpu_custom_call.1} parent=1 // pred_region
      _
    $region77: #{tpu_custom_call.1} parent=1 // pred_fallthru
      _
    // Predicated region
    $region78: #{tpu_custom_call.1} parent=1 // pred_check
      _
    $region79: #{tpu_custom_call.1} parent=1 // pred_check_branch
      %118 = sbr.rel (0) target = $region81
    $region80: #{tpu_custom_call.1} parent=1 // pred_region
      _
    $region81: #{tpu_custom_call.1} parent=1 // pred_fallthru
      _
    // Predicated region
    $region82: #{tpu_custom_call.1} parent=1 // pred_check
      _
    $region83: #{tpu_custom_call.1} parent=1 // pred_check_branch
      %120 = sbr.rel (0) target = $region85
    $region84: #{tpu_custom_call.1} parent=1 // pred_region
      %121 = dma.done [#allocation3], 256
    $region85: #{tpu_custom_call.1} parent=1 // pred_fallthru
      _
    // Predicated region
    $region86: #{tpu_custom_call.1} parent=1 // pred_check
      _
    $region87: #{tpu_custom_call.1} parent=1 // pred_check_branch
      %123 = sbr.rel (0) target = $region89
    $region88: #{tpu_custom_call.1} parent=1 // pred_region
      %124 = dma.done [#allocation6], 256
    $region89: #{tpu_custom_call.1} parent=1 // pred_fallthru
      _
    // Predicated region
    $region90: #{tpu_custom_call.1} parent=1 // pred_check
      _
    $region91: #{tpu_custom_call.1} parent=1 // pred_check_branch
      %126 = sbr.rel (0) target = $region93
    $region92: #{tpu_custom_call.1} parent=1 // pred_region
      %127 = dma.done [#allocation6], 32
    $region93: #{tpu_custom_call.1} parent=1 // pred_fallthru
      _
    // Predicated region
    $region94: #{tpu_custom_call.1} parent=1 // pred_check
      _
    $region95: #{tpu_custom_call.1} parent=1 // pred_check_branch
      %129 = sbr.rel (0) target = $region97
    $region96: #{tpu_custom_call.1} parent=1 // pred_region
      %130 = dma.done [#allocation9], 1024
    $region97: #{tpu_custom_call.1} parent=1 // pred_fallthru
      _
    // Predicated region
    $region98: #{tpu_custom_call.1} parent=1 // pred_check
      _
    $region99: #{tpu_custom_call.1} parent=1 // pred_check_branch
      %132 = sbr.rel (0) target = $region101
    $region100: #{tpu_custom_call.1} parent=1 // pred_region
      %133 = dma.done [#allocation9], 1024
    $region101: #{tpu_custom_call.1} parent=1 // pred_fallthru
      _
    %v134 = vld [vmem:[#allocation2] sm:$0xff]
    %v135 = vld [vmem:[#allocation2 + $0x8] sm:$0xff]
    %v136 = vld [vmem:[#allocation5] sm:$0xff]
    %v137 = vld [vmem:[#allocation5 + $0x8] sm:$0xff]
    %v138 = vld [vmem:[%s2] sm:$0x1]
    %v139 = vld [vmem:[#allocation7] sm:$0x1]
    %vm140 = vcmask 261120
    %v141 = vsel %vm140, %v134, 0.0
    %142 = vadd.xlane.f32.xlu0 %v141
    %v143 = vpop.xlane.xlu0 %142
    %v144 = vsel %vm140, %v135, 0.0
    %145 = vadd.xlane.f32.xlu0 %v144
    %v146 = vpop.xlane.xlu0 %145
    %v147 = vrcp.pop 32.0
    %v148 = vmul.f32 %v143, %v147
    %v149 = vmul.f32 %v146, %v147
    %v150 = vsub.f32 %v134, %v148
    %v151 = vsub.f32 %v135, %v149
    %v152 = vmul.f32 %v150, %v150
    %v153 = vmul.f32 %v151, %v151
    %v154 = vsel %vm140, %v152, 0.0
    %155 = vadd.xlane.f32.xlu0 %v154
    %v156 = vpop.xlane.xlu0 %155
    %v157 = vsel %vm140, %v153, 0.0
    %158 = vadd.xlane.f32.xlu0 %v157
    %v159 = vpop.xlane.xlu0 %158
    %v160 = vmul.f32 %v156, %v147
    %v161 = vmul.f32 %v159, %v147
    %v162 = vadd.f32 %v160, 1e-06
    %v163 = vadd.f32 %v161, 1e-06
    %v164 = vrsqrt.pop %v162
    %v165 = vrsqrt.pop %v163
    %v166 = vmul.f32 %v150, %v164
    %v167 = vmul.f32 %v151, %v165
    %v169 = vlaneseq
    %v170 = vshrl.u32 %v169, 7
    %v171 = vsub.s32 0, %v170
    %v172 = vrot.slane %v138, %v171
    %v174 = vmul.f32 %v166, %v172
    %v175 = vmul.f32 %v167, %v172
    %v177 = vlaneseq
    %v178 = vshrl.u32 %v177, 7
    %v179 = vsub.s32 0, %v178
    %v180 = vrot.slane %v139, %v179
    %v182 = vadd.f32 %v174, %v180
    %v183 = vadd.f32 %v175, %v180
    %v184 = vld [vmem:[%s4] sm:$0xff]
    %v185 = vld [vmem:[%s4 + $0x8] sm:$0xff]
    %v186 = vld [vmem:[%s4 + $0x10] sm:$0xff]
    %v187 = vld [vmem:[%s4 + $0x18] sm:$0xff]
    %v188 = vld [vmem:[%s5] sm:$0x1]
    %v190 = vlaneseq
    %v191 = vshrl.u32 %v190, 7
    %v192 = vsub.s32 0, %v191
    %v193 = vrot.slane %v188, %v192
    %v196 = vsel %vm140, %v182, 0
    %v199 = vsel %vm140, %v183, 0
    %201 = vmatprep.subr.mxu0 0.0
    %202 = vmatpush1.msra.mxu0 0.0
    %203 = vmatprep.subr.mxu0 0.0
    %204 = vmatpush1.msra.mxu0 0.0
    %205 = vmatprep.subr.mxu0 0.0
    %206 = vmatpush1.msra.mxu0 0.0
    %207 = vmatprep.subr.mxu0 0.0
    %208 = vmatpush1.msra.mxu0 0.0
    %209 = vmatprep.subr.mxu0 0.0
    %210 = vmatpush1.msra.mxu0 0.0
    %211 = vmatprep.subr.mxu0 0.0
    %212 = vmatpush1.msra.mxu0 0.0
    %213 = vmatprep.subr.mxu0 0.0
    %214 = vmatpush1.msra.mxu0 0.0
    %215 = vmatprep.subr.mxu0 0.0
    %216 = vmatpush1.msra.mxu0 0.0
    %217 = vmatprep.subr.mxu0 0.0
    %218 = vmatpush1.msra.mxu0 0.0
    %219 = vmatprep.subr.mxu0 0.0
    %220 = vmatpush1.msra.mxu0 0.0
    %221 = vmatprep.subr.mxu0 0.0
    %222 = vmatpush1.msra.mxu0 0.0
    %223 = vmatprep.subr.mxu0 0.0
    %224 = vmatpush1.msra.mxu0 0.0
    %225 = vmatprep.subr.mxu0 0.0
    %226 = vmatpush1.msra.mxu0 %v187
    %227 = vmatprep.subr.mxu0 0.0
    %228 = vmatpush1.msra.mxu0 %v186
    %229 = vmatprep.subr.mxu0 0.0
    %230 = vmatpush1.msra.mxu0 %v185
    %231 = vmatprep.subr.mxu0 0.0
    %232 = vmatpush1.msra.mxu0 %v184
    %233 = vmatprep.subr.mxu0 0.0
    %234 = vmatpush2.msra.mxu0 0.0
    %235 = vmatprep.subr.mxu0 0.0
    %236 = vmatpush2.msra.mxu0 0.0
    %237 = vmatprep.subr.mxu0 0.0
    %238 = vmatpush2.msra.mxu0 0.0
    %239 = vmatprep.subr.mxu0 0.0
    %240 = vmatpush2.msra.mxu0 0.0
    %241 = vmatprep.subr.mxu0 0.0
    %242 = vmatpush2.msra.mxu0 0.0
    %243 = vmatprep.subr.mxu0 0.0
    %244 = vmatpush2.msra.mxu0 0.0
    %245 = vmatprep.subr.mxu0 0.0
    %246 = vmatpush2.msra.mxu0 0.0
    %247 = vmatprep.subr.mxu0 0.0
    %248 = vmatpush2.msra.mxu0 0.0
    %249 = vmatprep.subr.mxu0 0.0
    %250 = vmatpush2.msra.mxu0 0.0
    %251 = vmatprep.subr.mxu0 0.0
    %252 = vmatpush2.msra.mxu0 0.0
    %253 = vmatprep.subr.mxu0 0.0
    %254 = vmatpush2.msra.mxu0 0.0
    %255 = vmatprep.subr.mxu0 0.0
    %256 = vmatpush2.msra.mxu0 0.0
    %257 = vmatprep.subr.mxu0 0.0
    %258 = vmatpush2.msra.mxu0 0.0
    %259 = vmatprep.subr.mxu0 0.0
    %260 = vmatpush2.msra.mxu0 0.0
    %261 = vmatprep.subr.mxu0 0.0
    %262 = vmatpush2.msra.mxu0 0.0
    %263 = vmatprep.subr.mxu0 0.0
    %264 = vmatpush2.msra.mxu0 0.0
    %265 = vmatprep.mubr.f32.mxu0 0.0
    %266 = vmatmul.mubr.f32.gmra.mxu0 %v196
    %v267 = vpop.f32.mrf.mxu0
    %v268 = vadd.f32 %v193, %v267
    %v269 = vpop.f32.mrf.mxu0
    %270 = vmatprep.mubr.f32.mxu0 0.0
    %271 = vmatmul.mubr.f32.gmra.mxu0 %v199
    %v272 = vpop.f32.mrf.mxu0
    %v273 = vadd.f32 %v193, %v272
    %v274 = vpop.f32.mrf.mxu0
    %275 = vdwg.mxu0
    %v276 = vmul.f32 %v268, 0.35355338
    %v277 = vmul.f32 %v273, 0.35355338
    %v278 = vld [vmem:[%s6] sm:$0xff]
    %v279 = vld [vmem:[%s6 + $0x8] sm:$0xff]
    %v280 = vld [vmem:[%s6 + $0x10] sm:$0xff]
    %v281 = vld [vmem:[%s6 + $0x18] sm:$0xff]
    %v282 = vld [vmem:[%s7] sm:$0x1]
    %v284 = vlaneseq
    %v285 = vshrl.u32 %v284, 7
    %v286 = vsub.s32 0, %v285
    %v287 = vrot.slane %v282, %v286
    %289 = vmatprep.subr.mxu0 0.0
    %290 = vmatpush1.msra.mxu0 0.0
    %291 = vmatprep.subr.mxu0 0.0
    %292 = vmatpush1.msra.mxu0 0.0
    %293 = vmatprep.subr.mxu0 0.0
    %294 = vmatpush1.msra.mxu0 0.0
    %295 = vmatprep.subr.mxu0 0.0
    %296 = vmatpush1.msra.mxu0 0.0
    %297 = vmatprep.subr.mxu0 0.0
    %298 = vmatpush1.msra.mxu0 0.0
    %299 = vmatprep.subr.mxu0 0.0
    %300 = vmatpush1.msra.mxu0 0.0
    %301 = vmatprep.subr.mxu0 0.0
    %302 = vmatpush1.msra.mxu0 0.0
    %303 = vmatprep.subr.mxu0 0.0
    %304 = vmatpush1.msra.mxu0 0.0
    %305 = vmatprep.subr.mxu0 0.0
    %306 = vmatpush1.msra.mxu0 0.0
    %307 = vmatprep.subr.mxu0 0.0
    %308 = vmatpush1.msra.mxu0 0.0
    %309 = vmatprep.subr.mxu0 0.0
    %310 = vmatpush1.msra.mxu0 0.0
    %311 = vmatprep.subr.mxu0 0.0
    %312 = vmatpush1.msra.mxu0 0.0
    %313 = vmatprep.subr.mxu0 0.0
    %314 = vmatpush1.msra.mxu0 %v281
    %315 = vmatprep.subr.mxu0 0.0
    %316 = vmatpush1.msra.mxu0 %v280
    %317 = vmatprep.subr.mxu0 0.0
    %318 = vmatpush1.msra.mxu0 %v279
    %319 = vmatprep.subr.mxu0 0.0
    %320 = vmatpush1.msra.mxu0 %v278
    %321 = vmatprep.subr.mxu0 0.0
    %322 = vmatpush2.msra.mxu0 0.0
    %323 = vmatprep.subr.mxu0 0.0
    %324 = vmatpush2.msra.mxu0 0.0
    %325 = vmatprep.subr.mxu0 0.0
    %326 = vmatpush2.msra.mxu0 0.0
    %327 = vmatprep.subr.mxu0 0.0
    %328 = vmatpush2.msra.mxu0 0.0
    %329 = vmatprep.subr.mxu0 0.0
    %330 = vmatpush2.msra.mxu0 0.0
    %331 = vmatprep.subr.mxu0 0.0
    %332 = vmatpush2.msra.mxu0 0.0
    %333 = vmatprep.subr.mxu0 0.0
    %334 = vmatpush2.msra.mxu0 0.0
    %335 = vmatprep.subr.mxu0 0.0
    %336 = vmatpush2.msra.mxu0 0.0
    %337 = vmatprep.subr.mxu0 0.0
    %338 = vmatpush2.msra.mxu0 0.0
    %339 = vmatprep.subr.mxu0 0.0
    %340 = vmatpush2.msra.mxu0 0.0
    %341 = vmatprep.subr.mxu0 0.0
    %342 = vmatpush2.msra.mxu0 0.0
    %343 = vmatprep.subr.mxu0 0.0
    %344 = vmatpush2.msra.mxu0 0.0
    %345 = vmatprep.subr.mxu0 0.0
    %346 = vmatpush2.msra.mxu0 0.0
    %347 = vmatprep.subr.mxu0 0.0
    %348 = vmatpush2.msra.mxu0 0.0
    %349 = vmatprep.subr.mxu0 0.0
    %350 = vmatpush2.msra.mxu0 0.0
    %351 = vmatprep.subr.mxu0 0.0
    %352 = vmatpush2.msra.mxu0 0.0
    %353 = vmatprep.mubr.f32.mxu0 0.0
    %354 = vmatmul.mubr.f32.gmra.mxu0 %v196
    %v355 = vpop.f32.mrf.mxu0
    %v356 = vadd.f32 %v287, %v355
    %v357 = vpop.f32.mrf.mxu0
    %358 = vmatprep.mubr.f32.mxu0 0.0
    %359 = vmatmul.mubr.f32.gmra.mxu0 %v199
    %v360 = vpop.f32.mrf.mxu0
    %v361 = vadd.f32 %v287, %v360
    %v362 = vpop.f32.mrf.mxu0
    %363 = vdwg.mxu0
    %v364 = vld [vmem:[%s8] sm:$0xff]
    %v365 = vld [vmem:[%s8 + $0x8] sm:$0xff]
    %v366 = vld [vmem:[%s8 + $0x10] sm:$0xff]
    %v367 = vld [vmem:[%s8 + $0x18] sm:$0xff]
    %v368 = vld [vmem:[%s9] sm:$0x1]
    %v370 = vlaneseq
    %v371 = vshrl.u32 %v370, 7
    %v372 = vsub.s32 0, %v371
    %v373 = vrot.slane %v368, %v372
    %375 = vmatprep.subr.mxu0 0.0
    %376 = vmatpush1.msra.mxu0 0.0
    %377 = vmatprep.subr.mxu0 0.0
    %378 = vmatpush1.msra.mxu0 0.0
    %379 = vmatprep.subr.mxu0 0.0
    %380 = vmatpush1.msra.mxu0 0.0
    %381 = vmatprep.subr.mxu0 0.0
    %382 = vmatpush1.msra.mxu0 0.0
    %383 = vmatprep.subr.mxu0 0.0
    %384 = vmatpush1.msra.mxu0 0.0
    %385 = vmatprep.subr.mxu0 0.0
    %386 = vmatpush1.msra.mxu0 0.0
    %387 = vmatprep.subr.mxu0 0.0
    %388 = vmatpush1.msra.mxu0 0.0
    %389 = vmatprep.subr.mxu0 0.0
    %390 = vmatpush1.msra.mxu0 0.0
    %391 = vmatprep.subr.mxu0 0.0
    %392 = vmatpush1.msra.mxu0 0.0
    %393 = vmatprep.subr.mxu0 0.0
    %394 = vmatpush1.msra.mxu0 0.0
    %395 = vmatprep.subr.mxu0 0.0
    %396 = vmatpush1.msra.mxu0 0.0
    %397 = vmatprep.subr.mxu0 0.0
    %398 = vmatpush1.msra.mxu0 0.0
    %399 = vmatprep.subr.mxu0 0.0
    %400 = vmatpush1.msra.mxu0 %v367
    %401 = vmatprep.subr.mxu0 0.0
    %402 = vmatpush1.msra.mxu0 %v366
    %403 = vmatprep.subr.mxu0 0.0
    %404 = vmatpush1.msra.mxu0 %v365
    %405 = vmatprep.subr.mxu0 0.0
    %406 = vmatpush1.msra.mxu0 %v364
    %407 = vmatprep.subr.mxu0 0.0
    %408 = vmatpush2.msra.mxu0 0.0
    %409 = vmatprep.subr.mxu0 0.0
    %410 = vmatpush2.msra.mxu0 0.0
    %411 = vmatprep.subr.mxu0 0.0
    %412 = vmatpush2.msra.mxu0 0.0
    %413 = vmatprep.subr.mxu0 0.0
    %414 = vmatpush2.msra.mxu0 0.0
    %415 = vmatprep.subr.mxu0 0.0
    %416 = vmatpush2.msra.mxu0 0.0
    %417 = vmatprep.subr.mxu0 0.0
    %418 = vmatpush2.msra.mxu0 0.0
    %419 = vmatprep.subr.mxu0 0.0
    %420 = vmatpush2.msra.mxu0 0.0
    %421 = vmatprep.subr.mxu0 0.0
    %422 = vmatpush2.msra.mxu0 0.0
    %423 = vmatprep.subr.mxu0 0.0
    %424 = vmatpush2.msra.mxu0 0.0
    %425 = vmatprep.subr.mxu0 0.0
    %426 = vmatpush2.msra.mxu0 0.0
    %427 = vmatprep.subr.mxu0 0.0
    %428 = vmatpush2.msra.mxu0 0.0
    %429 = vmatprep.subr.mxu0 0.0
    %430 = vmatpush2.msra.mxu0 0.0
    %431 = vmatprep.subr.mxu0 0.0
    %432 = vmatpush2.msra.mxu0 0.0
    %433 = vmatprep.subr.mxu0 0.0
    %434 = vmatpush2.msra.mxu0 0.0
    %435 = vmatprep.subr.mxu0 0.0
    %436 = vmatpush2.msra.mxu0 0.0
    %437 = vmatprep.subr.mxu0 0.0
    %438 = vmatpush2.msra.mxu0 0.0
    %439 = vmatprep.mubr.f32.mxu0 0.0
    %440 = vmatmul.mubr.f32.gmra.mxu0 %v196
    %v441 = vpop.f32.mrf.mxu0
    %v442 = vadd.f32 %v373, %v441
    %v443 = vpop.f32.mrf.mxu0
    %444 = vmatprep.mubr.f32.mxu0 0.0
    %445 = vmatmul.mubr.f32.gmra.mxu0 %v199
    %v446 = vpop.f32.mrf.mxu0
    %v447 = vadd.f32 %v373, %v446
    %v448 = vpop.f32.mrf.mxu0
    %449 = vdwg.mxu0
    %v450 = vld [vmem:[#allocation8] sm:$0xff]
    %v451 = vld [vmem:[#allocation8 + $0x8] sm:$0xff]
    %v452 = vld [vmem:[#allocation8 + $0x10] sm:$0xff]
    %v453 = vld [vmem:[#allocation8 + $0x18] sm:$0xff]
    %vm454 = vcmask 64512
    %v456 = vsel %vm454, %v276, 0
    %v459 = vsel %vm454, %v277, 0
    %v462 = vsel %vm454, %v356, 0
    %v465 = vsel %vm454, %v361, 0
    %467 = vmatprep.subr.mxu0 0.0
    %468 = vmatpush1.xpose.msra.mxu0 0.0
    %469 = vmatprep.subr.mxu0 0.0
    %470 = vmatpush1.xpose.msra.mxu0 0.0
    %471 = vmatprep.subr.mxu0 0.0
    %472 = vmatpush1.xpose.msra.mxu0 0.0
    %473 = vmatprep.subr.mxu0 0.0
    %474 = vmatpush1.xpose.msra.mxu0 0.0
    %475 = vmatprep.subr.mxu0 0.0
    %476 = vmatpush1.xpose.msra.mxu0 0.0
    %477 = vmatprep.subr.mxu0 0.0
    %478 = vmatpush1.xpose.msra.mxu0 0.0
    %479 = vmatprep.subr.mxu0 0.0
    %480 = vmatpush1.xpose.msra.mxu0 0.0
    %481 = vmatprep.subr.mxu0 0.0
    %482 = vmatpush1.xpose.msra.mxu0 0.0
    %483 = vmatprep.subr.mxu0 0.0
    %484 = vmatpush1.xpose.msra.mxu0 0.0
    %485 = vmatprep.subr.mxu0 0.0
    %486 = vmatpush1.xpose.msra.mxu0 0.0
    %487 = vmatprep.subr.mxu0 0.0
    %488 = vmatpush1.xpose.msra.mxu0 0.0
    %489 = vmatprep.subr.mxu0 0.0
    %490 = vmatpush1.xpose.msra.mxu0 0.0
    %491 = vmatprep.subr.mxu0 0.0
    %492 = vmatpush1.xpose.msra.mxu0 0.0
    %493 = vmatprep.subr.mxu0 0.0
    %494 = vmatpush1.xpose.msra.mxu0 0.0
    %495 = vmatprep.subr.mxu0 0.0
    %496 = vmatpush1.xpose.msra.mxu0 %v465
    %497 = vmatprep.subr.mxu0 0.0
    %498 = vmatpush1.xpose.msra.mxu0 %v462
    %499 = vmatprep.subr.mxu0 0.0
    %500 = vmatpush2.xpose.msra.mxu0 0.0
    %501 = vmatprep.subr.mxu0 0.0
    %502 = vmatpush2.xpose.msra.mxu0 0.0
    %503 = vmatprep.subr.mxu0 0.0
    %504 = vmatpush2.xpose.msra.mxu0 0.0
    %505 = vmatprep.subr.mxu0 0.0
    %506 = vmatpush2.xpose.msra.mxu0 0.0
    %507 = vmatprep.subr.mxu0 0.0
    %508 = vmatpush2.xpose.msra.mxu0 0.0
    %509 = vmatprep.subr.mxu0 0.0
    %510 = vmatpush2.xpose.msra.mxu0 0.0
    %511 = vmatprep.subr.mxu0 0.0
    %512 = vmatpush2.xpose.msra.mxu0 0.0
    %513 = vmatprep.subr.mxu0 0.0
    %514 = vmatpush2.xpose.msra.mxu0 0.0
    %515 = vmatprep.subr.mxu0 0.0
    %516 = vmatpush2.xpose.msra.mxu0 0.0
    %517 = vmatprep.subr.mxu0 0.0
    %518 = vmatpush2.xpose.msra.mxu0 0.0
    %519 = vmatprep.subr.mxu0 0.0
    %520 = vmatpush2.xpose.msra.mxu0 0.0
    %521 = vmatprep.subr.mxu0 0.0
    %522 = vmatpush2.xpose.msra.mxu0 0.0
    %523 = vmatprep.subr.mxu0 0.0
    %524 = vmatpush2.xpose.msra.mxu0 0.0
    %525 = vmatprep.subr.mxu0 0.0
    %526 = vmatpush2.xpose.msra.mxu0 0.0
    %527 = vmatprep.subr.mxu0 0.0
    %528 = vmatpush2.xpose.msra.mxu0 0.0
    %529 = vmatprep.subr.mxu0 0.0
    %530 = vmatpush2.xpose.msra.mxu0 0.0
    %531 = vmatprep.mubr.f32.mxu0 0.0
    %532 = vmatmul.mubr.f32.gmra.mxu0 %v456
    %v533 = vpop.f32.mrf.mxu0
    %v534 = vadd.f32 %v136, %v533
    %v535 = vpop.f32.mrf.mxu0
    %536 = vmatprep.mubr.f32.mxu0 0.0
    %537 = vmatmul.mubr.f32.gmra.mxu0 %v459
    %v538 = vpop.f32.mrf.mxu0
    %v539 = vadd.f32 %v137, %v538
    %v540 = vpop.f32.mrf.mxu0
    %541 = vdwg.mxu0
    %vm542 = vcmask 130048
    %v543 = vsel %vm542, %v534, -inf
    %544 = vmax.xlane.f32.xlu0 %v543
    %v545 = vpop.xlane.xlu0 %544
    %v546 = vsel %vm542, %v539, -inf
    %547 = vmax.xlane.f32.xlu0 %v546
    %v548 = vpop.xlane.xlu0 %547
    %v549 = vsub.f32 %v534, %v545
    %v550 = vsub.f32 %v539, %v548
    %v551 = vmul.f32 %v549, 1.442695
    %v552 = vpow.pop %v551
    %v553 = vmul.f32 %v550, 1.442695
    %v554 = vpow.pop %v553
    %v555 = vsel %vm542, %v552, 0.0
    %556 = vadd.xlane.f32.xlu0 %v555
    %v557 = vpop.xlane.xlu0 %556
    %v558 = vsel %vm542, %v554, 0.0
    %559 = vadd.xlane.f32.xlu0 %v558
    %v560 = vpop.xlane.xlu0 %559
    %v561 = vrcp.pop %v557
    %v562 = vrcp.pop %v560
    %v563 = vmul.f32 %v552, %v561
    %v564 = vmul.f32 %v554, %v562
    %v566 = vsel %vm542, %v563, 0
    %v569 = vsel %vm542, %v564, 0
    %571 = vmatprep.subr.mxu0 0.0
    %572 = vmatpush1.msra.mxu0 0.0
    %573 = vmatprep.subr.mxu0 0.0
    %574 = vmatpush1.msra.mxu0 0.0
    %575 = vmatprep.subr.mxu0 0.0
    %576 = vmatpush1.msra.mxu0 0.0
    %577 = vmatprep.subr.mxu0 0.0
    %578 = vmatpush1.msra.mxu0 0.0
    %579 = vmatprep.subr.mxu0 0.0
    %580 = vmatpush1.msra.mxu0 0.0
    %581 = vmatprep.subr.mxu0 0.0
    %582 = vmatpush1.msra.mxu0 0.0
    %583 = vmatprep.subr.mxu0 0.0
    %584 = vmatpush1.msra.mxu0 0.0
    %585 = vmatprep.subr.mxu0 0.0
    %586 = vmatpush1.msra.mxu0 0.0
    %587 = vmatprep.subr.mxu0 0.0
    %588 = vmatpush1.msra.mxu0 0.0
    %589 = vmatprep.subr.mxu0 0.0
    %590 = vmatpush1.msra.mxu0 0.0
    %591 = vmatprep.subr.mxu0 0.0
    %592 = vmatpush1.msra.mxu0 0.0
    %593 = vmatprep.subr.mxu0 0.0
    %594 = vmatpush1.msra.mxu0 0.0
    %595 = vmatprep.subr.mxu0 0.0
    %596 = vmatpush1.msra.mxu0 0.0
    %597 = vmatprep.subr.mxu0 0.0
    %598 = vmatpush1.msra.mxu0 0.0
    %599 = vmatprep.subr.mxu0 0.0
    %600 = vmatpush1.msra.mxu0 %v447
    %601 = vmatprep.subr.mxu0 0.0
    %602 = vmatpush1.msra.mxu0 %v442
    %603 = vmatprep.subr.mxu0 0.0
    %604 = vmatpush2.msra.mxu0 0.0
    %605 = vmatprep.subr.mxu0 0.0
    %606 = vmatpush2.msra.mxu0 0.0
    %607 = vmatprep.subr.mxu0 0.0
    %608 = vmatpush2.msra.mxu0 0.0
    %609 = vmatprep.subr.mxu0 0.0
    %610 = vmatpush2.msra.mxu0 0.0
    %611 = vmatprep.subr.mxu0 0.0
    %612 = vmatpush2.msra.mxu0 0.0
    %613 = vmatprep.subr.mxu0 0.0
    %614 = vmatpush2.msra.mxu0 0.0
    %615 = vmatprep.subr.mxu0 0.0
    %616 = vmatpush2.msra.mxu0 0.0
    %617 = vmatprep.subr.mxu0 0.0
    %618 = vmatpush2.msra.mxu0 0.0
    %619 = vmatprep.subr.mxu0 0.0
    %620 = vmatpush2.msra.mxu0 0.0
    %621 = vmatprep.subr.mxu0 0.0
    %622 = vmatpush2.msra.mxu0 0.0
    %623 = vmatprep.subr.mxu0 0.0
    %624 = vmatpush2.msra.mxu0 0.0
    %625 = vmatprep.subr.mxu0 0.0
    %626 = vmatpush2.msra.mxu0 0.0
    %627 = vmatprep.subr.mxu0 0.0
    %628 = vmatpush2.msra.mxu0 0.0
    %629 = vmatprep.subr.mxu0 0.0
    %630 = vmatpush2.msra.mxu0 0.0
    %631 = vmatprep.subr.mxu0 0.0
    %632 = vmatpush2.msra.mxu0 0.0
    %633 = vmatprep.subr.mxu0 0.0
    %634 = vmatpush2.msra.mxu0 0.0
    %635 = vmatprep.mubr.f32.mxu0 0.0
    %636 = vmatmul.mubr.f32.gmra.mxu0 %v566
    %v637 = vpop.f32.mrf.mxu0
    %v638 = vadd.f32 0.0, %v637
    %v639 = vpop.f32.mrf.mxu0
    %640 = vmatprep.mubr.f32.mxu0 0.0
    %641 = vmatmul.mubr.f32.gmra.mxu0 %v569
    %v642 = vpop.f32.mrf.mxu0
    %v643 = vadd.f32 0.0, %v642
    %v644 = vpop.f32.mrf.mxu0
    %645 = vdwg.mxu0
    %646 = vrot.lane.b32.xlu0 %v276, 120
    %v647 = vpop.permute.xlu0 %646
    %648 = vrot.lane.b32.xlu0 %v277, 120
    %v649 = vpop.permute.xlu0 %648
    %650 = vrot.lane.b32.xlu0 %v356, 120
    %v651 = vpop.permute.xlu0 %650
    %652 = vrot.lane.b32.xlu0 %v361, 120
    %v653 = vpop.permute.xlu0 %652
    %v654 = vsel %vm454, %v647, 0
    %v656 = vsel %vm454, %v649, 0
    %v658 = vsel %vm454, %v651, 0
    %v660 = vsel %vm454, %v653, 0
    %662 = vmatprep.subr.mxu0 0.0
    %663 = vmatpush1.xpose.msra.mxu0 0.0
    %664 = vmatprep.subr.mxu0 0.0
    %665 = vmatpush1.xpose.msra.mxu0 0.0
    %666 = vmatprep.subr.mxu0 0.0
    %667 = vmatpush1.xpose.msra.mxu0 0.0
    %668 = vmatprep.subr.mxu0 0.0
    %669 = vmatpush1.xpose.msra.mxu0 0.0
    %670 = vmatprep.subr.mxu0 0.0
    %671 = vmatpush1.xpose.msra.mxu0 0.0
    %672 = vmatprep.subr.mxu0 0.0
    %673 = vmatpush1.xpose.msra.mxu0 0.0
    %674 = vmatprep.subr.mxu0 0.0
    %675 = vmatpush1.xpose.msra.mxu0 0.0
    %676 = vmatprep.subr.mxu0 0.0
    %677 = vmatpush1.xpose.msra.mxu0 0.0
    %678 = vmatprep.subr.mxu0 0.0
    %679 = vmatpush1.xpose.msra.mxu0 0.0
    %680 = vmatprep.subr.mxu0 0.0
    %681 = vmatpush1.xpose.msra.mxu0 0.0
    %682 = vmatprep.subr.mxu0 0.0
    %683 = vmatpush1.xpose.msra.mxu0 0.0
    %684 = vmatprep.subr.mxu0 0.0
    %685 = vmatpush1.xpose.msra.mxu0 0.0
    %686 = vmatprep.subr.mxu0 0.0
    %687 = vmatpush1.xpose.msra.mxu0 0.0
    %688 = vmatprep.subr.mxu0 0.0
    %689 = vmatpush1.xpose.msra.mxu0 0.0
    %690 = vmatprep.subr.mxu0 0.0
    %691 = vmatpush1.xpose.msra.mxu0 %v660
    %692 = vmatprep.subr.mxu0 0.0
    %693 = vmatpush1.xpose.msra.mxu0 %v658
    %694 = vmatprep.subr.mxu0 0.0
    %695 = vmatpush2.xpose.msra.mxu0 0.0
    %696 = vmatprep.subr.mxu0 0.0
    %697 = vmatpush2.xpose.msra.mxu0 0.0
    %698 = vmatprep.subr.mxu0 0.0
    %699 = vmatpush2.xpose.msra.mxu0 0.0
    %700 = vmatprep.subr.mxu0 0.0
    %701 = vmatpush2.xpose.msra.mxu0 0.0
    %702 = vmatprep.subr.mxu0 0.0
    %703 = vmatpush2.xpose.msra.mxu0 0.0
    %704 = vmatprep.subr.mxu0 0.0
    %705 = vmatpush2.xpose.msra.mxu0 0.0
    %706 = vmatprep.subr.mxu0 0.0
    %707 = vmatpush2.xpose.msra.mxu0 0.0
    %708 = vmatprep.subr.mxu0 0.0
    %709 = vmatpush2.xpose.msra.mxu0 0.0
    %710 = vmatprep.subr.mxu0 0.0
    %711 = vmatpush2.xpose.msra.mxu0 0.0
    %712 = vmatprep.subr.mxu0 0.0
    %713 = vmatpush2.xpose.msra.mxu0 0.0
    %714 = vmatprep.subr.mxu0 0.0
    %715 = vmatpush2.xpose.msra.mxu0 0.0
    %716 = vmatprep.subr.mxu0 0.0
    %717 = vmatpush2.xpose.msra.mxu0 0.0
    %718 = vmatprep.subr.mxu0 0.0
    %719 = vmatpush2.xpose.msra.mxu0 0.0
    %720 = vmatprep.subr.mxu0 0.0
    %721 = vmatpush2.xpose.msra.mxu0 0.0
    %722 = vmatprep.subr.mxu0 0.0
    %723 = vmatpush2.xpose.msra.mxu0 0.0
    %724 = vmatprep.subr.mxu0 0.0
    %725 = vmatpush2.xpose.msra.mxu0 0.0
    %726 = vmatprep.mubr.f32.mxu0 0.0
    %727 = vmatmul.mubr.f32.gmra.mxu0 %v654
    %v728 = vpop.f32.mrf.mxu0
    %v729 = vadd.f32 %v136, %v728
    %v730 = vpop.f32.mrf.mxu0
    %731 = vmatprep.mubr.f32.mxu0 0.0
    %732 = vmatmul.mubr.f32.gmra.mxu0 %v656
    %v733 = vpop.f32.mrf.mxu0
    %v734 = vadd.f32 %v137, %v733
    %v735 = vpop.f32.mrf.mxu0
    %736 = vdwg.mxu0
    %v737 = vsel %vm542, %v729, -inf
    %738 = vmax.xlane.f32.xlu0 %v737
    %v739 = vpop.xlane.xlu0 %738
    %v740 = vsel %vm542, %v734, -inf
    %741 = vmax.xlane.f32.xlu0 %v740
    %v742 = vpop.xlane.xlu0 %741
    %v743 = vsub.f32 %v729, %v739
    %v744 = vsub.f32 %v734, %v742
    %v745 = vmul.f32 %v743, 1.442695
    %v746 = vpow.pop %v745
    %v747 = vmul.f32 %v744, 1.442695
    %v748 = vpow.pop %v747
    %v749 = vsel %vm542, %v746, 0.0
    %750 = vadd.xlane.f32.xlu0 %v749
    %v751 = vpop.xlane.xlu0 %750
    %v752 = vsel %vm542, %v748, 0.0
    %753 = vadd.xlane.f32.xlu0 %v752
    %v754 = vpop.xlane.xlu0 %753
    %v755 = vrcp.pop %v751
    %v756 = vrcp.pop %v754
    %v757 = vmul.f32 %v746, %v755
    %v758 = vmul.f32 %v748, %v756
    %761 = vrot.lane.b32.xlu0 %v442, 120
    %v762 = vpop.permute.xlu0 %761
    %763 = vrot.lane.b32.xlu0 %v447, 120
    %v764 = vpop.permute.xlu0 %763
    %v768 = vsel %vm542, %v757, 0
    %v771 = vsel %vm542, %v758, 0
    %773 = vmatprep.subr.mxu0 0.0
    %774 = vmatpush1.msra.mxu0 0.0
    %775 = vmatprep.subr.mxu0 0.0
    %776 = vmatpush1.msra.mxu0 0.0
    %777 = vmatprep.subr.mxu0 0.0
    %778 = vmatpush1.msra.mxu0 0.0
    %779 = vmatprep.subr.mxu0 0.0
    %780 = vmatpush1.msra.mxu0 0.0
    %781 = vmatprep.subr.mxu0 0.0
    %782 = vmatpush1.msra.mxu0 0.0
    %783 = vmatprep.subr.mxu0 0.0
    %784 = vmatpush1.msra.mxu0 0.0
    %785 = vmatprep.subr.mxu0 0.0
    %786 = vmatpush1.msra.mxu0 0.0
    %787 = vmatprep.subr.mxu0 0.0
    %788 = vmatpush1.msra.mxu0 0.0
    %789 = vmatprep.subr.mxu0 0.0
    %790 = vmatpush1.msra.mxu0 0.0
    %791 = vmatprep.subr.mxu0 0.0
    %792 = vmatpush1.msra.mxu0 0.0
    %793 = vmatprep.subr.mxu0 0.0
    %794 = vmatpush1.msra.mxu0 0.0
    %795 = vmatprep.subr.mxu0 0.0
    %796 = vmatpush1.msra.mxu0 0.0
    %797 = vmatprep.subr.mxu0 0.0
    %798 = vmatpush1.msra.mxu0 0.0
    %799 = vmatprep.subr.mxu0 0.0
    %800 = vmatpush1.msra.mxu0 0.0
    %801 = vmatprep.subr.mxu0 0.0
    %802 = vmatpush1.msra.mxu0 %v764
    %803 = vmatprep.subr.mxu0 0.0
    %804 = vmatpush1.msra.mxu0 %v762
    %805 = vmatprep.subr.mxu0 0.0
    %806 = vmatpush2.msra.mxu0 0.0
    %807 = vmatprep.subr.mxu0 0.0
    %808 = vmatpush2.msra.mxu0 0.0
    %809 = vmatprep.subr.mxu0 0.0
    %810 = vmatpush2.msra.mxu0 0.0
    %811 = vmatprep.subr.mxu0 0.0
    %812 = vmatpush2.msra.mxu0 0.0
    %813 = vmatprep.subr.mxu0 0.0
    %814 = vmatpush2.msra.mxu0 0.0
    %815 = vmatprep.subr.mxu0 0.0
    %816 = vmatpush2.msra.mxu0 0.0
    %817 = vmatprep.subr.mxu0 0.0
    %818 = vmatpush2.msra.mxu0 0.0
    %819 = vmatprep.subr.mxu0 0.0
    %820 = vmatpush2.msra.mxu0 0.0
    %821 = vmatprep.subr.mxu0 0.0
    %822 = vmatpush2.msra.mxu0 0.0
    %823 = vmatprep.subr.mxu0 0.0
    %824 = vmatpush2.msra.mxu0 0.0
    %825 = vmatprep.subr.mxu0 0.0
    %826 = vmatpush2.msra.mxu0 0.0
    %827 = vmatprep.subr.mxu0 0.0
    %828 = vmatpush2.msra.mxu0 0.0
    %829 = vmatprep.subr.mxu0 0.0
    %830 = vmatpush2.msra.mxu0 0.0
    %831 = vmatprep.subr.mxu0 0.0
    %832 = vmatpush2.msra.mxu0 0.0
    %833 = vmatprep.subr.mxu0 0.0
    %834 = vmatpush2.msra.mxu0 0.0
    %835 = vmatprep.subr.mxu0 0.0
    %836 = vmatpush2.msra.mxu0 0.0
    %837 = vmatprep.mubr.f32.mxu0 0.0
    %838 = vmatmul.mubr.f32.gmra.mxu0 %v768
    %v839 = vpop.f32.mrf.mxu0
    %v840 = vadd.f32 0.0, %v839
    %v841 = vpop.f32.mrf.mxu0
    %842 = vmatprep.mubr.f32.mxu0 0.0
    %843 = vmatmul.mubr.f32.gmra.mxu0 %v771
    %v844 = vpop.f32.mrf.mxu0
    %v845 = vadd.f32 0.0, %v844
    %v846 = vpop.f32.mrf.mxu0
    %847 = vdwg.mxu0
    %v849 = vsel %vm454, %v840, 0
    %v852 = vsel %vm454, %v845, 0
    %854 = vmatprep.subr.mxu0 0.0
    %855 = vmatpush1.msra.mxu0 0.0
    %856 = vmatprep.subr.mxu0 0.0
    %857 = vmatpush1.msra.mxu0 0.0
    %858 = vmatprep.subr.mxu0 0.0
    %859 = vmatpush1.msra.mxu0 0.0
    %860 = vmatprep.subr.mxu0 0.0
    %861 = vmatpush1.msra.mxu0 0.0
    %862 = vmatprep.subr.mxu0 0.0
    %863 = vmatpush1.msra.mxu0 0.0
    %864 = vmatprep.subr.mxu0 0.0
    %865 = vmatpush1.msra.mxu0 0.0
    %866 = vmatprep.subr.mxu0 0.0
    %867 = vmatpush1.msra.mxu0 0.0
    %868 = vmatprep.subr.mxu0 0.0
    %869 = vmatpush1.msra.mxu0 0.0
    %870 = vmatprep.subr.mxu0 0.0
    %871 = vmatpush1.msra.mxu0 0.0
    %872 = vmatprep.subr.mxu0 0.0
    %873 = vmatpush1.msra.mxu0 0.0
    %874 = vmatprep.subr.mxu0 0.0
    %875 = vmatpush1.msra.mxu0 0.0
    %876 = vmatprep.subr.mxu0 0.0
    %877 = vmatpush1.msra.mxu0 0.0
    %878 = vmatprep.subr.mxu0 0.0
    %879 = vmatpush1.msra.mxu0 0.0
    %880 = vmatprep.subr.mxu0 0.0
    %881 = vmatpush1.msra.mxu0 0.0
    %882 = vmatprep.subr.mxu0 0.0
    %883 = vmatpush1.msra.mxu0 0.0
    %884 = vmatprep.subr.mxu0 0.0
    %885 = vmatpush1.msra.mxu0 %v451
    %886 = vmatprep.subr.mxu0 0.0
    %887 = vmatpush2.msra.mxu0 0.0
    %888 = vmatprep.subr.mxu0 0.0
    %889 = vmatpush2.msra.mxu0 0.0
    %890 = vmatprep.subr.mxu0 0.0
    %891 = vmatpush2.msra.mxu0 0.0
    %892 = vmatprep.subr.mxu0 0.0
    %893 = vmatpush2.msra.mxu0 0.0
    %894 = vmatprep.subr.mxu0 0.0
    %895 = vmatpush2.msra.mxu0 0.0
    %896 = vmatprep.subr.mxu0 0.0
    %897 = vmatpush2.msra.mxu0 0.0
    %898 = vmatprep.subr.mxu0 0.0
    %899 = vmatpush2.msra.mxu0 0.0
    %900 = vmatprep.subr.mxu0 0.0
    %901 = vmatpush2.msra.mxu0 0.0
    %902 = vmatprep.subr.mxu0 0.0
    %903 = vmatpush2.msra.mxu0 0.0
    %904 = vmatprep.subr.mxu0 0.0
    %905 = vmatpush2.msra.mxu0 0.0
    %906 = vmatprep.subr.mxu0 0.0
    %907 = vmatpush2.msra.mxu0 0.0
    %908 = vmatprep.subr.mxu0 0.0
    %909 = vmatpush2.msra.mxu0 0.0
    %910 = vmatprep.subr.mxu0 0.0
    %911 = vmatpush2.msra.mxu0 0.0
    %912 = vmatprep.subr.mxu0 0.0
    %913 = vmatpush2.msra.mxu0 0.0
    %914 = vmatprep.subr.mxu0 0.0
    %915 = vmatpush2.msra.mxu0 0.0
    %916 = vmatprep.subr.mxu0 0.0
    %917 = vmatpush2.msra.mxu0 0.0
    %918 = vmatprep.mubr.f32.mxu0 0.0
    %919 = vmatmul.mubr.f32.gmra.mxu0 %v849
    %v920 = vpop.f32.mrf.mxu0
    %v921 = vadd.f32 0.0, %v920
    %v922 = vpop.f32.mrf.mxu0
    %923 = vmatprep.mubr.f32.mxu0 0.0
    %924 = vmatmul.mubr.f32.gmra.mxu0 %v852
    %v925 = vpop.f32.mrf.mxu0
    %v926 = vadd.f32 0.0, %v925
    %v927 = vpop.f32.mrf.mxu0
    %928 = vdwg.mxu0
    %v930 = vsel %vm454, %v638, 0
    %v933 = vsel %vm454, %v643, 0
    %935 = vmatprep.subr.mxu0 0.0
    %936 = vmatpush1.msra.mxu0 0.0
    %937 = vmatprep.subr.mxu0 0.0
    %938 = vmatpush1.msra.mxu0 0.0
    %939 = vmatprep.subr.mxu0 0.0
    %940 = vmatpush1.msra.mxu0 0.0
    %941 = vmatprep.subr.mxu0 0.0
    %942 = vmatpush1.msra.mxu0 0.0
    %943 = vmatprep.subr.mxu0 0.0
    %944 = vmatpush1.msra.mxu0 0.0
    %945 = vmatprep.subr.mxu0 0.0
    %946 = vmatpush1.msra.mxu0 0.0
    %947 = vmatprep.subr.mxu0 0.0
    %948 = vmatpush1.msra.mxu0 0.0
    %949 = vmatprep.subr.mxu0 0.0
    %950 = vmatpush1.msra.mxu0 0.0
    %951 = vmatprep.subr.mxu0 0.0
    %952 = vmatpush1.msra.mxu0 0.0
    %953 = vmatprep.subr.mxu0 0.0
    %954 = vmatpush1.msra.mxu0 0.0
    %955 = vmatprep.subr.mxu0 0.0
    %956 = vmatpush1.msra.mxu0 0.0
    %957 = vmatprep.subr.mxu0 0.0
    %958 = vmatpush1.msra.mxu0 0.0
    %959 = vmatprep.subr.mxu0 0.0
    %960 = vmatpush1.msra.mxu0 0.0
    %961 = vmatprep.subr.mxu0 0.0
    %962 = vmatpush1.msra.mxu0 0.0
    %963 = vmatprep.subr.mxu0 0.0
    %964 = vmatpush1.msra.mxu0 0.0
    %965 = vmatprep.subr.mxu0 0.0
    %966 = vmatpush1.msra.mxu0 %v450
    %967 = vmatprep.subr.mxu0 0.0
    %968 = vmatpush2.msra.mxu0 0.0
    %969 = vmatprep.subr.mxu0 0.0
    %970 = vmatpush2.msra.mxu0 0.0
    %971 = vmatprep.subr.mxu0 0.0
    %972 = vmatpush2.msra.mxu0 0.0
    %973 = vmatprep.subr.mxu0 0.0
    %974 = vmatpush2.msra.mxu0 0.0
    %975 = vmatprep.subr.mxu0 0.0
    %976 = vmatpush2.msra.mxu0 0.0
    %977 = vmatprep.subr.mxu0 0.0
    %978 = vmatpush2.msra.mxu0 0.0
    %979 = vmatprep.subr.mxu0 0.0
    %980 = vmatpush2.msra.mxu0 0.0
    %981 = vmatprep.subr.mxu0 0.0
    %982 = vmatpush2.msra.mxu0 0.0
    %983 = vmatprep.subr.mxu0 0.0
    %984 = vmatpush2.msra.mxu0 0.0
    %985 = vmatprep.subr.mxu0 0.0
    %986 = vmatpush2.msra.mxu0 0.0
    %987 = vmatprep.subr.mxu0 0.0
    %988 = vmatpush2.msra.mxu0 0.0
    %989 = vmatprep.subr.mxu0 0.0
    %990 = vmatpush2.msra.mxu0 0.0
    %991 = vmatprep.subr.mxu0 0.0
    %992 = vmatpush2.msra.mxu0 0.0
    %993 = vmatprep.subr.mxu0 0.0
    %994 = vmatpush2.msra.mxu0 0.0
    %995 = vmatprep.subr.mxu0 0.0
    %996 = vmatpush2.msra.mxu0 0.0
    %997 = vmatprep.subr.mxu0 0.0
    %998 = vmatpush2.msra.mxu0 0.0
    %999 = vmatprep.mubr.f32.mxu0 0.0
    %1000 = vmatmul.mubr.f32.gmra.mxu0 %v930
    %v1001 = vpop.f32.mrf.mxu0
    %v1002 = vadd.f32 %v921, %v1001
    %v1003 = vpop.f32.mrf.mxu0
    %1004 = vmatprep.mubr.f32.mxu0 0.0
    %1005 = vmatmul.mubr.f32.gmra.mxu0 %v933
    %v1006 = vpop.f32.mrf.mxu0
    %v1007 = vadd.f32 %v926, %v1006
    %v1008 = vpop.f32.mrf.mxu0
    %1009 = vdwg.mxu0
    %1010 = vrot.lane.b32.xlu0 %v276, 112
    %v1011 = vpop.permute.xlu0 %1010
    %1012 = vrot.lane.b32.xlu0 %v277, 112
    %v1013 = vpop.permute.xlu0 %1012
    %1014 = vrot.lane.b32.xlu0 %v356, 112
    %v1015 = vpop.permute.xlu0 %1014
    %1016 = vrot.lane.b32.xlu0 %v361, 112
    %v1017 = vpop.permute.xlu0 %1016
    %v1018 = vsel %vm454, %v1011, 0
    %v1020 = vsel %vm454, %v1013, 0
    %v1022 = vsel %vm454, %v1015, 0
    %v1024 = vsel %vm454, %v1017, 0
    %1026 = vmatprep.subr.mxu0 0.0
    %1027 = vmatpush1.xpose.msra.mxu0 0.0
    %1028 = vmatprep.subr.mxu0 0.0
    %1029 = vmatpush1.xpose.msra.mxu0 0.0
    %1030 = vmatprep.subr.mxu0 0.0
    %1031 = vmatpush1.xpose.msra.mxu0 0.0
    %1032 = vmatprep.subr.mxu0 0.0
    %1033 = vmatpush1.xpose.msra.mxu0 0.0
    %1034 = vmatprep.subr.mxu0 0.0
    %1035 = vmatpush1.xpose.msra.mxu0 0.0
    %1036 = vmatprep.subr.mxu0 0.0
    %1037 = vmatpush1.xpose.msra.mxu0 0.0
    %1038 = vmatprep.subr.mxu0 0.0
    %1039 = vmatpush1.xpose.msra.mxu0 0.0
    %1040 = vmatprep.subr.mxu0 0.0
    %1041 = vmatpush1.xpose.msra.mxu0 0.0
    %1042 = vmatprep.subr.mxu0 0.0
    %1043 = vmatpush1.xpose.msra.mxu0 0.0
    %1044 = vmatprep.subr.mxu0 0.0
    %1045 = vmatpush1.xpose.msra.mxu0 0.0
    %1046 = vmatprep.subr.mxu0 0.0
    %1047 = vmatpush1.xpose.msra.mxu0 0.0
    %1048 = vmatprep.subr.mxu0 0.0
    %1049 = vmatpush1.xpose.msra.mxu0 0.0
    %1050 = vmatprep.subr.mxu0 0.0
    %1051 = vmatpush1.xpose.msra.mxu0 0.0
    %1052 = vmatprep.subr.mxu0 0.0
    %1053 = vmatpush1.xpose.msra.mxu0 0.0
    %1054 = vmatprep.subr.mxu0 0.0
    %1055 = vmatpush1.xpose.msra.mxu0 %v1024
    %1056 = vmatprep.subr.mxu0 0.0
    %1057 = vmatpush1.xpose.msra.mxu0 %v1022
    %1058 = vmatprep.subr.mxu0 0.0
    %1059 = vmatpush2.xpose.msra.mxu0 0.0
    %1060 = vmatprep.subr.mxu0 0.0
    %1061 = vmatpush2.xpose.msra.mxu0 0.0
    %1062 = vmatprep.subr.mxu0 0.0
    %1063 = vmatpush2.xpose.msra.mxu0 0.0
    %1064 = vmatprep.subr.mxu0 0.0
    %1065 = vmatpush2.xpose.msra.mxu0 0.0
    %1066 = vmatprep.subr.mxu0 0.0
    %1067 = vmatpush2.xpose.msra.mxu0 0.0
    %1068 = vmatprep.subr.mxu0 0.0
    %1069 = vmatpush2.xpose.msra.mxu0 0.0
    %1070 = vmatprep.subr.mxu0 0.0
    %1071 = vmatpush2.xpose.msra.mxu0 0.0
    %1072 = vmatprep.subr.mxu0 0.0
    %1073 = vmatpush2.xpose.msra.mxu0 0.0
    %1074 = vmatprep.subr.mxu0 0.0
    %1075 = vmatpush2.xpose.msra.mxu0 0.0
    %1076 = vmatprep.subr.mxu0 0.0
    %1077 = vmatpush2.xpose.msra.mxu0 0.0
    %1078 = vmatprep.subr.mxu0 0.0
    %1079 = vmatpush2.xpose.msra.mxu0 0.0
    %1080 = vmatprep.subr.mxu0 0.0
    %1081 = vmatpush2.xpose.msra.mxu0 0.0
    %1082 = vmatprep.subr.mxu0 0.0
    %1083 = vmatpush2.xpose.msra.mxu0 0.0
    %1084 = vmatprep.subr.mxu0 0.0
    %1085 = vmatpush2.xpose.msra.mxu0 0.0
    %1086 = vmatprep.subr.mxu0 0.0
    %1087 = vmatpush2.xpose.msra.mxu0 0.0
    %1088 = vmatprep.subr.mxu0 0.0
    %1089 = vmatpush2.xpose.msra.mxu0 0.0
    %1090 = vmatprep.mubr.f32.mxu0 0.0
    %1091 = vmatmul.mubr.f32.gmra.mxu0 %v1018
    %v1092 = vpop.f32.mrf.mxu0
    %v1093 = vadd.f32 %v136, %v1092
    %v1094 = vpop.f32.mrf.mxu0
    %1095 = vmatprep.mubr.f32.mxu0 0.0
    %1096 = vmatmul.mubr.f32.gmra.mxu0 %v1020
    %v1097 = vpop.f32.mrf.mxu0
    %v1098 = vadd.f32 %v137, %v1097
    %v1099 = vpop.f32.mrf.mxu0
    %1100 = vdwg.mxu0
    %v1101 = vsel %vm542, %v1093, -inf
    %1102 = vmax.xlane.f32.xlu0 %v1101
    %v1103 = vpop.xlane.xlu0 %1102
    %v1104 = vsel %vm542, %v1098, -inf
    %1105 = vmax.xlane.f32.xlu0 %v1104
    %v1106 = vpop.xlane.xlu0 %1105
    %v1107 = vsub.f32 %v1093, %v1103
    %v1108 = vsub.f32 %v1098, %v1106
    %v1109 = vmul.f32 %v1107, 1.442695
    %v1110 = vpow.pop %v1109
    %v1111 = vmul.f32 %v1108, 1.442695
    %v1112 = vpow.pop %v1111
    %v1113 = vsel %vm542, %v1110, 0.0
    %1114 = vadd.xlane.f32.xlu0 %v1113
    %v1115 = vpop.xlane.xlu0 %1114
    %v1116 = vsel %vm542, %v1112, 0.0
    %1117 = vadd.xlane.f32.xlu0 %v1116
    %v1118 = vpop.xlane.xlu0 %1117
    %v1119 = vrcp.pop %v1115
    %v1120 = vrcp.pop %v1118
    %v1121 = vmul.f32 %v1110, %v1119
    %v1122 = vmul.f32 %v1112, %v1120
    %1123 = vrot.lane.b32.xlu0 %v442, 112
    %v1124 = vpop.permute.xlu0 %1123
    %1125 = vrot.lane.b32.xlu0 %v447, 112
    %v1126 = vpop.permute.xlu0 %1125
    %v1130 = vsel %vm542, %v1121, 0
    %v1133 = vsel %vm542, %v1122, 0
    %1135 = vmatprep.subr.mxu0 0.0
    %1136 = vmatpush1.msra.mxu0 0.0
    %1137 = vmatprep.subr.mxu0 0.0
    %1138 = vmatpush1.msra.mxu0 0.0
    %1139 = vmatprep.subr.mxu0 0.0
    %1140 = vmatpush1.msra.mxu0 0.0
    %1141 = vmatprep.subr.mxu0 0.0
    %1142 = vmatpush1.msra.mxu0 0.0
    %1143 = vmatprep.subr.mxu0 0.0
    %1144 = vmatpush1.msra.mxu0 0.0
    %1145 = vmatprep.subr.mxu0 0.0
    %1146 = vmatpush1.msra.mxu0 0.0
    %1147 = vmatprep.subr.mxu0 0.0
    %1148 = vmatpush1.msra.mxu0 0.0
    %1149 = vmatprep.subr.mxu0 0.0
    %1150 = vmatpush1.msra.mxu0 0.0
    %1151 = vmatprep.subr.mxu0 0.0
    %1152 = vmatpush1.msra.mxu0 0.0
    %1153 = vmatprep.subr.mxu0 0.0
    %1154 = vmatpush1.msra.mxu0 0.0
    %1155 = vmatprep.subr.mxu0 0.0
    %1156 = vmatpush1.msra.mxu0 0.0
    %1157 = vmatprep.subr.mxu0 0.0
    %1158 = vmatpush1.msra.mxu0 0.0
    %1159 = vmatprep.subr.mxu0 0.0
    %1160 = vmatpush1.msra.mxu0 0.0
    %1161 = vmatprep.subr.mxu0 0.0
    %1162 = vmatpush1.msra.mxu0 0.0
    %1163 = vmatprep.subr.mxu0 0.0
    %1164 = vmatpush1.msra.mxu0 %v1126
    %1165 = vmatprep.subr.mxu0 0.0
    %1166 = vmatpush1.msra.mxu0 %v1124
    %1167 = vmatprep.subr.mxu0 0.0
    %1168 = vmatpush2.msra.mxu0 0.0
    %1169 = vmatprep.subr.mxu0 0.0
    %1170 = vmatpush2.msra.mxu0 0.0
    %1171 = vmatprep.subr.mxu0 0.0
    %1172 = vmatpush2.msra.mxu0 0.0
    %1173 = vmatprep.subr.mxu0 0.0
    %1174 = vmatpush2.msra.mxu0 0.0
    %1175 = vmatprep.subr.mxu0 0.0
    %1176 = vmatpush2.msra.mxu0 0.0
    %1177 = vmatprep.subr.mxu0 0.0
    %1178 = vmatpush2.msra.mxu0 0.0
    %1179 = vmatprep.subr.mxu0 0.0
    %1180 = vmatpush2.msra.mxu0 0.0
    %1181 = vmatprep.subr.mxu0 0.0
    %1182 = vmatpush2.msra.mxu0 0.0
    %1183 = vmatprep.subr.mxu0 0.0
    %1184 = vmatpush2.msra.mxu0 0.0
    %1185 = vmatprep.subr.mxu0 0.0
    %1186 = vmatpush2.msra.mxu0 0.0
    %1187 = vmatprep.subr.mxu0 0.0
    %1188 = vmatpush2.msra.mxu0 0.0
    %1189 = vmatprep.subr.mxu0 0.0
    %1190 = vmatpush2.msra.mxu0 0.0
    %1191 = vmatprep.subr.mxu0 0.0
    %1192 = vmatpush2.msra.mxu0 0.0
    %1193 = vmatprep.subr.mxu0 0.0
    %1194 = vmatpush2.msra.mxu0 0.0
    %1195 = vmatprep.subr.mxu0 0.0
    %1196 = vmatpush2.msra.mxu0 0.0
    %1197 = vmatprep.subr.mxu0 0.0
    %1198 = vmatpush2.msra.mxu0 0.0
    %1199 = vmatprep.mubr.f32.mxu0 0.0
    %1200 = vmatmul.mubr.f32.gmra.mxu0 %v1130
    %v1201 = vpop.f32.mrf.mxu0
    %v1202 = vadd.f32 0.0, %v1201
    %v1203 = vpop.f32.mrf.mxu0
    %1204 = vmatprep.mubr.f32.mxu0 0.0
    %1205 = vmatmul.mubr.f32.gmra.mxu0 %v1133
    %v1206 = vpop.f32.mrf.mxu0
    %v1207 = vadd.f32 0.0, %v1206
    %v1208 = vpop.f32.mrf.mxu0
    %1209 = vdwg.mxu0
    %v1211 = vsel %vm454, %v1202, 0
    %v1214 = vsel %vm454, %v1207, 0
    %1216 = vmatprep.subr.mxu0 0.0
    %1217 = vmatpush1.msra.mxu0 0.0
    %1218 = vmatprep.subr.mxu0 0.0
    %1219 = vmatpush1.msra.mxu0 0.0
    %1220 = vmatprep.subr.mxu0 0.0
    %1221 = vmatpush1.msra.mxu0 0.0
    %1222 = vmatprep.subr.mxu0 0.0
    %1223 = vmatpush1.msra.mxu0 0.0
    %1224 = vmatprep.subr.mxu0 0.0
    %1225 = vmatpush1.msra.mxu0 0.0
    %1226 = vmatprep.subr.mxu0 0.0
    %1227 = vmatpush1.msra.mxu0 0.0
    %1228 = vmatprep.subr.mxu0 0.0
    %1229 = vmatpush1.msra.mxu0 0.0
    %1230 = vmatprep.subr.mxu0 0.0
    %1231 = vmatpush1.msra.mxu0 0.0
    %1232 = vmatprep.subr.mxu0 0.0
    %1233 = vmatpush1.msra.mxu0 0.0
    %1234 = vmatprep.subr.mxu0 0.0
    %1235 = vmatpush1.msra.mxu0 0.0
    %1236 = vmatprep.subr.mxu0 0.0
    %1237 = vmatpush1.msra.mxu0 0.0
    %1238 = vmatprep.subr.mxu0 0.0
    %1239 = vmatpush1.msra.mxu0 0.0
    %1240 = vmatprep.subr.mxu0 0.0
    %1241 = vmatpush1.msra.mxu0 0.0
    %1242 = vmatprep.subr.mxu0 0.0
    %1243 = vmatpush1.msra.mxu0 0.0
    %1244 = vmatprep.subr.mxu0 0.0
    %1245 = vmatpush1.msra.mxu0 0.0
    %1246 = vmatprep.subr.mxu0 0.0
    %1247 = vmatpush1.msra.mxu0 %v452
    %1248 = vmatprep.subr.mxu0 0.0
    %1249 = vmatpush2.msra.mxu0 0.0
    %1250 = vmatprep.subr.mxu0 0.0
    %1251 = vmatpush2.msra.mxu0 0.0
    %1252 = vmatprep.subr.mxu0 0.0
    %1253 = vmatpush2.msra.mxu0 0.0
    %1254 = vmatprep.subr.mxu0 0.0
    %1255 = vmatpush2.msra.mxu0 0.0
    %1256 = vmatprep.subr.mxu0 0.0
    %1257 = vmatpush2.msra.mxu0 0.0
    %1258 = vmatprep.subr.mxu0 0.0
    %1259 = vmatpush2.msra.mxu0 0.0
    %1260 = vmatprep.subr.mxu0 0.0
    %1261 = vmatpush2.msra.mxu0 0.0
    %1262 = vmatprep.subr.mxu0 0.0
    %1263 = vmatpush2.msra.mxu0 0.0
    %1264 = vmatprep.subr.mxu0 0.0
    %1265 = vmatpush2.msra.mxu0 0.0
    %1266 = vmatprep.subr.mxu0 0.0
    %1267 = vmatpush2.msra.mxu0 0.0
    %1268 = vmatprep.subr.mxu0 0.0
    %1269 = vmatpush2.msra.mxu0 0.0
    %1270 = vmatprep.subr.mxu0 0.0
    %1271 = vmatpush2.msra.mxu0 0.0
    %1272 = vmatprep.subr.mxu0 0.0
    %1273 = vmatpush2.msra.mxu0 0.0
    %1274 = vmatprep.subr.mxu0 0.0
    %1275 = vmatpush2.msra.mxu0 0.0
    %1276 = vmatprep.subr.mxu0 0.0
    %1277 = vmatpush2.msra.mxu0 0.0
    %1278 = vmatprep.subr.mxu0 0.0
    %1279 = vmatpush2.msra.mxu0 0.0
    %1280 = vmatprep.mubr.f32.mxu0 0.0
    %1281 = vmatmul.mubr.f32.gmra.mxu0 %v1211
    %v1282 = vpop.f32.mrf.mxu0
    %v1283 = vadd.f32 0.0, %v1282
    %v1284 = vpop.f32.mrf.mxu0
    %1285 = vmatprep.mubr.f32.mxu0 0.0
    %1286 = vmatmul.mubr.f32.gmra.mxu0 %v1214
    %v1287 = vpop.f32.mrf.mxu0
    %v1288 = vadd.f32 0.0, %v1287
    %v1289 = vpop.f32.mrf.mxu0
    %1290 = vdwg.mxu0
    %v1291 = vadd.f32 %v1002, %v1283
    %v1292 = vadd.f32 %v1007, %v1288
    %1293 = vrot.lane.b32.xlu0 %v276, 104
    %v1294 = vpop.permute.xlu0 %1293
    %1295 = vrot.lane.b32.xlu0 %v277, 104
    %v1296 = vpop.permute.xlu0 %1295
    %1297 = vrot.lane.b32.xlu0 %v356, 104
    %v1298 = vpop.permute.xlu0 %1297
    %1299 = vrot.lane.b32.xlu0 %v361, 104
    %v1300 = vpop.permute.xlu0 %1299
    %v1301 = vsel %vm454, %v1294, 0
    %v1303 = vsel %vm454, %v1296, 0
    %v1305 = vsel %vm454, %v1298, 0
    %v1307 = vsel %vm454, %v1300, 0
    %1309 = vmatprep.subr.mxu0 0.0
    %1310 = vmatpush1.xpose.msra.mxu0 0.0
    %1311 = vmatprep.subr.mxu0 0.0
    %1312 = vmatpush1.xpose.msra.mxu0 0.0
    %1313 = vmatprep.subr.mxu0 0.0
    %1314 = vmatpush1.xpose.msra.mxu0 0.0
    %1315 = vmatprep.subr.mxu0 0.0
    %1316 = vmatpush1.xpose.msra.mxu0 0.0
    %1317 = vmatprep.subr.mxu0 0.0
    %1318 = vmatpush1.xpose.msra.mxu0 0.0
    %1319 = vmatprep.subr.mxu0 0.0
    %1320 = vmatpush1.xpose.msra.mxu0 0.0
    %1321 = vmatprep.subr.mxu0 0.0
    %1322 = vmatpush1.xpose.msra.mxu0 0.0
    %1323 = vmatprep.subr.mxu0 0.0
    %1324 = vmatpush1.xpose.msra.mxu0 0.0
    %1325 = vmatprep.subr.mxu0 0.0
    %1326 = vmatpush1.xpose.msra.mxu0 0.0
    %1327 = vmatprep.subr.mxu0 0.0
    %1328 = vmatpush1.xpose.msra.mxu0 0.0
    %1329 = vmatprep.subr.mxu0 0.0
    %1330 = vmatpush1.xpose.msra.mxu0 0.0
    %1331 = vmatprep.subr.mxu0 0.0
    %1332 = vmatpush1.xpose.msra.mxu0 0.0
    %1333 = vmatprep.subr.mxu0 0.0
    %1334 = vmatpush1.xpose.msra.mxu0 0.0
    %1335 = vmatprep.subr.mxu0 0.0
    %1336 = vmatpush1.xpose.msra.mxu0 0.0
    %1337 = vmatprep.subr.mxu0 0.0
    %1338 = vmatpush1.xpose.msra.mxu0 %v1307
    %1339 = vmatprep.subr.mxu0 0.0
    %1340 = vmatpush1.xpose.msra.mxu0 %v1305
    %1341 = vmatprep.subr.mxu0 0.0
    %1342 = vmatpush2.xpose.msra.mxu0 0.0
    %1343 = vmatprep.subr.mxu0 0.0
    %1344 = vmatpush2.xpose.msra.mxu0 0.0
    %1345 = vmatprep.subr.mxu0 0.0
    %1346 = vmatpush2.xpose.msra.mxu0 0.0
    %1347 = vmatprep.subr.mxu0 0.0
    %1348 = vmatpush2.xpose.msra.mxu0 0.0
    %1349 = vmatprep.subr.mxu0 0.0
    %1350 = vmatpush2.xpose.msra.mxu0 0.0
    %1351 = vmatprep.subr.mxu0 0.0
    %1352 = vmatpush2.xpose.msra.mxu0 0.0
    %1353 = vmatprep.subr.mxu0 0.0
    %1354 = vmatpush2.xpose.msra.mxu0 0.0
    %1355 = vmatprep.subr.mxu0 0.0
    %1356 = vmatpush2.xpose.msra.mxu0 0.0
    %1357 = vmatprep.subr.mxu0 0.0
    %1358 = vmatpush2.xpose.msra.mxu0 0.0
    %1359 = vmatprep.subr.mxu0 0.0
    %1360 = vmatpush2.xpose.msra.mxu0 0.0
    %1361 = vmatprep.subr.mxu0 0.0
    %1362 = vmatpush2.xpose.msra.mxu0 0.0
    %1363 = vmatprep.subr.mxu0 0.0
    %1364 = vmatpush2.xpose.msra.mxu0 0.0
    %1365 = vmatprep.subr.mxu0 0.0
    %1366 = vmatpush2.xpose.msra.mxu0 0.0
    %1367 = vmatprep.subr.mxu0 0.0
    %1368 = vmatpush2.xpose.msra.mxu0 0.0
    %1369 = vmatprep.subr.mxu0 0.0
    %1370 = vmatpush2.xpose.msra.mxu0 0.0
    %1371 = vmatprep.subr.mxu0 0.0
    %1372 = vmatpush2.xpose.msra.mxu0 0.0
    %1373 = vmatprep.mubr.f32.mxu0 0.0
    %1374 = vmatmul.mubr.f32.gmra.mxu0 %v1301
    %v1375 = vpop.f32.mrf.mxu0
    %v1376 = vadd.f32 %v136, %v1375
    %v1377 = vpop.f32.mrf.mxu0
    %1378 = vmatprep.mubr.f32.mxu0 0.0
    %1379 = vmatmul.mubr.f32.gmra.mxu0 %v1303
    %v1380 = vpop.f32.mrf.mxu0
    %v1381 = vadd.f32 %v137, %v1380
    %v1382 = vpop.f32.mrf.mxu0
    %1383 = vdwg.mxu0
    %v1384 = vsel %vm542, %v1376, -inf
    %1385 = vmax.xlane.f32.xlu0 %v1384
    %v1386 = vpop.xlane.xlu0 %1385
    %v1387 = vsel %vm542, %v1381, -inf
    %1388 = vmax.xlane.f32.xlu0 %v1387
    %v1389 = vpop.xlane.xlu0 %1388
    %v1390 = vsub.f32 %v1376, %v1386
    %v1391 = vsub.f32 %v1381, %v1389
    %v1392 = vmul.f32 %v1390, 1.442695
    %v1393 = vpow.pop %v1392
    %v1394 = vmul.f32 %v1391, 1.442695
    %v1395 = vpow.pop %v1394
    %v1396 = vsel %vm542, %v1393, 0.0
    %1397 = vadd.xlane.f32.xlu0 %v1396
    %v1398 = vpop.xlane.xlu0 %1397
    %v1399 = vsel %vm542, %v1395, 0.0
    %1400 = vadd.xlane.f32.xlu0 %v1399
    %v1401 = vpop.xlane.xlu0 %1400
    %v1402 = vrcp.pop %v1398
    %v1403 = vrcp.pop %v1401
    %v1404 = vmul.f32 %v1393, %v1402
    %v1405 = vmul.f32 %v1395, %v1403
    %1406 = vrot.lane.b32.xlu0 %v442, 104
    %v1407 = vpop.permute.xlu0 %1406
    %1408 = vrot.lane.b32.xlu0 %v447, 104
    %v1409 = vpop.permute.xlu0 %1408
    %v1413 = vsel %vm542, %v1404, 0
    %v1416 = vsel %vm542, %v1405, 0
    %1418 = vmatprep.subr.mxu0 0.0
    %1419 = vmatpush1.msra.mxu0 0.0
    %1420 = vmatprep.subr.mxu0 0.0
    %1421 = vmatpush1.msra.mxu0 0.0
    %1422 = vmatprep.subr.mxu0 0.0
    %1423 = vmatpush1.msra.mxu0 0.0
    %1424 = vmatprep.subr.mxu0 0.0
    %1425 = vmatpush1.msra.mxu0 0.0
    %1426 = vmatprep.subr.mxu0 0.0
    %1427 = vmatpush1.msra.mxu0 0.0
    %1428 = vmatprep.subr.mxu0 0.0
    %1429 = vmatpush1.msra.mxu0 0.0
    %1430 = vmatprep.subr.mxu0 0.0
    %1431 = vmatpush1.msra.mxu0 0.0
    %1432 = vmatprep.subr.mxu0 0.0
    %1433 = vmatpush1.msra.mxu0 0.0
    %1434 = vmatprep.subr.mxu0 0.0
    %1435 = vmatpush1.msra.mxu0 0.0
    %1436 = vmatprep.subr.mxu0 0.0
    %1437 = vmatpush1.msra.mxu0 0.0
    %1438 = vmatprep.subr.mxu0 0.0
    %1439 = vmatpush1.msra.mxu0 0.0
    %1440 = vmatprep.subr.mxu0 0.0
    %1441 = vmatpush1.msra.mxu0 0.0
    %1442 = vmatprep.subr.mxu0 0.0
    %1443 = vmatpush1.msra.mxu0 0.0
    %1444 = vmatprep.subr.mxu0 0.0
    %1445 = vmatpush1.msra.mxu0 0.0
    %1446 = vmatprep.subr.mxu0 0.0
    %1447 = vmatpush1.msra.mxu0 %v1409
    %1448 = vmatprep.subr.mxu0 0.0
    %1449 = vmatpush1.msra.mxu0 %v1407
    %1450 = vmatprep.subr.mxu0 0.0
    %1451 = vmatpush2.msra.mxu0 0.0
    %1452 = vmatprep.subr.mxu0 0.0
    %1453 = vmatpush2.msra.mxu0 0.0
    %1454 = vmatprep.subr.mxu0 0.0
    %1455 = vmatpush2.msra.mxu0 0.0
    %1456 = vmatprep.subr.mxu0 0.0
    %1457 = vmatpush2.msra.mxu0 0.0
    %1458 = vmatprep.subr.mxu0 0.0
    %1459 = vmatpush2.msra.mxu0 0.0
    %1460 = vmatprep.subr.mxu0 0.0
    %1461 = vmatpush2.msra.mxu0 0.0
    %1462 = vmatprep.subr.mxu0 0.0
    %1463 = vmatpush2.msra.mxu0 0.0
    %1464 = vmatprep.subr.mxu0 0.0
    %1465 = vmatpush2.msra.mxu0 0.0
    %1466 = vmatprep.subr.mxu0 0.0
    %1467 = vmatpush2.msra.mxu0 0.0
    %1468 = vmatprep.subr.mxu0 0.0
    %1469 = vmatpush2.msra.mxu0 0.0
    %1470 = vmatprep.subr.mxu0 0.0
    %1471 = vmatpush2.msra.mxu0 0.0
    %1472 = vmatprep.subr.mxu0 0.0
    %1473 = vmatpush2.msra.mxu0 0.0
    %1474 = vmatprep.subr.mxu0 0.0
    %1475 = vmatpush2.msra.mxu0 0.0
    %1476 = vmatprep.subr.mxu0 0.0
    %1477 = vmatpush2.msra.mxu0 0.0
    %1478 = vmatprep.subr.mxu0 0.0
    %1479 = vmatpush2.msra.mxu0 0.0
    %1480 = vmatprep.subr.mxu0 0.0
    %1481 = vmatpush2.msra.mxu0 0.0
    %1482 = vmatprep.mubr.f32.mxu0 0.0
    %1483 = vmatmul.mubr.f32.gmra.mxu0 %v1413
    %v1484 = vpop.f32.mrf.mxu0
    %v1485 = vadd.f32 0.0, %v1484
    %v1486 = vpop.f32.mrf.mxu0
    %1487 = vmatprep.mubr.f32.mxu0 0.0
    %1488 = vmatmul.mubr.f32.gmra.mxu0 %v1416
    %v1489 = vpop.f32.mrf.mxu0
    %v1490 = vadd.f32 0.0, %v1489
    %v1491 = vpop.f32.mrf.mxu0
    %1492 = vdwg.mxu0
    %v1494 = vsel %vm454, %v1485, 0
    %v1497 = vsel %vm454, %v1490, 0
    %1499 = vmatprep.subr.mxu0 0.0
    %1500 = vmatpush1.msra.mxu0 0.0
    %1501 = vmatprep.subr.mxu0 0.0
    %1502 = vmatpush1.msra.mxu0 0.0
    %1503 = vmatprep.subr.mxu0 0.0
    %1504 = vmatpush1.msra.mxu0 0.0
    %1505 = vmatprep.subr.mxu0 0.0
    %1506 = vmatpush1.msra.mxu0 0.0
    %1507 = vmatprep.subr.mxu0 0.0
    %1508 = vmatpush1.msra.mxu0 0.0
    %1509 = vmatprep.subr.mxu0 0.0
    %1510 = vmatpush1.msra.mxu0 0.0
    %1511 = vmatprep.subr.mxu0 0.0
    %1512 = vmatpush1.msra.mxu0 0.0
    %1513 = vmatprep.subr.mxu0 0.0
    %1514 = vmatpush1.msra.mxu0 0.0
    %1515 = vmatprep.subr.mxu0 0.0
    %1516 = vmatpush1.msra.mxu0 0.0
    %1517 = vmatprep.subr.mxu0 0.0
    %1518 = vmatpush1.msra.mxu0 0.0
    %1519 = vmatprep.subr.mxu0 0.0
    %1520 = vmatpush1.msra.mxu0 0.0
    %1521 = vmatprep.subr.mxu0 0.0
    %1522 = vmatpush1.msra.mxu0 0.0
    %1523 = vmatprep.subr.mxu0 0.0
    %1524 = vmatpush1.msra.mxu0 0.0
    %1525 = vmatprep.subr.mxu0 0.0
    %1526 = vmatpush1.msra.mxu0 0.0
    %1527 = vmatprep.subr.mxu0 0.0
    %1528 = vmatpush1.msra.mxu0 0.0
    %1529 = vmatprep.subr.mxu0 0.0
    %1530 = vmatpush1.msra.mxu0 %v453
    %1531 = vmatprep.subr.mxu0 0.0
    %1532 = vmatpush2.msra.mxu0 0.0
    %1533 = vmatprep.subr.mxu0 0.0
    %1534 = vmatpush2.msra.mxu0 0.0
    %1535 = vmatprep.subr.mxu0 0.0
    %1536 = vmatpush2.msra.mxu0 0.0
    %1537 = vmatprep.subr.mxu0 0.0
    %1538 = vmatpush2.msra.mxu0 0.0
    %1539 = vmatprep.subr.mxu0 0.0
    %1540 = vmatpush2.msra.mxu0 0.0
    %1541 = vmatprep.subr.mxu0 0.0
    %1542 = vmatpush2.msra.mxu0 0.0
    %1543 = vmatprep.subr.mxu0 0.0
    %1544 = vmatpush2.msra.mxu0 0.0
    %1545 = vmatprep.subr.mxu0 0.0
    %1546 = vmatpush2.msra.mxu0 0.0
    %1547 = vmatprep.subr.mxu0 0.0
    %1548 = vmatpush2.msra.mxu0 0.0
    %1549 = vmatprep.subr.mxu0 0.0
    %1550 = vmatpush2.msra.mxu0 0.0
    %1551 = vmatprep.subr.mxu0 0.0
    %1552 = vmatpush2.msra.mxu0 0.0
    %1553 = vmatprep.subr.mxu0 0.0
    %1554 = vmatpush2.msra.mxu0 0.0
    %1555 = vmatprep.subr.mxu0 0.0
    %1556 = vmatpush2.msra.mxu0 0.0
    %1557 = vmatprep.subr.mxu0 0.0
    %1558 = vmatpush2.msra.mxu0 0.0
    %1559 = vmatprep.subr.mxu0 0.0
    %1560 = vmatpush2.msra.mxu0 0.0
    %1561 = vmatprep.subr.mxu0 0.0
    %1562 = vmatpush2.msra.mxu0 0.0
    %1563 = vmatprep.mubr.f32.mxu0 0.0
    %1564 = vmatmul.mubr.f32.gmra.mxu0 %v1494
    %v1565 = vpop.f32.mrf.mxu0
    %v1566 = vadd.f32 0.0, %v1565
    %v1567 = vpop.f32.mrf.mxu0
    %1568 = vmatprep.mubr.f32.mxu0 0.0
    %1569 = vmatmul.mubr.f32.gmra.mxu0 %v1497
    %v1570 = vpop.f32.mrf.mxu0
    %v1571 = vadd.f32 0.0, %v1570
    %v1572 = vpop.f32.mrf.mxu0
    %1573 = vdwg.mxu0
    %v1574 = vadd.f32 %v1291, %v1566
    %v1575 = vadd.f32 %v1292, %v1571
    %v1576 = vadd.f32 %v134, %v1574
    %v1577 = vadd.f32 %v135, %v1575
    %v1578 = vld [vmem:[%s11] sm:$0x1]
    %v1580 = vlaneseq
    %v1581 = vshrl.u32 %v1580, 7
    %v1582 = vsub.s32 0, %v1581
    %v1583 = vrot.slane %v1578, %v1582
    %v1585 = vadd.f32 %v1576, %v1583
    %v1586 = vadd.f32 %v1577, %v1583
    %v1587 = vld [vmem:[%s12] sm:$0x1]
    %v1588 = vld [vmem:[%s13] sm:$0x1]
    %v1589 = vsel %vm140, %v1585, 0.0
    %1590 = vadd.xlane.f32.xlu0 %v1589
    %v1591 = vpop.xlane.xlu0 %1590
    %v1592 = vsel %vm140, %v1586, 0.0
    %1593 = vadd.xlane.f32.xlu0 %v1592
    %v1594 = vpop.xlane.xlu0 %1593
    %v1595 = vmul.f32 %v1591, %v147
    %v1596 = vmul.f32 %v1594, %v147
    %v1597 = vsub.f32 %v1585, %v1595
    %v1598 = vsub.f32 %v1586, %v1596
    %v1599 = vmul.f32 %v1597, %v1597
    %v1600 = vmul.f32 %v1598, %v1598
    %v1601 = vsel %vm140, %v1599, 0.0
    %1602 = vadd.xlane.f32.xlu0 %v1601
    %v1603 = vpop.xlane.xlu0 %1602
    %v1604 = vsel %vm140, %v1600, 0.0
    %1605 = vadd.xlane.f32.xlu0 %v1604
    %v1606 = vpop.xlane.xlu0 %1605
    %v1607 = vmul.f32 %v1603, %v147
    %v1608 = vmul.f32 %v1606, %v147
    %v1609 = vadd.f32 %v1607, 1e-06
    %v1610 = vadd.f32 %v1608, 1e-06
    %v1611 = vrsqrt.pop %v1609
    %v1612 = vrsqrt.pop %v1610
    %v1613 = vmul.f32 %v1597, %v1611
    %v1614 = vmul.f32 %v1598, %v1612
    %v1616 = vlaneseq
    %v1617 = vshrl.u32 %v1616, 7
    %v1618 = vsub.s32 0, %v1617
    %v1619 = vrot.slane %v1587, %v1618
    %v1621 = vmul.f32 %v1613, %v1619
    %v1622 = vmul.f32 %v1614, %v1619
    %v1624 = vlaneseq
    %v1625 = vshrl.u32 %v1624, 7
    %v1626 = vsub.s32 0, %v1625
    %v1627 = vrot.slane %v1588, %v1626
    %v1629 = vadd.f32 %v1621, %v1627
    %v1630 = vadd.f32 %v1622, %v1627
    %v1631 = vld [vmem:[#allocation10] sm:$0xff]
    %v1632 = vld [vmem:[#allocation10 + $0x8] sm:$0xff]
    %v1633 = vld [vmem:[#allocation10 + $0x10] sm:$0xff]
    %v1634 = vld [vmem:[#allocation10 + $0x18] sm:$0xff]
    %v1635 = vld [vmem:[%s15] sm:$0x1]
    %v1637 = vlaneseq
    %v1638 = vshrl.u32 %v1637, 7
    %v1639 = vsub.s32 0, %v1638
    %v1640 = vrot.slane %v1635, %v1639
    %v1643 = vsel %vm140, %v1629, 0
    %v1646 = vsel %vm140, %v1630, 0
    %1648 = vmatprep.subr.mxu0 0.0
    %1649 = vmatpush1.msra.mxu0 0.0
    %1650 = vmatprep.subr.mxu0 0.0
    %1651 = vmatpush1.msra.mxu0 0.0
    %1652 = vmatprep.subr.mxu0 0.0
    %1653 = vmatpush1.msra.mxu0 0.0
    %1654 = vmatprep.subr.mxu0 0.0
    %1655 = vmatpush1.msra.mxu0 0.0
    %1656 = vmatprep.subr.mxu0 0.0
    %1657 = vmatpush1.msra.mxu0 0.0
    %1658 = vmatprep.subr.mxu0 0.0
    %1659 = vmatpush1.msra.mxu0 0.0
    %1660 = vmatprep.subr.mxu0 0.0
    %1661 = vmatpush1.msra.mxu0 0.0
    %1662 = vmatprep.subr.mxu0 0.0
    %1663 = vmatpush1.msra.mxu0 0.0
    %1664 = vmatprep.subr.mxu0 0.0
    %1665 = vmatpush1.msra.mxu0 0.0
    %1666 = vmatprep.subr.mxu0 0.0
    %1667 = vmatpush1.msra.mxu0 0.0
    %1668 = vmatprep.subr.mxu0 0.0
    %1669 = vmatpush1.msra.mxu0 0.0
    %1670 = vmatprep.subr.mxu0 0.0
    %1671 = vmatpush1.msra.mxu0 0.0
    %1672 = vmatprep.subr.mxu0 0.0
    %1673 = vmatpush1.msra.mxu0 %v1634
    %1674 = vmatprep.subr.mxu0 0.0
    %1675 = vmatpush1.msra.mxu0 %v1633
    %1676 = vmatprep.subr.mxu0 0.0
    %1677 = vmatpush1.msra.mxu0 %v1632
    %1678 = vmatprep.subr.mxu0 0.0
    %1679 = vmatpush1.msra.mxu0 %v1631
    %1680 = vmatprep.subr.mxu0 0.0
    %1681 = vmatpush2.msra.mxu0 0.0
    %1682 = vmatprep.subr.mxu0 0.0
    %1683 = vmatpush2.msra.mxu0 0.0
    %1684 = vmatprep.subr.mxu0 0.0
    %1685 = vmatpush2.msra.mxu0 0.0
    %1686 = vmatprep.subr.mxu0 0.0
    %1687 = vmatpush2.msra.mxu0 0.0
    %1688 = vmatprep.subr.mxu0 0.0
    %1689 = vmatpush2.msra.mxu0 0.0
    %1690 = vmatprep.subr.mxu0 0.0
    %1691 = vmatpush2.msra.mxu0 0.0
    %1692 = vmatprep.subr.mxu0 0.0
    %1693 = vmatpush2.msra.mxu0 0.0
    %1694 = vmatprep.subr.mxu0 0.0
    %1695 = vmatpush2.msra.mxu0 0.0
    %1696 = vmatprep.subr.mxu0 0.0
    %1697 = vmatpush2.msra.mxu0 0.0
    %1698 = vmatprep.subr.mxu0 0.0
    %1699 = vmatpush2.msra.mxu0 0.0
    %1700 = vmatprep.subr.mxu0 0.0
    %1701 = vmatpush2.msra.mxu0 0.0
    %1702 = vmatprep.subr.mxu0 0.0
    %1703 = vmatpush2.msra.mxu0 0.0
    %1704 = vmatprep.subr.mxu0 0.0
    %1705 = vmatpush2.msra.mxu0 0.0
    %1706 = vmatprep.subr.mxu0 0.0
    %1707 = vmatpush2.msra.mxu0 0.0
    %1708 = vmatprep.subr.mxu0 0.0
    %1709 = vmatpush2.msra.mxu0 0.0
    %1710 = vmatprep.subr.mxu0 0.0
    %1711 = vmatpush2.msra.mxu0 0.0
    %1712 = vmatprep.mubr.f32.mxu0 0.0
    %1713 = vmatmul.mubr.f32.gmra.mxu0 %v1643
    %v1714 = vpop.f32.mrf.mxu0
    %v1715 = vadd.f32 %v1640, %v1714
    %v1716 = vpop.f32.mrf.mxu0
    %1717 = vmatprep.mubr.f32.mxu0 0.0
    %1718 = vmatmul.mubr.f32.gmra.mxu0 %v1646
    %v1719 = vpop.f32.mrf.mxu0
    %v1720 = vadd.f32 %v1640, %v1719
    %v1721 = vpop.f32.mrf.mxu0
    %1722 = vdwg.mxu0
    %v1723 = vmax.f32 %v1715, 0.0
    %v1724 = vmax.f32 %v1720, 0.0
    %v1725 = vld [vmem:[%s16] sm:$0xff]
    %v1726 = vld [vmem:[%s16 + $0x8] sm:$0xff]
    %v1727 = vld [vmem:[%s16 + $0x10] sm:$0xff]
    %v1728 = vld [vmem:[%s16 + $0x18] sm:$0xff]
    %v1729 = vld [vmem:[%s16 + $0x20] sm:$0xff]
    %v1730 = vld [vmem:[%s16 + $0x28] sm:$0xff]
    %v1731 = vld [vmem:[%s16 + $0x30] sm:$0xff]
    %v1732 = vld [vmem:[%s16 + $0x38] sm:$0xff]
    %vm1733 = vcmask 523264
    %v1735 = vsel %vm1733, %v1723, 0
    %v1738 = vsel %vm1733, %v1724, 0
    %1740 = vmatprep.subr.mxu0 0.0
    %1741 = vmatpush1.msra.mxu0 0.0
    %1742 = vmatprep.subr.mxu0 0.0
    %1743 = vmatpush1.msra.mxu0 0.0
    %1744 = vmatprep.subr.mxu0 0.0
    %1745 = vmatpush1.msra.mxu0 0.0
    %1746 = vmatprep.subr.mxu0 0.0
    %1747 = vmatpush1.msra.mxu0 0.0
    %1748 = vmatprep.subr.mxu0 0.0
    %1749 = vmatpush1.msra.mxu0 0.0
    %1750 = vmatprep.subr.mxu0 0.0
    %1751 = vmatpush1.msra.mxu0 0.0
    %1752 = vmatprep.subr.mxu0 0.0
    %1753 = vmatpush1.msra.mxu0 0.0
    %1754 = vmatprep.subr.mxu0 0.0
    %1755 = vmatpush1.msra.mxu0 0.0
    %1756 = vmatprep.subr.mxu0 0.0
    %1757 = vmatpush1.msra.mxu0 %v1732
    %1758 = vmatprep.subr.mxu0 0.0
    %1759 = vmatpush1.msra.mxu0 %v1731
    %1760 = vmatprep.subr.mxu0 0.0
    %1761 = vmatpush1.msra.mxu0 %v1730
    %1762 = vmatprep.subr.mxu0 0.0
    %1763 = vmatpush1.msra.mxu0 %v1729
    %1764 = vmatprep.subr.mxu0 0.0
    %1765 = vmatpush1.msra.mxu0 %v1728
    %1766 = vmatprep.subr.mxu0 0.0
    %1767 = vmatpush1.msra.mxu0 %v1727
    %1768 = vmatprep.subr.mxu0 0.0
    %1769 = vmatpush1.msra.mxu0 %v1726
    %1770 = vmatprep.subr.mxu0 0.0
    %1771 = vmatpush1.msra.mxu0 %v1725
    %1772 = vmatprep.subr.mxu0 0.0
    %1773 = vmatpush2.msra.mxu0 0.0
    %1774 = vmatprep.subr.mxu0 0.0
    %1775 = vmatpush2.msra.mxu0 0.0
    %1776 = vmatprep.subr.mxu0 0.0
    %1777 = vmatpush2.msra.mxu0 0.0
    %1778 = vmatprep.subr.mxu0 0.0
    %1779 = vmatpush2.msra.mxu0 0.0
    %1780 = vmatprep.subr.mxu0 0.0
    %1781 = vmatpush2.msra.mxu0 0.0
    %1782 = vmatprep.subr.mxu0 0.0
    %1783 = vmatpush2.msra.mxu0 0.0
    %1784 = vmatprep.subr.mxu0 0.0
    %1785 = vmatpush2.msra.mxu0 0.0
    %1786 = vmatprep.subr.mxu0 0.0
    %1787 = vmatpush2.msra.mxu0 0.0
    %1788 = vmatprep.subr.mxu0 0.0
    %1789 = vmatpush2.msra.mxu0 0.0
    %1790 = vmatprep.subr.mxu0 0.0
    %1791 = vmatpush2.msra.mxu0 0.0
    %1792 = vmatprep.subr.mxu0 0.0
    %1793 = vmatpush2.msra.mxu0 0.0
    %1794 = vmatprep.subr.mxu0 0.0
    %1795 = vmatpush2.msra.mxu0 0.0
    %1796 = vmatprep.subr.mxu0 0.0
    %1797 = vmatpush2.msra.mxu0 0.0
    %1798 = vmatprep.subr.mxu0 0.0
    %1799 = vmatpush2.msra.mxu0 0.0
    %1800 = vmatprep.subr.mxu0 0.0
    %1801 = vmatpush2.msra.mxu0 0.0
    %1802 = vmatprep.subr.mxu0 0.0
    %1803 = vmatpush2.msra.mxu0 0.0
    %1804 = vmatprep.mubr.f32.mxu0 0.0
    %1805 = vmatmul.mubr.f32.gmra.mxu0 %v1735
    %v1806 = vpop.f32.mrf.mxu0
    %v1807 = vadd.f32 0.0, %v1806
    %v1808 = vpop.f32.mrf.mxu0
    %1809 = vmatprep.mubr.f32.mxu0 0.0
    %1810 = vmatmul.mubr.f32.gmra.mxu0 %v1738
    %v1811 = vpop.f32.mrf.mxu0
    %v1812 = vadd.f32 0.0, %v1811
    %v1813 = vpop.f32.mrf.mxu0
    %1814 = vdwg.mxu0
    %v1815 = vadd.f32 %v1585, %v1807
    %v1816 = vadd.f32 %v1586, %v1812
    %v1817 = vld [vmem:[%s17] sm:$0x1]
    %v1819 = vlaneseq
    %v1820 = vshrl.u32 %v1819, 7
    %v1821 = vsub.s32 0, %v1820
    %v1822 = vrot.slane %v1817, %v1821
    %v1824 = vadd.f32 %v1815, %v1822
    %v1825 = vadd.f32 %v1816, %v1822
    %s1826 = scalar_lea.vmem %s2, 1
    %v1827 = vld [vmem:[%s1826] sm:$0x1]
    %s1828 = scalar_lea.vmem [#allocation7], 1
    %v1829 = vld [vmem:[%s1828] sm:$0x1]
    %v1830 = vsel %vm140, %v1824, 0.0
    %1831 = vadd.xlane.f32.xlu0 %v1830
    %v1832 = vpop.xlane.xlu0 %1831
    %v1833 = vsel %vm140, %v1825, 0.0
    %1834 = vadd.xlane.f32.xlu0 %v1833
    %v1835 = vpop.xlane.xlu0 %1834
    %v1836 = vmul.f32 %v1832, %v147
    %v1837 = vmul.f32 %v1835, %v147
    %v1838 = vsub.f32 %v1824, %v1836
    %v1839 = vsub.f32 %v1825, %v1837
    %v1840 = vmul.f32 %v1838, %v1838
    %v1841 = vmul.f32 %v1839, %v1839
    %v1842 = vsel %vm140, %v1840, 0.0
    %1843 = vadd.xlane.f32.xlu0 %v1842
    %v1844 = vpop.xlane.xlu0 %1843
    %v1845 = vsel %vm140, %v1841, 0.0
    %1846 = vadd.xlane.f32.xlu0 %v1845
    %v1847 = vpop.xlane.xlu0 %1846
    %v1848 = vmul.f32 %v1844, %v147
    %v1849 = vmul.f32 %v1847, %v147
    %v1850 = vadd.f32 %v1848, 1e-06
    %v1851 = vadd.f32 %v1849, 1e-06
    %v1852 = vrsqrt.pop %v1850
    %v1853 = vrsqrt.pop %v1851
    %v1854 = vmul.f32 %v1838, %v1852
    %v1855 = vmul.f32 %v1839, %v1853
    %v1857 = vlaneseq
    %v1858 = vshrl.u32 %v1857, 7
    %v1859 = vsub.s32 0, %v1858
    %v1860 = vrot.slane %v1827, %v1859
    %v1862 = vmul.f32 %v1854, %v1860
    %v1863 = vmul.f32 %v1855, %v1860
    %v1865 = vlaneseq
    %v1866 = vshrl.u32 %v1865, 7
    %v1867 = vsub.s32 0, %v1866
    %v1868 = vrot.slane %v1829, %v1867
    %v1870 = vadd.f32 %v1862, %v1868
    %v1871 = vadd.f32 %v1863, %v1868
    %s1872 = scalar_lea.vmem %s4, 32
    %v1873 = vld [vmem:[%s1872] sm:$0xff]
    %v1874 = vld [vmem:[%s1872 + $0x8] sm:$0xff]
    %v1875 = vld [vmem:[%s1872 + $0x10] sm:$0xff]
    %v1876 = vld [vmem:[%s1872 + $0x18] sm:$0xff]
    %s1877 = scalar_lea.vmem %s5, 1
    %v1878 = vld [vmem:[%s1877] sm:$0x1]
    %v1880 = vlaneseq
    %v1881 = vshrl.u32 %v1880, 7
    %v1882 = vsub.s32 0, %v1881
    %v1883 = vrot.slane %v1878, %v1882
    %v1886 = vsel %vm140, %v1870, 0
    %v1889 = vsel %vm140, %v1871, 0
    %1891 = vmatprep.subr.mxu0 0.0
    %1892 = vmatpush1.msra.mxu0 0.0
    %1893 = vmatprep.subr.mxu0 0.0
    %1894 = vmatpush1.msra.mxu0 0.0
    %1895 = vmatprep.subr.mxu0 0.0
    %1896 = vmatpush1.msra.mxu0 0.0
    %1897 = vmatprep.subr.mxu0 0.0
    %1898 = vmatpush1.msra.mxu0 0.0
    %1899 = vmatprep.subr.mxu0 0.0
    %1900 = vmatpush1.msra.mxu0 0.0
    %1901 = vmatprep.subr.mxu0 0.0
    %1902 = vmatpush1.msra.mxu0 0.0
    %1903 = vmatprep.subr.mxu0 0.0
    %1904 = vmatpush1.msra.mxu0 0.0
    %1905 = vmatprep.subr.mxu0 0.0
    %1906 = vmatpush1.msra.mxu0 0.0
    %1907 = vmatprep.subr.mxu0 0.0
    %1908 = vmatpush1.msra.mxu0 0.0
    %1909 = vmatprep.subr.mxu0 0.0
    %1910 = vmatpush1.msra.mxu0 0.0
    %1911 = vmatprep.subr.mxu0 0.0
    %1912 = vmatpush1.msra.mxu0 0.0
    %1913 = vmatprep.subr.mxu0 0.0
    %1914 = vmatpush1.msra.mxu0 0.0
    %1915 = vmatprep.subr.mxu0 0.0
    %1916 = vmatpush1.msra.mxu0 %v1876
    %1917 = vmatprep.subr.mxu0 0.0
    %1918 = vmatpush1.msra.mxu0 %v1875
    %1919 = vmatprep.subr.mxu0 0.0
    %1920 = vmatpush1.msra.mxu0 %v1874
    %1921 = vmatprep.subr.mxu0 0.0
    %1922 = vmatpush1.msra.mxu0 %v1873
    %1923 = vmatprep.subr.mxu0 0.0
    %1924 = vmatpush2.msra.mxu0 0.0
    %1925 = vmatprep.subr.mxu0 0.0
    %1926 = vmatpush2.msra.mxu0 0.0
    %1927 = vmatprep.subr.mxu0 0.0
    %1928 = vmatpush2.msra.mxu0 0.0
    %1929 = vmatprep.subr.mxu0 0.0
    %1930 = vmatpush2.msra.mxu0 0.0
    %1931 = vmatprep.subr.mxu0 0.0
    %1932 = vmatpush2.msra.mxu0 0.0
    %1933 = vmatprep.subr.mxu0 0.0
    %1934 = vmatpush2.msra.mxu0 0.0
    %1935 = vmatprep.subr.mxu0 0.0
    %1936 = vmatpush2.msra.mxu0 0.0
    %1937 = vmatprep.subr.mxu0 0.0
    %1938 = vmatpush2.msra.mxu0 0.0
    %1939 = vmatprep.subr.mxu0 0.0
    %1940 = vmatpush2.msra.mxu0 0.0
    %1941 = vmatprep.subr.mxu0 0.0
    %1942 = vmatpush2.msra.mxu0 0.0
    %1943 = vmatprep.subr.mxu0 0.0
    %1944 = vmatpush2.msra.mxu0 0.0
    %1945 = vmatprep.subr.mxu0 0.0
    %1946 = vmatpush2.msra.mxu0 0.0
    %1947 = vmatprep.subr.mxu0 0.0
    %1948 = vmatpush2.msra.mxu0 0.0
    %1949 = vmatprep.subr.mxu0 0.0
    %1950 = vmatpush2.msra.mxu0 0.0
    %1951 = vmatprep.subr.mxu0 0.0
    %1952 = vmatpush2.msra.mxu0 0.0
    %1953 = vmatprep.subr.mxu0 0.0
    %1954 = vmatpush2.msra.mxu0 0.0
    %1955 = vmatprep.mubr.f32.mxu0 0.0
    %1956 = vmatmul.mubr.f32.gmra.mxu0 %v1886
    %v1957 = vpop.f32.mrf.mxu0
    %v1958 = vadd.f32 %v1883, %v1957
    %v1959 = vpop.f32.mrf.mxu0
    %1960 = vmatprep.mubr.f32.mxu0 0.0
    %1961 = vmatmul.mubr.f32.gmra.mxu0 %v1889
    %v1962 = vpop.f32.mrf.mxu0
    %v1963 = vadd.f32 %v1883, %v1962
    %v1964 = vpop.f32.mrf.mxu0
    %1965 = vdwg.mxu0
    %v1966 = vmul.f32 %v1958, 0.35355338
    %v1967 = vmul.f32 %v1963, 0.35355338
    %s1968 = scalar_lea.vmem %s6, 32
    %v1969 = vld [vmem:[%s1968] sm:$0xff]
    %v1970 = vld [vmem:[%s1968 + $0x8] sm:$0xff]
    %v1971 = vld [vmem:[%s1968 + $0x10] sm:$0xff]
    %v1972 = vld [vmem:[%s1968 + $0x18] sm:$0xff]
    %s1973 = scalar_lea.vmem %s7, 1
    %v1974 = vld [vmem:[%s1973] sm:$0x1]
    %v1976 = vlaneseq
    %v1977 = vshrl.u32 %v1976, 7
    %v1978 = vsub.s32 0, %v1977
    %v1979 = vrot.slane %v1974, %v1978
    %1981 = vmatprep.subr.mxu0 0.0
    %1982 = vmatpush1.msra.mxu0 0.0
    %1983 = vmatprep.subr.mxu0 0.0
    %1984 = vmatpush1.msra.mxu0 0.0
    %1985 = vmatprep.subr.mxu0 0.0
    %1986 = vmatpush1.msra.mxu0 0.0
    %1987 = vmatprep.subr.mxu0 0.0
    %1988 = vmatpush1.msra.mxu0 0.0
    %1989 = vmatprep.subr.mxu0 0.0
    %1990 = vmatpush1.msra.mxu0 0.0
    %1991 = vmatprep.subr.mxu0 0.0
    %1992 = vmatpush1.msra.mxu0 0.0
    %1993 = vmatprep.subr.mxu0 0.0
    %1994 = vmatpush1.msra.mxu0 0.0
    %1995 = vmatprep.subr.mxu0 0.0
    %1996 = vmatpush1.msra.mxu0 0.0
    %1997 = vmatprep.subr.mxu0 0.0
    %1998 = vmatpush1.msra.mxu0 0.0
    %1999 = vmatprep.subr.mxu0 0.0
    %2000 = vmatpush1.msra.mxu0 0.0
    %2001 = vmatprep.subr.mxu0 0.0
    %2002 = vmatpush1.msra.mxu0 0.0
    %2003 = vmatprep.subr.mxu0 0.0
    %2004 = vmatpush1.msra.mxu0 0.0
    %2005 = vmatprep.subr.mxu0 0.0
    %2006 = vmatpush1.msra.mxu0 %v1972
    %2007 = vmatprep.subr.mxu0 0.0
    %2008 = vmatpush1.msra.mxu0 %v1971
    %2009 = vmatprep.subr.mxu0 0.0
    %2010 = vmatpush1.msra.mxu0 %v1970
    %2011 = vmatprep.subr.mxu0 0.0
    %2012 = vmatpush1.msra.mxu0 %v1969
    %2013 = vmatprep.subr.mxu0 0.0
    %2014 = vmatpush2.msra.mxu0 0.0
    %2015 = vmatprep.subr.mxu0 0.0
    %2016 = vmatpush2.msra.mxu0 0.0
    %2017 = vmatprep.subr.mxu0 0.0
    %2018 = vmatpush2.msra.mxu0 0.0
    %2019 = vmatprep.subr.mxu0 0.0
    %2020 = vmatpush2.msra.mxu0 0.0
    %2021 = vmatprep.subr.mxu0 0.0
    %2022 = vmatpush2.msra.mxu0 0.0
    %2023 = vmatprep.subr.mxu0 0.0
    %2024 = vmatpush2.msra.mxu0 0.0
    %2025 = vmatprep.subr.mxu0 0.0
    %2026 = vmatpush2.msra.mxu0 0.0
    %2027 = vmatprep.subr.mxu0 0.0
    %2028 = vmatpush2.msra.mxu0 0.0
    %2029 = vmatprep.subr.mxu0 0.0
    %2030 = vmatpush2.msra.mxu0 0.0
    %2031 = vmatprep.subr.mxu0 0.0
    %2032 = vmatpush2.msra.mxu0 0.0
    %2033 = vmatprep.subr.mxu0 0.0
    %2034 = vmatpush2.msra.mxu0 0.0
    %2035 = vmatprep.subr.mxu0 0.0
    %2036 = vmatpush2.msra.mxu0 0.0
    %2037 = vmatprep.subr.mxu0 0.0
    %2038 = vmatpush2.msra.mxu0 0.0
    %2039 = vmatprep.subr.mxu0 0.0
    %2040 = vmatpush2.msra.mxu0 0.0
    %2041 = vmatprep.subr.mxu0 0.0
    %2042 = vmatpush2.msra.mxu0 0.0
    %2043 = vmatprep.subr.mxu0 0.0
    %2044 = vmatpush2.msra.mxu0 0.0
    %2045 = vmatprep.mubr.f32.mxu0 0.0
    %2046 = vmatmul.mubr.f32.gmra.mxu0 %v1886
    %v2047 = vpop.f32.mrf.mxu0
    %v2048 = vadd.f32 %v1979, %v2047
    %v2049 = vpop.f32.mrf.mxu0
    %2050 = vmatprep.mubr.f32.mxu0 0.0
    %2051 = vmatmul.mubr.f32.gmra.mxu0 %v1889
    %v2052 = vpop.f32.mrf.mxu0
    %v2053 = vadd.f32 %v1979, %v2052
    %v2054 = vpop.f32.mrf.mxu0
    %2055 = vdwg.mxu0
    %s2056 = scalar_lea.vmem %s8, 32
    %v2057 = vld [vmem:[%s2056] sm:$0xff]
    %v2058 = vld [vmem:[%s2056 + $0x8] sm:$0xff]
    %v2059 = vld [vmem:[%s2056 + $0x10] sm:$0xff]
    %v2060 = vld [vmem:[%s2056 + $0x18] sm:$0xff]
    %s2061 = scalar_lea.vmem %s9, 1
    %v2062 = vld [vmem:[%s2061] sm:$0x1]
    %v2064 = vlaneseq
    %v2065 = vshrl.u32 %v2064, 7
    %v2066 = vsub.s32 0, %v2065
    %v2067 = vrot.slane %v2062, %v2066
    %2069 = vmatprep.subr.mxu0 0.0
    %2070 = vmatpush1.msra.mxu0 0.0
    %2071 = vmatprep.subr.mxu0 0.0
    %2072 = vmatpush1.msra.mxu0 0.0
    %2073 = vmatprep.subr.mxu0 0.0
    %2074 = vmatpush1.msra.mxu0 0.0
    %2075 = vmatprep.subr.mxu0 0.0
    %2076 = vmatpush1.msra.mxu0 0.0
    %2077 = vmatprep.subr.mxu0 0.0
    %2078 = vmatpush1.msra.mxu0 0.0
    %2079 = vmatprep.subr.mxu0 0.0
    %2080 = vmatpush1.msra.mxu0 0.0
    %2081 = vmatprep.subr.mxu0 0.0
    %2082 = vmatpush1.msra.mxu0 0.0
    %2083 = vmatprep.subr.mxu0 0.0
    %2084 = vmatpush1.msra.mxu0 0.0
    %2085 = vmatprep.subr.mxu0 0.0
    %2086 = vmatpush1.msra.mxu0 0.0
    %2087 = vmatprep.subr.mxu0 0.0
    %2088 = vmatpush1.msra.mxu0 0.0
    %2089 = vmatprep.subr.mxu0 0.0
    %2090 = vmatpush1.msra.mxu0 0.0
    %2091 = vmatprep.subr.mxu0 0.0
    %2092 = vmatpush1.msra.mxu0 0.0
    %2093 = vmatprep.subr.mxu0 0.0
    %2094 = vmatpush1.msra.mxu0 %v2060
    %2095 = vmatprep.subr.mxu0 0.0
    %2096 = vmatpush1.msra.mxu0 %v2059
    %2097 = vmatprep.subr.mxu0 0.0
    %2098 = vmatpush1.msra.mxu0 %v2058
    %2099 = vmatprep.subr.mxu0 0.0
    %2100 = vmatpush1.msra.mxu0 %v2057
    %2101 = vmatprep.subr.mxu0 0.0
    %2102 = vmatpush2.msra.mxu0 0.0
    %2103 = vmatprep.subr.mxu0 0.0
    %2104 = vmatpush2.msra.mxu0 0.0
    %2105 = vmatprep.subr.mxu0 0.0
    %2106 = vmatpush2.msra.mxu0 0.0
    %2107 = vmatprep.subr.mxu0 0.0
    %2108 = vmatpush2.msra.mxu0 0.0
    %2109 = vmatprep.subr.mxu0 0.0
    %2110 = vmatpush2.msra.mxu0 0.0
    %2111 = vmatprep.subr.mxu0 0.0
    %2112 = vmatpush2.msra.mxu0 0.0
    %2113 = vmatprep.subr.mxu0 0.0
    %2114 = vmatpush2.msra.mxu0 0.0
    %2115 = vmatprep.subr.mxu0 0.0
    %2116 = vmatpush2.msra.mxu0 0.0
    %2117 = vmatprep.subr.mxu0 0.0
    %2118 = vmatpush2.msra.mxu0 0.0
    %2119 = vmatprep.subr.mxu0 0.0
    %2120 = vmatpush2.msra.mxu0 0.0
    %2121 = vmatprep.subr.mxu0 0.0
    %2122 = vmatpush2.msra.mxu0 0.0
    %2123 = vmatprep.subr.mxu0 0.0
    %2124 = vmatpush2.msra.mxu0 0.0
    %2125 = vmatprep.subr.mxu0 0.0
    %2126 = vmatpush2.msra.mxu0 0.0
    %2127 = vmatprep.subr.mxu0 0.0
    %2128 = vmatpush2.msra.mxu0 0.0
    %2129 = vmatprep.subr.mxu0 0.0
    %2130 = vmatpush2.msra.mxu0 0.0
    %2131 = vmatprep.subr.mxu0 0.0
    %2132 = vmatpush2.msra.mxu0 0.0
    %2133 = vmatprep.mubr.f32.mxu0 0.0
    %2134 = vmatmul.mubr.f32.gmra.mxu0 %v1886
    %v2135 = vpop.f32.mrf.mxu0
    %v2136 = vadd.f32 %v2067, %v2135
    %v2137 = vpop.f32.mrf.mxu0
    %2138 = vmatprep.mubr.f32.mxu0 0.0
    %2139 = vmatmul.mubr.f32.gmra.mxu0 %v1889
    %v2140 = vpop.f32.mrf.mxu0
    %v2141 = vadd.f32 %v2067, %v2140
    %v2142 = vpop.f32.mrf.mxu0
    %2143 = vdwg.mxu0
    %s2144 = scalar_lea.vmem [#allocation8], 32
    %v2145 = vld [vmem:[%s2144] sm:$0xff]
    %v2146 = vld [vmem:[%s2144 + $0x8] sm:$0xff]
    %v2147 = vld [vmem:[%s2144 + $0x10] sm:$0xff]
    %v2148 = vld [vmem:[%s2144 + $0x18] sm:$0xff]
    %v2150 = vsel %vm454, %v1966, 0
    %v2153 = vsel %vm454, %v1967, 0
    %v2156 = vsel %vm454, %v2048, 0
    %v2159 = vsel %vm454, %v2053, 0
    %2161 = vmatprep.subr.mxu0 0.0
    %2162 = vmatpush1.xpose.msra.mxu0 0.0
    %2163 = vmatprep.subr.mxu0 0.0
    %2164 = vmatpush1.xpose.msra.mxu0 0.0
    %2165 = vmatprep.subr.mxu0 0.0
    %2166 = vmatpush1.xpose.msra.mxu0 0.0
    %2167 = vmatprep.subr.mxu0 0.0
    %2168 = vmatpush1.xpose.msra.mxu0 0.0
    %2169 = vmatprep.subr.mxu0 0.0
    %2170 = vmatpush1.xpose.msra.mxu0 0.0
    %2171 = vmatprep.subr.mxu0 0.0
    %2172 = vmatpush1.xpose.msra.mxu0 0.0
    %2173 = vmatprep.subr.mxu0 0.0
    %2174 = vmatpush1.xpose.msra.mxu0 0.0
    %2175 = vmatprep.subr.mxu0 0.0
    %2176 = vmatpush1.xpose.msra.mxu0 0.0
    %2177 = vmatprep.subr.mxu0 0.0
    %2178 = vmatpush1.xpose.msra.mxu0 0.0
    %2179 = vmatprep.subr.mxu0 0.0
    %2180 = vmatpush1.xpose.msra.mxu0 0.0
    %2181 = vmatprep.subr.mxu0 0.0
    %2182 = vmatpush1.xpose.msra.mxu0 0.0
    %2183 = vmatprep.subr.mxu0 0.0
    %2184 = vmatpush1.xpose.msra.mxu0 0.0
    %2185 = vmatprep.subr.mxu0 0.0
    %2186 = vmatpush1.xpose.msra.mxu0 0.0
    %2187 = vmatprep.subr.mxu0 0.0
    %2188 = vmatpush1.xpose.msra.mxu0 0.0
    %2189 = vmatprep.subr.mxu0 0.0
    %2190 = vmatpush1.xpose.msra.mxu0 %v2159
    %2191 = vmatprep.subr.mxu0 0.0
    %2192 = vmatpush1.xpose.msra.mxu0 %v2156
    %2193 = vmatprep.subr.mxu0 0.0
    %2194 = vmatpush2.xpose.msra.mxu0 0.0
    %2195 = vmatprep.subr.mxu0 0.0
    %2196 = vmatpush2.xpose.msra.mxu0 0.0
    %2197 = vmatprep.subr.mxu0 0.0
    %2198 = vmatpush2.xpose.msra.mxu0 0.0
    %2199 = vmatprep.subr.mxu0 0.0
    %2200 = vmatpush2.xpose.msra.mxu0 0.0
    %2201 = vmatprep.subr.mxu0 0.0
    %2202 = vmatpush2.xpose.msra.mxu0 0.0
    %2203 = vmatprep.subr.mxu0 0.0
    %2204 = vmatpush2.xpose.msra.mxu0 0.0
    %2205 = vmatprep.subr.mxu0 0.0
    %2206 = vmatpush2.xpose.msra.mxu0 0.0
    %2207 = vmatprep.subr.mxu0 0.0
    %2208 = vmatpush2.xpose.msra.mxu0 0.0
    %2209 = vmatprep.subr.mxu0 0.0
    %2210 = vmatpush2.xpose.msra.mxu0 0.0
    %2211 = vmatprep.subr.mxu0 0.0
    %2212 = vmatpush2.xpose.msra.mxu0 0.0
    %2213 = vmatprep.subr.mxu0 0.0
    %2214 = vmatpush2.xpose.msra.mxu0 0.0
    %2215 = vmatprep.subr.mxu0 0.0
    %2216 = vmatpush2.xpose.msra.mxu0 0.0
    %2217 = vmatprep.subr.mxu0 0.0
    %2218 = vmatpush2.xpose.msra.mxu0 0.0
    %2219 = vmatprep.subr.mxu0 0.0
    %2220 = vmatpush2.xpose.msra.mxu0 0.0
    %2221 = vmatprep.subr.mxu0 0.0
    %2222 = vmatpush2.xpose.msra.mxu0 0.0
    %2223 = vmatprep.subr.mxu0 0.0
    %2224 = vmatpush2.xpose.msra.mxu0 0.0
    %2225 = vmatprep.mubr.f32.mxu0 0.0
    %2226 = vmatmul.mubr.f32.gmra.mxu0 %v2150
    %v2227 = vpop.f32.mrf.mxu0
    %v2228 = vadd.f32 %v136, %v2227
    %v2229 = vpop.f32.mrf.mxu0
    %2230 = vmatprep.mubr.f32.mxu0 0.0
    %2231 = vmatmul.mubr.f32.gmra.mxu0 %v2153
    %v2232 = vpop.f32.mrf.mxu0
    %v2233 = vadd.f32 %v137, %v2232
    %v2234 = vpop.f32.mrf.mxu0
    %2235 = vdwg.mxu0
    %v2236 = vsel %vm542, %v2228, -inf
    %2237 = vmax.xlane.f32.xlu0 %v2236
    %v2238 = vpop.xlane.xlu0 %2237
    %v2239 = vsel %vm542, %v2233, -inf
    %2240 = vmax.xlane.f32.xlu0 %v2239
    %v2241 = vpop.xlane.xlu0 %2240
    %v2242 = vsub.f32 %v2228, %v2238
    %v2243 = vsub.f32 %v2233, %v2241
    %v2244 = vmul.f32 %v2242, 1.442695
    %v2245 = vpow.pop %v2244
    %v2246 = vmul.f32 %v2243, 1.442695
    %v2247 = vpow.pop %v2246
    %v2248 = vsel %vm542, %v2245, 0.0
    %2249 = vadd.xlane.f32.xlu0 %v2248
    %v2250 = vpop.xlane.xlu0 %2249
    %v2251 = vsel %vm542, %v2247, 0.0
    %2252 = vadd.xlane.f32.xlu0 %v2251
    %v2253 = vpop.xlane.xlu0 %2252
    %v2254 = vrcp.pop %v2250
    %v2255 = vrcp.pop %v2253
    %v2256 = vmul.f32 %v2245, %v2254
    %v2257 = vmul.f32 %v2247, %v2255
    %v2259 = vsel %vm542, %v2256, 0
    %v2262 = vsel %vm542, %v2257, 0
    %2264 = vmatprep.subr.mxu0 0.0
    %2265 = vmatpush1.msra.mxu0 0.0
    %2266 = vmatprep.subr.mxu0 0.0
    %2267 = vmatpush1.msra.mxu0 0.0
    %2268 = vmatprep.subr.mxu0 0.0
    %2269 = vmatpush1.msra.mxu0 0.0
    %2270 = vmatprep.subr.mxu0 0.0
    %2271 = vmatpush1.msra.mxu0 0.0
    %2272 = vmatprep.subr.mxu0 0.0
    %2273 = vmatpush1.msra.mxu0 0.0
    %2274 = vmatprep.subr.mxu0 0.0
    %2275 = vmatpush1.msra.mxu0 0.0
    %2276 = vmatprep.subr.mxu0 0.0
    %2277 = vmatpush1.msra.mxu0 0.0
    %2278 = vmatprep.subr.mxu0 0.0
    %2279 = vmatpush1.msra.mxu0 0.0
    %2280 = vmatprep.subr.mxu0 0.0
    %2281 = vmatpush1.msra.mxu0 0.0
    %2282 = vmatprep.subr.mxu0 0.0
    %2283 = vmatpush1.msra.mxu0 0.0
    %2284 = vmatprep.subr.mxu0 0.0
    %2285 = vmatpush1.msra.mxu0 0.0
    %2286 = vmatprep.subr.mxu0 0.0
    %2287 = vmatpush1.msra.mxu0 0.0
    %2288 = vmatprep.subr.mxu0 0.0
    %2289 = vmatpush1.msra.mxu0 0.0
    %2290 = vmatprep.subr.mxu0 0.0
    %2291 = vmatpush1.msra.mxu0 0.0
    %2292 = vmatprep.subr.mxu0 0.0
    %2293 = vmatpush1.msra.mxu0 %v2141
    %2294 = vmatprep.subr.mxu0 0.0
    %2295 = vmatpush1.msra.mxu0 %v2136
    %2296 = vmatprep.subr.mxu0 0.0
    %2297 = vmatpush2.msra.mxu0 0.0
    %2298 = vmatprep.subr.mxu0 0.0
    %2299 = vmatpush2.msra.mxu0 0.0
    %2300 = vmatprep.subr.mxu0 0.0
    %2301 = vmatpush2.msra.mxu0 0.0
    %2302 = vmatprep.subr.mxu0 0.0
    %2303 = vmatpush2.msra.mxu0 0.0
    %2304 = vmatprep.subr.mxu0 0.0
    %2305 = vmatpush2.msra.mxu0 0.0
    %2306 = vmatprep.subr.mxu0 0.0
    %2307 = vmatpush2.msra.mxu0 0.0
    %2308 = vmatprep.subr.mxu0 0.0
    %2309 = vmatpush2.msra.mxu0 0.0
    %2310 = vmatprep.subr.mxu0 0.0
    %2311 = vmatpush2.msra.mxu0 0.0
    %2312 = vmatprep.subr.mxu0 0.0
    %2313 = vmatpush2.msra.mxu0 0.0
    %2314 = vmatprep.subr.mxu0 0.0
    %2315 = vmatpush2.msra.mxu0 0.0
    %2316 = vmatprep.subr.mxu0 0.0
    %2317 = vmatpush2.msra.mxu0 0.0
    %2318 = vmatprep.subr.mxu0 0.0
    %2319 = vmatpush2.msra.mxu0 0.0
    %2320 = vmatprep.subr.mxu0 0.0
    %2321 = vmatpush2.msra.mxu0 0.0
    %2322 = vmatprep.subr.mxu0 0.0
    %2323 = vmatpush2.msra.mxu0 0.0
    %2324 = vmatprep.subr.mxu0 0.0
    %2325 = vmatpush2.msra.mxu0 0.0
    %2326 = vmatprep.subr.mxu0 0.0
    %2327 = vmatpush2.msra.mxu0 0.0
    %2328 = vmatprep.mubr.f32.mxu0 0.0
    %2329 = vmatmul.mubr.f32.gmra.mxu0 %v2259
    %v2330 = vpop.f32.mrf.mxu0
    %v2331 = vadd.f32 0.0, %v2330
    %v2332 = vpop.f32.mrf.mxu0
    %2333 = vmatprep.mubr.f32.mxu0 0.0
    %2334 = vmatmul.mubr.f32.gmra.mxu0 %v2262
    %v2335 = vpop.f32.mrf.mxu0
    %v2336 = vadd.f32 0.0, %v2335
    %v2337 = vpop.f32.mrf.mxu0
    %2338 = vdwg.mxu0
    %2339 = vrot.lane.b32.xlu0 %v1966, 120
    %v2340 = vpop.permute.xlu0 %2339
    %2341 = vrot.lane.b32.xlu0 %v1967, 120
    %v2342 = vpop.permute.xlu0 %2341
    %2343 = vrot.lane.b32.xlu0 %v2048, 120
    %v2344 = vpop.permute.xlu0 %2343
    %2345 = vrot.lane.b32.xlu0 %v2053, 120
    %v2346 = vpop.permute.xlu0 %2345
    %v2347 = vsel %vm454, %v2340, 0
    %v2349 = vsel %vm454, %v2342, 0
    %v2351 = vsel %vm454, %v2344, 0
    %v2353 = vsel %vm454, %v2346, 0
    %2355 = vmatprep.subr.mxu0 0.0
    %2356 = vmatpush1.xpose.msra.mxu0 0.0
    %2357 = vmatprep.subr.mxu0 0.0
    %2358 = vmatpush1.xpose.msra.mxu0 0.0
    %2359 = vmatprep.subr.mxu0 0.0
    %2360 = vmatpush1.xpose.msra.mxu0 0.0
    %2361 = vmatprep.subr.mxu0 0.0
    %2362 = vmatpush1.xpose.msra.mxu0 0.0
    %2363 = vmatprep.subr.mxu0 0.0
    %2364 = vmatpush1.xpose.msra.mxu0 0.0
    %2365 = vmatprep.subr.mxu0 0.0
    %2366 = vmatpush1.xpose.msra.mxu0 0.0
    %2367 = vmatprep.subr.mxu0 0.0
    %2368 = vmatpush1.xpose.msra.mxu0 0.0
    %2369 = vmatprep.subr.mxu0 0.0
    %2370 = vmatpush1.xpose.msra.mxu0 0.0
    %2371 = vmatprep.subr.mxu0 0.0
    %2372 = vmatpush1.xpose.msra.mxu0 0.0
    %2373 = vmatprep.subr.mxu0 0.0
    %2374 = vmatpush1.xpose.msra.mxu0 0.0
    %2375 = vmatprep.subr.mxu0 0.0
    %2376 = vmatpush1.xpose.msra.mxu0 0.0
    %2377 = vmatprep.subr.mxu0 0.0
    %2378 = vmatpush1.xpose.msra.mxu0 0.0
    %2379 = vmatprep.subr.mxu0 0.0
    %2380 = vmatpush1.xpose.msra.mxu0 0.0
    %2381 = vmatprep.subr.mxu0 0.0
    %2382 = vmatpush1.xpose.msra.mxu0 0.0
    %2383 = vmatprep.subr.mxu0 0.0
    %2384 = vmatpush1.xpose.msra.mxu0 %v2353
    %2385 = vmatprep.subr.mxu0 0.0
    %2386 = vmatpush1.xpose.msra.mxu0 %v2351
    %2387 = vmatprep.subr.mxu0 0.0
    %2388 = vmatpush2.xpose.msra.mxu0 0.0
    %2389 = vmatprep.subr.mxu0 0.0
    %2390 = vmatpush2.xpose.msra.mxu0 0.0
    %2391 = vmatprep.subr.mxu0 0.0
    %2392 = vmatpush2.xpose.msra.mxu0 0.0
    %2393 = vmatprep.subr.mxu0 0.0
    %2394 = vmatpush2.xpose.msra.mxu0 0.0
    %2395 = vmatprep.subr.mxu0 0.0
    %2396 = vmatpush2.xpose.msra.mxu0 0.0
    %2397 = vmatprep.subr.mxu0 0.0
    %2398 = vmatpush2.xpose.msra.mxu0 0.0
    %2399 = vmatprep.subr.mxu0 0.0
    %2400 = vmatpush2.xpose.msra.mxu0 0.0
    %2401 = vmatprep.subr.mxu0 0.0
    %2402 = vmatpush2.xpose.msra.mxu0 0.0
    %2403 = vmatprep.subr.mxu0 0.0
    %2404 = vmatpush2.xpose.msra.mxu0 0.0
    %2405 = vmatprep.subr.mxu0 0.0
    %2406 = vmatpush2.xpose.msra.mxu0 0.0
    %2407 = vmatprep.subr.mxu0 0.0
    %2408 = vmatpush2.xpose.msra.mxu0 0.0
    %2409 = vmatprep.subr.mxu0 0.0
    %2410 = vmatpush2.xpose.msra.mxu0 0.0
    %2411 = vmatprep.subr.mxu0 0.0
    %2412 = vmatpush2.xpose.msra.mxu0 0.0
    %2413 = vmatprep.subr.mxu0 0.0
    %2414 = vmatpush2.xpose.msra.mxu0 0.0
    %2415 = vmatprep.subr.mxu0 0.0
    %2416 = vmatpush2.xpose.msra.mxu0 0.0
    %2417 = vmatprep.subr.mxu0 0.0
    %2418 = vmatpush2.xpose.msra.mxu0 0.0
    %2419 = vmatprep.mubr.f32.mxu0 0.0
    %2420 = vmatmul.mubr.f32.gmra.mxu0 %v2347
    %v2421 = vpop.f32.mrf.mxu0
    %v2422 = vadd.f32 %v136, %v2421
    %v2423 = vpop.f32.mrf.mxu0
    %2424 = vmatprep.mubr.f32.mxu0 0.0
    %2425 = vmatmul.mubr.f32.gmra.mxu0 %v2349
    %v2426 = vpop.f32.mrf.mxu0
    %v2427 = vadd.f32 %v137, %v2426
    %v2428 = vpop.f32.mrf.mxu0
    %2429 = vdwg.mxu0
    %v2430 = vsel %vm542, %v2422, -inf
    %2431 = vmax.xlane.f32.xlu0 %v2430
    %v2432 = vpop.xlane.xlu0 %2431
    %v2433 = vsel %vm542, %v2427, -inf
    %2434 = vmax.xlane.f32.xlu0 %v2433
    %v2435 = vpop.xlane.xlu0 %2434
    %v2436 = vsub.f32 %v2422, %v2432
    %v2437 = vsub.f32 %v2427, %v2435
    %v2438 = vmul.f32 %v2436, 1.442695
    %v2439 = vpow.pop %v2438
    %v2440 = vmul.f32 %v2437, 1.442695
    %v2441 = vpow.pop %v2440
    %v2442 = vsel %vm542, %v2439, 0.0
    %2443 = vadd.xlane.f32.xlu0 %v2442
    %v2444 = vpop.xlane.xlu0 %2443
    %v2445 = vsel %vm542, %v2441, 0.0
    %2446 = vadd.xlane.f32.xlu0 %v2445
    %v2447 = vpop.xlane.xlu0 %2446
    %v2448 = vrcp.pop %v2444
    %v2449 = vrcp.pop %v2447
    %v2450 = vmul.f32 %v2439, %v2448
    %v2451 = vmul.f32 %v2441, %v2449
    %2454 = vrot.lane.b32.xlu0 %v2136, 120
    %v2455 = vpop.permute.xlu0 %2454
    %2456 = vrot.lane.b32.xlu0 %v2141, 120
    %v2457 = vpop.permute.xlu0 %2456
    %v2461 = vsel %vm542, %v2450, 0
    %v2464 = vsel %vm542, %v2451, 0
    %2466 = vmatprep.subr.mxu0 0.0
    %2467 = vmatpush1.msra.mxu0 0.0
    %2468 = vmatprep.subr.mxu0 0.0
    %2469 = vmatpush1.msra.mxu0 0.0
    %2470 = vmatprep.subr.mxu0 0.0
    %2471 = vmatpush1.msra.mxu0 0.0
    %2472 = vmatprep.subr.mxu0 0.0
    %2473 = vmatpush1.msra.mxu0 0.0
    %2474 = vmatprep.subr.mxu0 0.0
    %2475 = vmatpush1.msra.mxu0 0.0
    %2476 = vmatprep.subr.mxu0 0.0
    %2477 = vmatpush1.msra.mxu0 0.0
    %2478 = vmatprep.subr.mxu0 0.0
    %2479 = vmatpush1.msra.mxu0 0.0
    %2480 = vmatprep.subr.mxu0 0.0
    %2481 = vmatpush1.msra.mxu0 0.0
    %2482 = vmatprep.subr.mxu0 0.0
    %2483 = vmatpush1.msra.mxu0 0.0
    %2484 = vmatprep.subr.mxu0 0.0
    %2485 = vmatpush1.msra.mxu0 0.0
    %2486 = vmatprep.subr.mxu0 0.0
    %2487 = vmatpush1.msra.mxu0 0.0
    %2488 = vmatprep.subr.mxu0 0.0
    %2489 = vmatpush1.msra.mxu0 0.0
    %2490 = vmatprep.subr.mxu0 0.0
    %2491 = vmatpush1.msra.mxu0 0.0
    %2492 = vmatprep.subr.mxu0 0.0
    %2493 = vmatpush1.msra.mxu0 0.0
    %2494 = vmatprep.subr.mxu0 0.0
    %2495 = vmatpush1.msra.mxu0 %v2457
    %2496 = vmatprep.subr.mxu0 0.0
    %2497 = vmatpush1.msra.mxu0 %v2455
    %2498 = vmatprep.subr.mxu0 0.0
    %2499 = vmatpush2.msra.mxu0 0.0
    %2500 = vmatprep.subr.mxu0 0.0
    %2501 = vmatpush2.msra.mxu0 0.0
    %2502 = vmatprep.subr.mxu0 0.0
    %2503 = vmatpush2.msra.mxu0 0.0
    %2504 = vmatprep.subr.mxu0 0.0
    %2505 = vmatpush2.msra.mxu0 0.0
    %2506 = vmatprep.subr.mxu0 0.0
    %2507 = vmatpush2.msra.mxu0 0.0
    %2508 = vmatprep.subr.mxu0 0.0
    %2509 = vmatpush2.msra.mxu0 0.0
    %2510 = vmatprep.subr.mxu0 0.0
    %2511 = vmatpush2.msra.mxu0 0.0
    %2512 = vmatprep.subr.mxu0 0.0
    %2513 = vmatpush2.msra.mxu0 0.0
    %2514 = vmatprep.subr.mxu0 0.0
    %2515 = vmatpush2.msra.mxu0 0.0
    %2516 = vmatprep.subr.mxu0 0.0
    %2517 = vmatpush2.msra.mxu0 0.0
    %2518 = vmatprep.subr.mxu0 0.0
    %2519 = vmatpush2.msra.mxu0 0.0
    %2520 = vmatprep.subr.mxu0 0.0
    %2521 = vmatpush2.msra.mxu0 0.0
    %2522 = vmatprep.subr.mxu0 0.0
    %2523 = vmatpush2.msra.mxu0 0.0
    %2524 = vmatprep.subr.mxu0 0.0
    %2525 = vmatpush2.msra.mxu0 0.0
    %2526 = vmatprep.subr.mxu0 0.0
    %2527 = vmatpush2.msra.mxu0 0.0
    %2528 = vmatprep.subr.mxu0 0.0
    %2529 = vmatpush2.msra.mxu0 0.0
    %2530 = vmatprep.mubr.f32.mxu0 0.0
    %2531 = vmatmul.mubr.f32.gmra.mxu0 %v2461
    %v2532 = vpop.f32.mrf.mxu0
    %v2533 = vadd.f32 0.0, %v2532
    %v2534 = vpop.f32.mrf.mxu0
    %2535 = vmatprep.mubr.f32.mxu0 0.0
    %2536 = vmatmul.mubr.f32.gmra.mxu0 %v2464
    %v2537 = vpop.f32.mrf.mxu0
    %v2538 = vadd.f32 0.0, %v2537
    %v2539 = vpop.f32.mrf.mxu0
    %2540 = vdwg.mxu0
    %v2542 = vsel %vm454, %v2533, 0
    %v2545 = vsel %vm454, %v2538, 0
    %2547 = vmatprep.subr.mxu0 0.0
    %2548 = vmatpush1.msra.mxu0 0.0
    %2549 = vmatprep.subr.mxu0 0.0
    %2550 = vmatpush1.msra.mxu0 0.0
    %2551 = vmatprep.subr.mxu0 0.0
    %2552 = vmatpush1.msra.mxu0 0.0
    %2553 = vmatprep.subr.mxu0 0.0
    %2554 = vmatpush1.msra.mxu0 0.0
    %2555 = vmatprep.subr.mxu0 0.0
    %2556 = vmatpush1.msra.mxu0 0.0
    %2557 = vmatprep.subr.mxu0 0.0
    %2558 = vmatpush1.msra.mxu0 0.0
    %2559 = vmatprep.subr.mxu0 0.0
    %2560 = vmatpush1.msra.mxu0 0.0
    %2561 = vmatprep.subr.mxu0 0.0
    %2562 = vmatpush1.msra.mxu0 0.0
    %2563 = vmatprep.subr.mxu0 0.0
    %2564 = vmatpush1.msra.mxu0 0.0
    %2565 = vmatprep.subr.mxu0 0.0
    %2566 = vmatpush1.msra.mxu0 0.0
    %2567 = vmatprep.subr.mxu0 0.0
    %2568 = vmatpush1.msra.mxu0 0.0
    %2569 = vmatprep.subr.mxu0 0.0
    %2570 = vmatpush1.msra.mxu0 0.0
    %2571 = vmatprep.subr.mxu0 0.0
    %2572 = vmatpush1.msra.mxu0 0.0
    %2573 = vmatprep.subr.mxu0 0.0
    %2574 = vmatpush1.msra.mxu0 0.0
    %2575 = vmatprep.subr.mxu0 0.0
    %2576 = vmatpush1.msra.mxu0 0.0
    %2577 = vmatprep.subr.mxu0 0.0
    %2578 = vmatpush1.msra.mxu0 %v2146
    %2579 = vmatprep.subr.mxu0 0.0
    %2580 = vmatpush2.msra.mxu0 0.0
    %2581 = vmatprep.subr.mxu0 0.0
    %2582 = vmatpush2.msra.mxu0 0.0
    %2583 = vmatprep.subr.mxu0 0.0
    %2584 = vmatpush2.msra.mxu0 0.0
    %2585 = vmatprep.subr.mxu0 0.0
    %2586 = vmatpush2.msra.mxu0 0.0
    %2587 = vmatprep.subr.mxu0 0.0
    %2588 = vmatpush2.msra.mxu0 0.0
    %2589 = vmatprep.subr.mxu0 0.0
    %2590 = vmatpush2.msra.mxu0 0.0
    %2591 = vmatprep.subr.mxu0 0.0
    %2592 = vmatpush2.msra.mxu0 0.0
    %2593 = vmatprep.subr.mxu0 0.0
    %2594 = vmatpush2.msra.mxu0 0.0
    %2595 = vmatprep.subr.mxu0 0.0
    %2596 = vmatpush2.msra.mxu0 0.0
    %2597 = vmatprep.subr.mxu0 0.0
    %2598 = vmatpush2.msra.mxu0 0.0
    %2599 = vmatprep.subr.mxu0 0.0
    %2600 = vmatpush2.msra.mxu0 0.0
    %2601 = vmatprep.subr.mxu0 0.0
    %2602 = vmatpush2.msra.mxu0 0.0
    %2603 = vmatprep.subr.mxu0 0.0
    %2604 = vmatpush2.msra.mxu0 0.0
    %2605 = vmatprep.subr.mxu0 0.0
    %2606 = vmatpush2.msra.mxu0 0.0
    %2607 = vmatprep.subr.mxu0 0.0
    %2608 = vmatpush2.msra.mxu0 0.0
    %2609 = vmatprep.subr.mxu0 0.0
    %2610 = vmatpush2.msra.mxu0 0.0
    %2611 = vmatprep.mubr.f32.mxu0 0.0
    %2612 = vmatmul.mubr.f32.gmra.mxu0 %v2542
    %v2613 = vpop.f32.mrf.mxu0
    %v2614 = vadd.f32 0.0, %v2613
    %v2615 = vpop.f32.mrf.mxu0
    %2616 = vmatprep.mubr.f32.mxu0 0.0
    %2617 = vmatmul.mubr.f32.gmra.mxu0 %v2545
    %v2618 = vpop.f32.mrf.mxu0
    %v2619 = vadd.f32 0.0, %v2618
    %v2620 = vpop.f32.mrf.mxu0
    %2621 = vdwg.mxu0
    %v2623 = vsel %vm454, %v2331, 0
    %v2626 = vsel %vm454, %v2336, 0
    %2628 = vmatprep.subr.mxu0 0.0
    %2629 = vmatpush1.msra.mxu0 0.0
    %2630 = vmatprep.subr.mxu0 0.0
    %2631 = vmatpush1.msra.mxu0 0.0
    %2632 = vmatprep.subr.mxu0 0.0
    %2633 = vmatpush1.msra.mxu0 0.0
    %2634 = vmatprep.subr.mxu0 0.0
    %2635 = vmatpush1.msra.mxu0 0.0
    %2636 = vmatprep.subr.mxu0 0.0
    %2637 = vmatpush1.msra.mxu0 0.0
    %2638 = vmatprep.subr.mxu0 0.0
    %2639 = vmatpush1.msra.mxu0 0.0
    %2640 = vmatprep.subr.mxu0 0.0
    %2641 = vmatpush1.msra.mxu0 0.0
    %2642 = vmatprep.subr.mxu0 0.0
    %2643 = vmatpush1.msra.mxu0 0.0
    %2644 = vmatprep.subr.mxu0 0.0
    %2645 = vmatpush1.msra.mxu0 0.0
    %2646 = vmatprep.subr.mxu0 0.0
    %2647 = vmatpush1.msra.mxu0 0.0
    %2648 = vmatprep.subr.mxu0 0.0
    %2649 = vmatpush1.msra.mxu0 0.0
    %2650 = vmatprep.subr.mxu0 0.0
    %2651 = vmatpush1.msra.mxu0 0.0
    %2652 = vmatprep.subr.mxu0 0.0
    %2653 = vmatpush1.msra.mxu0 0.0
    %2654 = vmatprep.subr.mxu0 0.0
    %2655 = vmatpush1.msra.mxu0 0.0
    %2656 = vmatprep.subr.mxu0 0.0
    %2657 = vmatpush1.msra.mxu0 0.0
    %2658 = vmatprep.subr.mxu0 0.0
    %2659 = vmatpush1.msra.mxu0 %v2145
    %2660 = vmatprep.subr.mxu0 0.0
    %2661 = vmatpush2.msra.mxu0 0.0
    %2662 = vmatprep.subr.mxu0 0.0
    %2663 = vmatpush2.msra.mxu0 0.0
    %2664 = vmatprep.subr.mxu0 0.0
    %2665 = vmatpush2.msra.mxu0 0.0
    %2666 = vmatprep.subr.mxu0 0.0
    %2667 = vmatpush2.msra.mxu0 0.0
    %2668 = vmatprep.subr.mxu0 0.0
    %2669 = vmatpush2.msra.mxu0 0.0
    %2670 = vmatprep.subr.mxu0 0.0
    %2671 = vmatpush2.msra.mxu0 0.0
    %2672 = vmatprep.subr.mxu0 0.0
    %2673 = vmatpush2.msra.mxu0 0.0
    %2674 = vmatprep.subr.mxu0 0.0
    %2675 = vmatpush2.msra.mxu0 0.0
    %2676 = vmatprep.subr.mxu0 0.0
    %2677 = vmatpush2.msra.mxu0 0.0
    %2678 = vmatprep.subr.mxu0 0.0
    %2679 = vmatpush2.msra.mxu0 0.0
    %2680 = vmatprep.subr.mxu0 0.0
    %2681 = vmatpush2.msra.mxu0 0.0
    %2682 = vmatprep.subr.mxu0 0.0
    %2683 = vmatpush2.msra.mxu0 0.0
    %2684 = vmatprep.subr.mxu0 0.0
    %2685 = vmatpush2.msra.mxu0 0.0
    %2686 = vmatprep.subr.mxu0 0.0
    %2687 = vmatpush2.msra.mxu0 0.0
    %2688 = vmatprep.subr.mxu0 0.0
    %2689 = vmatpush2.msra.mxu0 0.0
    %2690 = vmatprep.subr.mxu0 0.0
    %2691 = vmatpush2.msra.mxu0 0.0
    %2692 = vmatprep.mubr.f32.mxu0 0.0
    %2693 = vmatmul.mubr.f32.gmra.mxu0 %v2623
    %v2694 = vpop.f32.mrf.mxu0
    %v2695 = vadd.f32 %v2614, %v2694
    %v2696 = vpop.f32.mrf.mxu0
    %2697 = vmatprep.mubr.f32.mxu0 0.0
    %2698 = vmatmul.mubr.f32.gmra.mxu0 %v2626
    %v2699 = vpop.f32.mrf.mxu0
    %v2700 = vadd.f32 %v2619, %v2699
    %v2701 = vpop.f32.mrf.mxu0
    %2702 = vdwg.mxu0
    %2703 = vrot.lane.b32.xlu0 %v1966, 112
    %v2704 = vpop.permute.xlu0 %2703
    %2705 = vrot.lane.b32.xlu0 %v1967, 112
    %v2706 = vpop.permute.xlu0 %2705
    %2707 = vrot.lane.b32.xlu0 %v2048, 112
    %v2708 = vpop.permute.xlu0 %2707
    %2709 = vrot.lane.b32.xlu0 %v2053, 112
    %v2710 = vpop.permute.xlu0 %2709
    %v2711 = vsel %vm454, %v2704, 0
    %v2713 = vsel %vm454, %v2706, 0
    %v2715 = vsel %vm454, %v2708, 0
    %v2717 = vsel %vm454, %v2710, 0
    %2719 = vmatprep.subr.mxu0 0.0
    %2720 = vmatpush1.xpose.msra.mxu0 0.0
    %2721 = vmatprep.subr.mxu0 0.0
    %2722 = vmatpush1.xpose.msra.mxu0 0.0
    %2723 = vmatprep.subr.mxu0 0.0
    %2724 = vmatpush1.xpose.msra.mxu0 0.0
    %2725 = vmatprep.subr.mxu0 0.0
    %2726 = vmatpush1.xpose.msra.mxu0 0.0
    %2727 = vmatprep.subr.mxu0 0.0
    %2728 = vmatpush1.xpose.msra.mxu0 0.0
    %2729 = vmatprep.subr.mxu0 0.0
    %2730 = vmatpush1.xpose.msra.mxu0 0.0
    %2731 = vmatprep.subr.mxu0 0.0
    %2732 = vmatpush1.xpose.msra.mxu0 0.0
    %2733 = vmatprep.subr.mxu0 0.0
    %2734 = vmatpush1.xpose.msra.mxu0 0.0
    %2735 = vmatprep.subr.mxu0 0.0
    %2736 = vmatpush1.xpose.msra.mxu0 0.0
    %2737 = vmatprep.subr.mxu0 0.0
    %2738 = vmatpush1.xpose.msra.mxu0 0.0
    %2739 = vmatprep.subr.mxu0 0.0
    %2740 = vmatpush1.xpose.msra.mxu0 0.0
    %2741 = vmatprep.subr.mxu0 0.0
    %2742 = vmatpush1.xpose.msra.mxu0 0.0
    %2743 = vmatprep.subr.mxu0 0.0
    %2744 = vmatpush1.xpose.msra.mxu0 0.0
    %2745 = vmatprep.subr.mxu0 0.0
    %2746 = vmatpush1.xpose.msra.mxu0 0.0
    %2747 = vmatprep.subr.mxu0 0.0
    %2748 = vmatpush1.xpose.msra.mxu0 %v2717
    %2749 = vmatprep.subr.mxu0 0.0
    %2750 = vmatpush1.xpose.msra.mxu0 %v2715
    %2751 = vmatprep.subr.mxu0 0.0
    %2752 = vmatpush2.xpose.msra.mxu0 0.0
    %2753 = vmatprep.subr.mxu0 0.0
    %2754 = vmatpush2.xpose.msra.mxu0 0.0
    %2755 = vmatprep.subr.mxu0 0.0
    %2756 = vmatpush2.xpose.msra.mxu0 0.0
    %2757 = vmatprep.subr.mxu0 0.0
    %2758 = vmatpush2.xpose.msra.mxu0 0.0
    %2759 = vmatprep.subr.mxu0 0.0
    %2760 = vmatpush2.xpose.msra.mxu0 0.0
    %2761 = vmatprep.subr.mxu0 0.0
    %2762 = vmatpush2.xpose.msra.mxu0 0.0
    %2763 = vmatprep.subr.mxu0 0.0
    %2764 = vmatpush2.xpose.msra.mxu0 0.0
    %2765 = vmatprep.subr.mxu0 0.0
    %2766 = vmatpush2.xpose.msra.mxu0 0.0
    %2767 = vmatprep.subr.mxu0 0.0
    %2768 = vmatpush2.xpose.msra.mxu0 0.0
    %2769 = vmatprep.subr.mxu0 0.0
    %2770 = vmatpush2.xpose.msra.mxu0 0.0
    %2771 = vmatprep.subr.mxu0 0.0
    %2772 = vmatpush2.xpose.msra.mxu0 0.0
    %2773 = vmatprep.subr.mxu0 0.0
    %2774 = vmatpush2.xpose.msra.mxu0 0.0
    %2775 = vmatprep.subr.mxu0 0.0
    %2776 = vmatpush2.xpose.msra.mxu0 0.0
    %2777 = vmatprep.subr.mxu0 0.0
    %2778 = vmatpush2.xpose.msra.mxu0 0.0
    %2779 = vmatprep.subr.mxu0 0.0
    %2780 = vmatpush2.xpose.msra.mxu0 0.0
    %2781 = vmatprep.subr.mxu0 0.0
    %2782 = vmatpush2.xpose.msra.mxu0 0.0
    %2783 = vmatprep.mubr.f32.mxu0 0.0
    %2784 = vmatmul.mubr.f32.gmra.mxu0 %v2711
    %v2785 = vpop.f32.mrf.mxu0
    %v2786 = vadd.f32 %v136, %v2785
    %v2787 = vpop.f32.mrf.mxu0
    %2788 = vmatprep.mubr.f32.mxu0 0.0
    %2789 = vmatmul.mubr.f32.gmra.mxu0 %v2713
    %v2790 = vpop.f32.mrf.mxu0
    %v2791 = vadd.f32 %v137, %v2790
    %v2792 = vpop.f32.mrf.mxu0
    %2793 = vdwg.mxu0
    %v2794 = vsel %vm542, %v2786, -inf
    %2795 = vmax.xlane.f32.xlu0 %v2794
    %v2796 = vpop.xlane.xlu0 %2795
    %v2797 = vsel %vm542, %v2791, -inf
    %2798 = vmax.xlane.f32.xlu0 %v2797
    %v2799 = vpop.xlane.xlu0 %2798
    %v2800 = vsub.f32 %v2786, %v2796
    %v2801 = vsub.f32 %v2791, %v2799
    %v2802 = vmul.f32 %v2800, 1.442695
    %v2803 = vpow.pop %v2802
    %v2804 = vmul.f32 %v2801, 1.442695
    %v2805 = vpow.pop %v2804
    %v2806 = vsel %vm542, %v2803, 0.0
    %2807 = vadd.xlane.f32.xlu0 %v2806
    %v2808 = vpop.xlane.xlu0 %2807
    %v2809 = vsel %vm542, %v2805, 0.0
    %2810 = vadd.xlane.f32.xlu0 %v2809
    %v2811 = vpop.xlane.xlu0 %2810
    %v2812 = vrcp.pop %v2808
    %v2813 = vrcp.pop %v2811
    %v2814 = vmul.f32 %v2803, %v2812
    %v2815 = vmul.f32 %v2805, %v2813
    %2816 = vrot.lane.b32.xlu0 %v2136, 112
    %v2817 = vpop.permute.xlu0 %2816
    %2818 = vrot.lane.b32.xlu0 %v2141, 112
    %v2819 = vpop.permute.xlu0 %2818
    %v2823 = vsel %vm542, %v2814, 0
    %v2826 = vsel %vm542, %v2815, 0
    %2828 = vmatprep.subr.mxu0 0.0
    %2829 = vmatpush1.msra.mxu0 0.0
    %2830 = vmatprep.subr.mxu0 0.0
    %2831 = vmatpush1.msra.mxu0 0.0
    %2832 = vmatprep.subr.mxu0 0.0
    %2833 = vmatpush1.msra.mxu0 0.0
    %2834 = vmatprep.subr.mxu0 0.0
    %2835 = vmatpush1.msra.mxu0 0.0
    %2836 = vmatprep.subr.mxu0 0.0
    %2837 = vmatpush1.msra.mxu0 0.0
    %2838 = vmatprep.subr.mxu0 0.0
    %2839 = vmatpush1.msra.mxu0 0.0
    %2840 = vmatprep.subr.mxu0 0.0
    %2841 = vmatpush1.msra.mxu0 0.0
    %2842 = vmatprep.subr.mxu0 0.0
    %2843 = vmatpush1.msra.mxu0 0.0
    %2844 = vmatprep.subr.mxu0 0.0
    %2845 = vmatpush1.msra.mxu0 0.0
    %2846 = vmatprep.subr.mxu0 0.0
    %2847 = vmatpush1.msra.mxu0 0.0
    %2848 = vmatprep.subr.mxu0 0.0
    %2849 = vmatpush1.msra.mxu0 0.0
    %2850 = vmatprep.subr.mxu0 0.0
    %2851 = vmatpush1.msra.mxu0 0.0
    %2852 = vmatprep.subr.mxu0 0.0
    %2853 = vmatpush1.msra.mxu0 0.0
    %2854 = vmatprep.subr.mxu0 0.0
    %2855 = vmatpush1.msra.mxu0 0.0
    %2856 = vmatprep.subr.mxu0 0.0
    %2857 = vmatpush1.msra.mxu0 %v2819
    %2858 = vmatprep.subr.mxu0 0.0
    %2859 = vmatpush1.msra.mxu0 %v2817
    %2860 = vmatprep.subr.mxu0 0.0
    %2861 = vmatpush2.msra.mxu0 0.0
    %2862 = vmatprep.subr.mxu0 0.0
    %2863 = vmatpush2.msra.mxu0 0.0
    %2864 = vmatprep.subr.mxu0 0.0
    %2865 = vmatpush2.msra.mxu0 0.0
    %2866 = vmatprep.subr.mxu0 0.0
    %2867 = vmatpush2.msra.mxu0 0.0
    %2868 = vmatprep.subr.mxu0 0.0
    %2869 = vmatpush2.msra.mxu0 0.0
    %2870 = vmatprep.subr.mxu0 0.0
    %2871 = vmatpush2.msra.mxu0 0.0
    %2872 = vmatprep.subr.mxu0 0.0
    %2873 = vmatpush2.msra.mxu0 0.0
    %2874 = vmatprep.subr.mxu0 0.0
    %2875 = vmatpush2.msra.mxu0 0.0
    %2876 = vmatprep.subr.mxu0 0.0
    %2877 = vmatpush2.msra.mxu0 0.0
    %2878 = vmatprep.subr.mxu0 0.0
    %2879 = vmatpush2.msra.mxu0 0.0
    %2880 = vmatprep.subr.mxu0 0.0
    %2881 = vmatpush2.msra.mxu0 0.0
    %2882 = vmatprep.subr.mxu0 0.0
    %2883 = vmatpush2.msra.mxu0 0.0
    %2884 = vmatprep.subr.mxu0 0.0
    %2885 = vmatpush2.msra.mxu0 0.0
    %2886 = vmatprep.subr.mxu0 0.0
    %2887 = vmatpush2.msra.mxu0 0.0
    %2888 = vmatprep.subr.mxu0 0.0
    %2889 = vmatpush2.msra.mxu0 0.0
    %2890 = vmatprep.subr.mxu0 0.0
    %2891 = vmatpush2.msra.mxu0 0.0
    %2892 = vmatprep.mubr.f32.mxu0 0.0
    %2893 = vmatmul.mubr.f32.gmra.mxu0 %v2823
    %v2894 = vpop.f32.mrf.mxu0
    %v2895 = vadd.f32 0.0, %v2894
    %v2896 = vpop.f32.mrf.mxu0
    %2897 = vmatprep.mubr.f32.mxu0 0.0
    %2898 = vmatmul.mubr.f32.gmra.mxu0 %v2826
    %v2899 = vpop.f32.mrf.mxu0
    %v2900 = vadd.f32 0.0, %v2899
    %v2901 = vpop.f32.mrf.mxu0
    %2902 = vdwg.mxu0
    %v2904 = vsel %vm454, %v2895, 0
    %v2907 = vsel %vm454, %v2900, 0
    %2909 = vmatprep.subr.mxu0 0.0
    %2910 = vmatpush1.msra.mxu0 0.0
    %2911 = vmatprep.subr.mxu0 0.0
    %2912 = vmatpush1.msra.mxu0 0.0
    %2913 = vmatprep.subr.mxu0 0.0
    %2914 = vmatpush1.msra.mxu0 0.0
    %2915 = vmatprep.subr.mxu0 0.0
    %2916 = vmatpush1.msra.mxu0 0.0
    %2917 = vmatprep.subr.mxu0 0.0
    %2918 = vmatpush1.msra.mxu0 0.0
    %2919 = vmatprep.subr.mxu0 0.0
    %2920 = vmatpush1.msra.mxu0 0.0
    %2921 = vmatprep.subr.mxu0 0.0
    %2922 = vmatpush1.msra.mxu0 0.0
    %2923 = vmatprep.subr.mxu0 0.0
    %2924 = vmatpush1.msra.mxu0 0.0
    %2925 = vmatprep.subr.mxu0 0.0
    %2926 = vmatpush1.msra.mxu0 0.0
    %2927 = vmatprep.subr.mxu0 0.0
    %2928 = vmatpush1.msra.mxu0 0.0
    %2929 = vmatprep.subr.mxu0 0.0
    %2930 = vmatpush1.msra.mxu0 0.0
    %2931 = vmatprep.subr.mxu0 0.0
    %2932 = vmatpush1.msra.mxu0 0.0
    %2933 = vmatprep.subr.mxu0 0.0
    %2934 = vmatpush1.msra.mxu0 0.0
    %2935 = vmatprep.subr.mxu0 0.0
    %2936 = vmatpush1.msra.mxu0 0.0
    %2937 = vmatprep.subr.mxu0 0.0
    %2938 = vmatpush1.msra.mxu0 0.0
    %2939 = vmatprep.subr.mxu0 0.0
    %2940 = vmatpush1.msra.mxu0 %v2147
    %2941 = vmatprep.subr.mxu0 0.0
    %2942 = vmatpush2.msra.mxu0 0.0
    %2943 = vmatprep.subr.mxu0 0.0
    %2944 = vmatpush2.msra.mxu0 0.0
    %2945 = vmatprep.subr.mxu0 0.0
    %2946 = vmatpush2.msra.mxu0 0.0
    %2947 = vmatprep.subr.mxu0 0.0
    %2948 = vmatpush2.msra.mxu0 0.0
    %2949 = vmatprep.subr.mxu0 0.0
    %2950 = vmatpush2.msra.mxu0 0.0
    %2951 = vmatprep.subr.mxu0 0.0
    %2952 = vmatpush2.msra.mxu0 0.0
    %2953 = vmatprep.subr.mxu0 0.0
    %2954 = vmatpush2.msra.mxu0 0.0
    %2955 = vmatprep.subr.mxu0 0.0
    %2956 = vmatpush2.msra.mxu0 0.0
    %2957 = vmatprep.subr.mxu0 0.0
    %2958 = vmatpush2.msra.mxu0 0.0
    %2959 = vmatprep.subr.mxu0 0.0
    %2960 = vmatpush2.msra.mxu0 0.0
    %2961 = vmatprep.subr.mxu0 0.0
    %2962 = vmatpush2.msra.mxu0 0.0
    %2963 = vmatprep.subr.mxu0 0.0
    %2964 = vmatpush2.msra.mxu0 0.0
    %2965 = vmatprep.subr.mxu0 0.0
    %2966 = vmatpush2.msra.mxu0 0.0
    %2967 = vmatprep.subr.mxu0 0.0
    %2968 = vmatpush2.msra.mxu0 0.0
    %2969 = vmatprep.subr.mxu0 0.0
    %2970 = vmatpush2.msra.mxu0 0.0
    %2971 = vmatprep.subr.mxu0 0.0
    %2972 = vmatpush2.msra.mxu0 0.0
    %2973 = vmatprep.mubr.f32.mxu0 0.0
    %2974 = vmatmul.mubr.f32.gmra.mxu0 %v2904
    %v2975 = vpop.f32.mrf.mxu0
    %v2976 = vadd.f32 0.0, %v2975
    %v2977 = vpop.f32.mrf.mxu0
    %2978 = vmatprep.mubr.f32.mxu0 0.0
    %2979 = vmatmul.mubr.f32.gmra.mxu0 %v2907
    %v2980 = vpop.f32.mrf.mxu0
    %v2981 = vadd.f32 0.0, %v2980
    %v2982 = vpop.f32.mrf.mxu0
    %2983 = vdwg.mxu0
    %v2984 = vadd.f32 %v2695, %v2976
    %v2985 = vadd.f32 %v2700, %v2981
    %2986 = vrot.lane.b32.xlu0 %v1966, 104
    %v2987 = vpop.permute.xlu0 %2986
    %2988 = vrot.lane.b32.xlu0 %v1967, 104
    %v2989 = vpop.permute.xlu0 %2988
    %2990 = vrot.lane.b32.xlu0 %v2048, 104
    %v2991 = vpop.permute.xlu0 %2990
    %2992 = vrot.lane.b32.xlu0 %v2053, 104
    %v2993 = vpop.permute.xlu0 %2992
    %v2994 = vsel %vm454, %v2987, 0
    %v2996 = vsel %vm454, %v2989, 0
    %v2998 = vsel %vm454, %v2991, 0
    %v3000 = vsel %vm454, %v2993, 0
    %3002 = vmatprep.subr.mxu0 0.0
    %3003 = vmatpush1.xpose.msra.mxu0 0.0
    %3004 = vmatprep.subr.mxu0 0.0
    %3005 = vmatpush1.xpose.msra.mxu0 0.0
    %3006 = vmatprep.subr.mxu0 0.0
    %3007 = vmatpush1.xpose.msra.mxu0 0.0
    %3008 = vmatprep.subr.mxu0 0.0
    %3009 = vmatpush1.xpose.msra.mxu0 0.0
    %3010 = vmatprep.subr.mxu0 0.0
    %3011 = vmatpush1.xpose.msra.mxu0 0.0
    %3012 = vmatprep.subr.mxu0 0.0
    %3013 = vmatpush1.xpose.msra.mxu0 0.0
    %3014 = vmatprep.subr.mxu0 0.0
    %3015 = vmatpush1.xpose.msra.mxu0 0.0
    %3016 = vmatprep.subr.mxu0 0.0
    %3017 = vmatpush1.xpose.msra.mxu0 0.0
    %3018 = vmatprep.subr.mxu0 0.0
    %3019 = vmatpush1.xpose.msra.mxu0 0.0
    %3020 = vmatprep.subr.mxu0 0.0
    %3021 = vmatpush1.xpose.msra.mxu0 0.0
    %3022 = vmatprep.subr.mxu0 0.0
    %3023 = vmatpush1.xpose.msra.mxu0 0.0
    %3024 = vmatprep.subr.mxu0 0.0
    %3025 = vmatpush1.xpose.msra.mxu0 0.0
    %3026 = vmatprep.subr.mxu0 0.0
    %3027 = vmatpush1.xpose.msra.mxu0 0.0
    %3028 = vmatprep.subr.mxu0 0.0
    %3029 = vmatpush1.xpose.msra.mxu0 0.0
    %3030 = vmatprep.subr.mxu0 0.0
    %3031 = vmatpush1.xpose.msra.mxu0 %v3000
    %3032 = vmatprep.subr.mxu0 0.0
    %3033 = vmatpush1.xpose.msra.mxu0 %v2998
    %3034 = vmatprep.subr.mxu0 0.0
    %3035 = vmatpush2.xpose.msra.mxu0 0.0
    %3036 = vmatprep.subr.mxu0 0.0
    %3037 = vmatpush2.xpose.msra.mxu0 0.0
    %3038 = vmatprep.subr.mxu0 0.0
    %3039 = vmatpush2.xpose.msra.mxu0 0.0
    %3040 = vmatprep.subr.mxu0 0.0
    %3041 = vmatpush2.xpose.msra.mxu0 0.0
    %3042 = vmatprep.subr.mxu0 0.0
    %3043 = vmatpush2.xpose.msra.mxu0 0.0
    %3044 = vmatprep.subr.mxu0 0.0
    %3045 = vmatpush2.xpose.msra.mxu0 0.0
    %3046 = vmatprep.subr.mxu0 0.0
    %3047 = vmatpush2.xpose.msra.mxu0 0.0
    %3048 = vmatprep.subr.mxu0 0.0
    %3049 = vmatpush2.xpose.msra.mxu0 0.0
    %3050 = vmatprep.subr.mxu0 0.0
    %3051 = vmatpush2.xpose.msra.mxu0 0.0
    %3052 = vmatprep.subr.mxu0 0.0
    %3053 = vmatpush2.xpose.msra.mxu0 0.0
    %3054 = vmatprep.subr.mxu0 0.0
    %3055 = vmatpush2.xpose.msra.mxu0 0.0
    %3056 = vmatprep.subr.mxu0 0.0
    %3057 = vmatpush2.xpose.msra.mxu0 0.0
    %3058 = vmatprep.subr.mxu0 0.0
    %3059 = vmatpush2.xpose.msra.mxu0 0.0
    %3060 = vmatprep.subr.mxu0 0.0
    %3061 = vmatpush2.xpose.msra.mxu0 0.0
    %3062 = vmatprep.subr.mxu0 0.0
    %3063 = vmatpush2.xpose.msra.mxu0 0.0
    %3064 = vmatprep.subr.mxu0 0.0
    %3065 = vmatpush2.xpose.msra.mxu0 0.0
    %3066 = vmatprep.mubr.f32.mxu0 0.0
    %3067 = vmatmul.mubr.f32.gmra.mxu0 %v2994
    %v3068 = vpop.f32.mrf.mxu0
    %v3069 = vadd.f32 %v136, %v3068
    %v3070 = vpop.f32.mrf.mxu0
    %3071 = vmatprep.mubr.f32.mxu0 0.0
    %3072 = vmatmul.mubr.f32.gmra.mxu0 %v2996
    %v3073 = vpop.f32.mrf.mxu0
    %v3074 = vadd.f32 %v137, %v3073
    %v3075 = vpop.f32.mrf.mxu0
    %3076 = vdwg.mxu0
    %v3077 = vsel %vm542, %v3069, -inf
    %3078 = vmax.xlane.f32.xlu0 %v3077
    %v3079 = vpop.xlane.xlu0 %3078
    %v3080 = vsel %vm542, %v3074, -inf
    %3081 = vmax.xlane.f32.xlu0 %v3080
    %v3082 = vpop.xlane.xlu0 %3081
    %v3083 = vsub.f32 %v3069, %v3079
    %v3084 = vsub.f32 %v3074, %v3082
    %v3085 = vmul.f32 %v3083, 1.442695
    %v3086 = vpow.pop %v3085
    %v3087 = vmul.f32 %v3084, 1.442695
    %v3088 = vpow.pop %v3087
    %v3089 = vsel %vm542, %v3086, 0.0
    %3090 = vadd.xlane.f32.xlu0 %v3089
    %v3091 = vpop.xlane.xlu0 %3090
    %v3092 = vsel %vm542, %v3088, 0.0
    %3093 = vadd.xlane.f32.xlu0 %v3092
    %v3094 = vpop.xlane.xlu0 %3093
    %v3095 = vrcp.pop %v3091
    %v3096 = vrcp.pop %v3094
    %v3097 = vmul.f32 %v3086, %v3095
    %v3098 = vmul.f32 %v3088, %v3096
    %3099 = vrot.lane.b32.xlu0 %v2136, 104
    %v3100 = vpop.permute.xlu0 %3099
    %3101 = vrot.lane.b32.xlu0 %v2141, 104
    %v3102 = vpop.permute.xlu0 %3101
    %v3106 = vsel %vm542, %v3097, 0
    %v3109 = vsel %vm542, %v3098, 0
    %3111 = vmatprep.subr.mxu0 0.0
    %3112 = vmatpush1.msra.mxu0 0.0
    %3113 = vmatprep.subr.mxu0 0.0
    %3114 = vmatpush1.msra.mxu0 0.0
    %3115 = vmatprep.subr.mxu0 0.0
    %3116 = vmatpush1.msra.mxu0 0.0
    %3117 = vmatprep.subr.mxu0 0.0
    %3118 = vmatpush1.msra.mxu0 0.0
    %3119 = vmatprep.subr.mxu0 0.0
    %3120 = vmatpush1.msra.mxu0 0.0
    %3121 = vmatprep.subr.mxu0 0.0
    %3122 = vmatpush1.msra.mxu0 0.0
    %3123 = vmatprep.subr.mxu0 0.0
    %3124 = vmatpush1.msra.mxu0 0.0
    %3125 = vmatprep.subr.mxu0 0.0
    %3126 = vmatpush1.msra.mxu0 0.0
    %3127 = vmatprep.subr.mxu0 0.0
    %3128 = vmatpush1.msra.mxu0 0.0
    %3129 = vmatprep.subr.mxu0 0.0
    %3130 = vmatpush1.msra.mxu0 0.0
    %3131 = vmatprep.subr.mxu0 0.0
    %3132 = vmatpush1.msra.mxu0 0.0
    %3133 = vmatprep.subr.mxu0 0.0
    %3134 = vmatpush1.msra.mxu0 0.0
    %3135 = vmatprep.subr.mxu0 0.0
    %3136 = vmatpush1.msra.mxu0 0.0
    %3137 = vmatprep.subr.mxu0 0.0
    %3138 = vmatpush1.msra.mxu0 0.0
    %3139 = vmatprep.subr.mxu0 0.0
    %3140 = vmatpush1.msra.mxu0 %v3102
    %3141 = vmatprep.subr.mxu0 0.0
    %3142 = vmatpush1.msra.mxu0 %v3100
    %3143 = vmatprep.subr.mxu0 0.0
    %3144 = vmatpush2.msra.mxu0 0.0
    %3145 = vmatprep.subr.mxu0 0.0
    %3146 = vmatpush2.msra.mxu0 0.0
    %3147 = vmatprep.subr.mxu0 0.0
    %3148 = vmatpush2.msra.mxu0 0.0
    %3149 = vmatprep.subr.mxu0 0.0
    %3150 = vmatpush2.msra.mxu0 0.0
    %3151 = vmatprep.subr.mxu0 0.0
    %3152 = vmatpush2.msra.mxu0 0.0
    %3153 = vmatprep.subr.mxu0 0.0
    %3154 = vmatpush2.msra.mxu0 0.0
    %3155 = vmatprep.subr.mxu0 0.0
    %3156 = vmatpush2.msra.mxu0 0.0
    %3157 = vmatprep.subr.mxu0 0.0
    %3158 = vmatpush2.msra.mxu0 0.0
    %3159 = vmatprep.subr.mxu0 0.0
    %3160 = vmatpush2.msra.mxu0 0.0
    %3161 = vmatprep.subr.mxu0 0.0
    %3162 = vmatpush2.msra.mxu0 0.0
    %3163 = vmatprep.subr.mxu0 0.0
    %3164 = vmatpush2.msra.mxu0 0.0
    %3165 = vmatprep.subr.mxu0 0.0
    %3166 = vmatpush2.msra.mxu0 0.0
    %3167 = vmatprep.subr.mxu0 0.0
    %3168 = vmatpush2.msra.mxu0 0.0
    %3169 = vmatprep.subr.mxu0 0.0
    %3170 = vmatpush2.msra.mxu0 0.0
    %3171 = vmatprep.subr.mxu0 0.0
    %3172 = vmatpush2.msra.mxu0 0.0
    %3173 = vmatprep.subr.mxu0 0.0
    %3174 = vmatpush2.msra.mxu0 0.0
    %3175 = vmatprep.mubr.f32.mxu0 0.0
    %3176 = vmatmul.mubr.f32.gmra.mxu0 %v3106
    %v3177 = vpop.f32.mrf.mxu0
    %v3178 = vadd.f32 0.0, %v3177
    %v3179 = vpop.f32.mrf.mxu0
    %3180 = vmatprep.mubr.f32.mxu0 0.0
    %3181 = vmatmul.mubr.f32.gmra.mxu0 %v3109
    %v3182 = vpop.f32.mrf.mxu0
    %v3183 = vadd.f32 0.0, %v3182
    %v3184 = vpop.f32.mrf.mxu0
    %3185 = vdwg.mxu0
    %v3187 = vsel %vm454, %v3178, 0
    %v3190 = vsel %vm454, %v3183, 0
    %3192 = vmatprep.subr.mxu0 0.0
    %3193 = vmatpush1.msra.mxu0 0.0
    %3194 = vmatprep.subr.mxu0 0.0
    %3195 = vmatpush1.msra.mxu0 0.0
    %3196 = vmatprep.subr.mxu0 0.0
    %3197 = vmatpush1.msra.mxu0 0.0
    %3198 = vmatprep.subr.mxu0 0.0
    %3199 = vmatpush1.msra.mxu0 0.0
    %3200 = vmatprep.subr.mxu0 0.0
    %3201 = vmatpush1.msra.mxu0 0.0
    %3202 = vmatprep.subr.mxu0 0.0
    %3203 = vmatpush1.msra.mxu0 0.0
    %3204 = vmatprep.subr.mxu0 0.0
    %3205 = vmatpush1.msra.mxu0 0.0
    %3206 = vmatprep.subr.mxu0 0.0
    %3207 = vmatpush1.msra.mxu0 0.0
    %3208 = vmatprep.subr.mxu0 0.0
    %3209 = vmatpush1.msra.mxu0 0.0
    %3210 = vmatprep.subr.mxu0 0.0
    %3211 = vmatpush1.msra.mxu0 0.0
    %3212 = vmatprep.subr.mxu0 0.0
    %3213 = vmatpush1.msra.mxu0 0.0
    %3214 = vmatprep.subr.mxu0 0.0
    %3215 = vmatpush1.msra.mxu0 0.0
    %3216 = vmatprep.subr.mxu0 0.0
    %3217 = vmatpush1.msra.mxu0 0.0
    %3218 = vmatprep.subr.mxu0 0.0
    %3219 = vmatpush1.msra.mxu0 0.0
    %3220 = vmatprep.subr.mxu0 0.0
    %3221 = vmatpush1.msra.mxu0 0.0
    %3222 = vmatprep.subr.mxu0 0.0
    %3223 = vmatpush1.msra.mxu0 %v2148
    %3224 = vmatprep.subr.mxu0 0.0
    %3225 = vmatpush2.msra.mxu0 0.0
    %3226 = vmatprep.subr.mxu0 0.0
    %3227 = vmatpush2.msra.mxu0 0.0
    %3228 = vmatprep.subr.mxu0 0.0
    %3229 = vmatpush2.msra.mxu0 0.0
    %3230 = vmatprep.subr.mxu0 0.0
    %3231 = vmatpush2.msra.mxu0 0.0
    %3232 = vmatprep.subr.mxu0 0.0
    %3233 = vmatpush2.msra.mxu0 0.0
    %3234 = vmatprep.subr.mxu0 0.0
    %3235 = vmatpush2.msra.mxu0 0.0
    %3236 = vmatprep.subr.mxu0 0.0
    %3237 = vmatpush2.msra.mxu0 0.0
    %3238 = vmatprep.subr.mxu0 0.0
    %3239 = vmatpush2.msra.mxu0 0.0
    %3240 = vmatprep.subr.mxu0 0.0
    %3241 = vmatpush2.msra.mxu0 0.0
    %3242 = vmatprep.subr.mxu0 0.0
    %3243 = vmatpush2.msra.mxu0 0.0
    %3244 = vmatprep.subr.mxu0 0.0
    %3245 = vmatpush2.msra.mxu0 0.0
    %3246 = vmatprep.subr.mxu0 0.0
    %3247 = vmatpush2.msra.mxu0 0.0
    %3248 = vmatprep.subr.mxu0 0.0
    %3249 = vmatpush2.msra.mxu0 0.0
    %3250 = vmatprep.subr.mxu0 0.0
    %3251 = vmatpush2.msra.mxu0 0.0
    %3252 = vmatprep.subr.mxu0 0.0
    %3253 = vmatpush2.msra.mxu0 0.0
    %3254 = vmatprep.subr.mxu0 0.0
    %3255 = vmatpush2.msra.mxu0 0.0
    %3256 = vmatprep.mubr.f32.mxu0 0.0
    %3257 = vmatmul.mubr.f32.gmra.mxu0 %v3187
    %v3258 = vpop.f32.mrf.mxu0
    %v3259 = vadd.f32 0.0, %v3258
    %v3260 = vpop.f32.mrf.mxu0
    %3261 = vmatprep.mubr.f32.mxu0 0.0
    %3262 = vmatmul.mubr.f32.gmra.mxu0 %v3190
    %v3263 = vpop.f32.mrf.mxu0
    %v3264 = vadd.f32 0.0, %v3263
    %v3265 = vpop.f32.mrf.mxu0
    %3266 = vdwg.mxu0
    %v3267 = vadd.f32 %v2984, %v3259
    %v3268 = vadd.f32 %v2985, %v3264
    %v3269 = vadd.f32 %v1824, %v3267
    %v3270 = vadd.f32 %v1825, %v3268
    %s3271 = scalar_lea.vmem %s11, 1
    %v3272 = vld [vmem:[%s3271] sm:$0x1]
    %v3274 = vlaneseq
    %v3275 = vshrl.u32 %v3274, 7
    %v3276 = vsub.s32 0, %v3275
    %v3277 = vrot.slane %v3272, %v3276
    %v3279 = vadd.f32 %v3269, %v3277
    %v3280 = vadd.f32 %v3270, %v3277
    %s3281 = scalar_lea.vmem %s12, 1
    %v3282 = vld [vmem:[%s3281] sm:$0x1]
    %s3283 = scalar_lea.vmem %s13, 1
    %v3284 = vld [vmem:[%s3283] sm:$0x1]
    %v3285 = vsel %vm140, %v3279, 0.0
    %3286 = vadd.xlane.f32.xlu0 %v3285
    %v3287 = vpop.xlane.xlu0 %3286
    %v3288 = vsel %vm140, %v3280, 0.0
    %3289 = vadd.xlane.f32.xlu0 %v3288
    %v3290 = vpop.xlane.xlu0 %3289
    %v3291 = vmul.f32 %v3287, %v147
    %v3292 = vmul.f32 %v3290, %v147
    %v3293 = vsub.f32 %v3279, %v3291
    %v3294 = vsub.f32 %v3280, %v3292
    %v3295 = vmul.f32 %v3293, %v3293
    %v3296 = vmul.f32 %v3294, %v3294
    %v3297 = vsel %vm140, %v3295, 0.0
    %3298 = vadd.xlane.f32.xlu0 %v3297
    %v3299 = vpop.xlane.xlu0 %3298
    %v3300 = vsel %vm140, %v3296, 0.0
    %3301 = vadd.xlane.f32.xlu0 %v3300
    %v3302 = vpop.xlane.xlu0 %3301
    %v3303 = vmul.f32 %v3299, %v147
    %v3304 = vmul.f32 %v3302, %v147
    %v3305 = vadd.f32 %v3303, 1e-06
    %v3306 = vadd.f32 %v3304, 1e-06
    %v3307 = vrsqrt.pop %v3305
    %v3308 = vrsqrt.pop %v3306
    %v3309 = vmul.f32 %v3293, %v3307
    %v3310 = vmul.f32 %v3294, %v3308
    %v3312 = vlaneseq
    %v3313 = vshrl.u32 %v3312, 7
    %v3314 = vsub.s32 0, %v3313
    %v3315 = vrot.slane %v3282, %v3314
    %v3317 = vmul.f32 %v3309, %v3315
    %v3318 = vmul.f32 %v3310, %v3315
    %v3320 = vlaneseq
    %v3321 = vshrl.u32 %v3320, 7
    %v3322 = vsub.s32 0, %v3321
    %v3323 = vrot.slane %v3284, %v3322
    %v3325 = vadd.f32 %v3317, %v3323
    %v3326 = vadd.f32 %v3318, %v3323
    %s3327 = scalar_lea.vmem [#allocation10], 32
    %v3328 = vld [vmem:[%s3327] sm:$0xff]
    %v3329 = vld [vmem:[%s3327 + $0x8] sm:$0xff]
    %v3330 = vld [vmem:[%s3327 + $0x10] sm:$0xff]
    %v3331 = vld [vmem:[%s3327 + $0x18] sm:$0xff]
    %s3332 = scalar_lea.vmem %s15, 1
    %v3333 = vld [vmem:[%s3332] sm:$0x1]
    %v3335 = vlaneseq
    %v3336 = vshrl.u32 %v3335, 7
    %v3337 = vsub.s32 0, %v3336
    %v3338 = vrot.slane %v3333, %v3337
    %v3341 = vsel %vm140, %v3325, 0
    %v3344 = vsel %vm140, %v3326, 0
    %3346 = vmatprep.subr.mxu0 0.0
    %3347 = vmatpush1.msra.mxu0 0.0
    %3348 = vmatprep.subr.mxu0 0.0
    %3349 = vmatpush1.msra.mxu0 0.0
    %3350 = vmatprep.subr.mxu0 0.0
    %3351 = vmatpush1.msra.mxu0 0.0
    %3352 = vmatprep.subr.mxu0 0.0
    %3353 = vmatpush1.msra.mxu0 0.0
    %3354 = vmatprep.subr.mxu0 0.0
    %3355 = vmatpush1.msra.mxu0 0.0
    %3356 = vmatprep.subr.mxu0 0.0
    %3357 = vmatpush1.msra.mxu0 0.0
    %3358 = vmatprep.subr.mxu0 0.0
    %3359 = vmatpush1.msra.mxu0 0.0
    %3360 = vmatprep.subr.mxu0 0.0
    %3361 = vmatpush1.msra.mxu0 0.0
    %3362 = vmatprep.subr.mxu0 0.0
    %3363 = vmatpush1.msra.mxu0 0.0
    %3364 = vmatprep.subr.mxu0 0.0
    %3365 = vmatpush1.msra.mxu0 0.0
    %3366 = vmatprep.subr.mxu0 0.0
    %3367 = vmatpush1.msra.mxu0 0.0
    %3368 = vmatprep.subr.mxu0 0.0
    %3369 = vmatpush1.msra.mxu0 0.0
    %3370 = vmatprep.subr.mxu0 0.0
    %3371 = vmatpush1.msra.mxu0 %v3331
    %3372 = vmatprep.subr.mxu0 0.0
    %3373 = vmatpush1.msra.mxu0 %v3330
    %3374 = vmatprep.subr.mxu0 0.0
    %3375 = vmatpush1.msra.mxu0 %v3329
    %3376 = vmatprep.subr.mxu0 0.0
    %3377 = vmatpush1.msra.mxu0 %v3328
    %3378 = vmatprep.subr.mxu0 0.0
    %3379 = vmatpush2.msra.mxu0 0.0
    %3380 = vmatprep.subr.mxu0 0.0
    %3381 = vmatpush2.msra.mxu0 0.0
    %3382 = vmatprep.subr.mxu0 0.0
    %3383 = vmatpush2.msra.mxu0 0.0
    %3384 = vmatprep.subr.mxu0 0.0
    %3385 = vmatpush2.msra.mxu0 0.0
    %3386 = vmatprep.subr.mxu0 0.0
    %3387 = vmatpush2.msra.mxu0 0.0
    %3388 = vmatprep.subr.mxu0 0.0
    %3389 = vmatpush2.msra.mxu0 0.0
    %3390 = vmatprep.subr.mxu0 0.0
    %3391 = vmatpush2.msra.mxu0 0.0
    %3392 = vmatprep.subr.mxu0 0.0
    %3393 = vmatpush2.msra.mxu0 0.0
    %3394 = vmatprep.subr.mxu0 0.0
    %3395 = vmatpush2.msra.mxu0 0.0
    %3396 = vmatprep.subr.mxu0 0.0
    %3397 = vmatpush2.msra.mxu0 0.0
    %3398 = vmatprep.subr.mxu0 0.0
    %3399 = vmatpush2.msra.mxu0 0.0
    %3400 = vmatprep.subr.mxu0 0.0
    %3401 = vmatpush2.msra.mxu0 0.0
    %3402 = vmatprep.subr.mxu0 0.0
    %3403 = vmatpush2.msra.mxu0 0.0
    %3404 = vmatprep.subr.mxu0 0.0
    %3405 = vmatpush2.msra.mxu0 0.0
    %3406 = vmatprep.subr.mxu0 0.0
    %3407 = vmatpush2.msra.mxu0 0.0
    %3408 = vmatprep.subr.mxu0 0.0
    %3409 = vmatpush2.msra.mxu0 0.0
    %3410 = vmatprep.mubr.f32.mxu0 0.0
    %3411 = vmatmul.mubr.f32.gmra.mxu0 %v3341
    %v3412 = vpop.f32.mrf.mxu0
    %v3413 = vadd.f32 %v3338, %v3412
    %v3414 = vpop.f32.mrf.mxu0
    %3415 = vmatprep.mubr.f32.mxu0 0.0
    %3416 = vmatmul.mubr.f32.gmra.mxu0 %v3344
    %v3417 = vpop.f32.mrf.mxu0
    %v3418 = vadd.f32 %v3338, %v3417
    %v3419 = vpop.f32.mrf.mxu0
    %3420 = vdwg.mxu0
    %v3421 = vmax.f32 %v3413, 0.0
    %v3422 = vmax.f32 %v3418, 0.0
    %s3423 = scalar_lea.vmem %s16, 64
    %v3424 = vld [vmem:[%s3423] sm:$0xff]
    %v3425 = vld [vmem:[%s3423 + $0x8] sm:$0xff]
    %v3426 = vld [vmem:[%s3423 + $0x10] sm:$0xff]
    %v3427 = vld [vmem:[%s3423 + $0x18] sm:$0xff]
    %v3428 = vld [vmem:[%s3423 + $0x20] sm:$0xff]
    %v3429 = vld [vmem:[%s3423 + $0x28] sm:$0xff]
    %v3430 = vld [vmem:[%s3423 + $0x30] sm:$0xff]
    %v3431 = vld [vmem:[%s3423 + $0x38] sm:$0xff]
    %v3433 = vsel %vm1733, %v3421, 0
    %v3436 = vsel %vm1733, %v3422, 0
    %3438 = vmatprep.subr.mxu0 0.0
    %3439 = vmatpush1.msra.mxu0 0.0
    %3440 = vmatprep.subr.mxu0 0.0
    %3441 = vmatpush1.msra.mxu0 0.0
    %3442 = vmatprep.subr.mxu0 0.0
    %3443 = vmatpush1.msra.mxu0 0.0
    %3444 = vmatprep.subr.mxu0 0.0
    %3445 = vmatpush1.msra.mxu0 0.0
    %3446 = vmatprep.subr.mxu0 0.0
    %3447 = vmatpush1.msra.mxu0 0.0
    %3448 = vmatprep.subr.mxu0 0.0
    %3449 = vmatpush1.msra.mxu0 0.0
    %3450 = vmatprep.subr.mxu0 0.0
    %3451 = vmatpush1.msra.mxu0 0.0
    %3452 = vmatprep.subr.mxu0 0.0
    %3453 = vmatpush1.msra.mxu0 0.0
    %3454 = vmatprep.subr.mxu0 0.0
    %3455 = vmatpush1.msra.mxu0 %v3431
    %3456 = vmatprep.subr.mxu0 0.0
    %3457 = vmatpush1.msra.mxu0 %v3430
    %3458 = vmatprep.subr.mxu0 0.0
    %3459 = vmatpush1.msra.mxu0 %v3429
    %3460 = vmatprep.subr.mxu0 0.0
    %3461 = vmatpush1.msra.mxu0 %v3428
    %3462 = vmatprep.subr.mxu0 0.0
    %3463 = vmatpush1.msra.mxu0 %v3427
    %3464 = vmatprep.subr.mxu0 0.0
    %3465 = vmatpush1.msra.mxu0 %v3426
    %3466 = vmatprep.subr.mxu0 0.0
    %3467 = vmatpush1.msra.mxu0 %v3425
    %3468 = vmatprep.subr.mxu0 0.0
    %3469 = vmatpush1.msra.mxu0 %v3424
    %3470 = vmatprep.subr.mxu0 0.0
    %3471 = vmatpush2.msra.mxu0 0.0
    %3472 = vmatprep.subr.mxu0 0.0
    %3473 = vmatpush2.msra.mxu0 0.0
    %3474 = vmatprep.subr.mxu0 0.0
    %3475 = vmatpush2.msra.mxu0 0.0
    %3476 = vmatprep.subr.mxu0 0.0
    %3477 = vmatpush2.msra.mxu0 0.0
    %3478 = vmatprep.subr.mxu0 0.0
    %3479 = vmatpush2.msra.mxu0 0.0
    %3480 = vmatprep.subr.mxu0 0.0
    %3481 = vmatpush2.msra.mxu0 0.0
    %3482 = vmatprep.subr.mxu0 0.0
    %3483 = vmatpush2.msra.mxu0 0.0
    %3484 = vmatprep.subr.mxu0 0.0
    %3485 = vmatpush2.msra.mxu0 0.0
    %3486 = vmatprep.subr.mxu0 0.0
    %3487 = vmatpush2.msra.mxu0 0.0
    %3488 = vmatprep.subr.mxu0 0.0
    %3489 = vmatpush2.msra.mxu0 0.0
    %3490 = vmatprep.subr.mxu0 0.0
    %3491 = vmatpush2.msra.mxu0 0.0
    %3492 = vmatprep.subr.mxu0 0.0
    %3493 = vmatpush2.msra.mxu0 0.0
    %3494 = vmatprep.subr.mxu0 0.0
    %3495 = vmatpush2.msra.mxu0 0.0
    %3496 = vmatprep.subr.mxu0 0.0
    %3497 = vmatpush2.msra.mxu0 0.0
    %3498 = vmatprep.subr.mxu0 0.0
    %3499 = vmatpush2.msra.mxu0 0.0
    %3500 = vmatprep.subr.mxu0 0.0
    %3501 = vmatpush2.msra.mxu0 0.0
    %3502 = vmatprep.mubr.f32.mxu0 0.0
    %3503 = vmatmul.mubr.f32.gmra.mxu0 %v3433
    %v3504 = vpop.f32.mrf.mxu0
    %v3505 = vadd.f32 0.0, %v3504
    %v3506 = vpop.f32.mrf.mxu0
    %3507 = vmatprep.mubr.f32.mxu0 0.0
    %3508 = vmatmul.mubr.f32.gmra.mxu0 %v3436
    %v3509 = vpop.f32.mrf.mxu0
    %v3510 = vadd.f32 0.0, %v3509
    %v3511 = vpop.f32.mrf.mxu0
    %3512 = vdwg.mxu0
    %v3513 = vadd.f32 %v3279, %v3505
    %v3514 = vadd.f32 %v3280, %v3510
    %s3515 = scalar_lea.vmem %s17, 1
    %v3516 = vld [vmem:[%s3515] sm:$0x1]
    %v3518 = vlaneseq
    %v3519 = vshrl.u32 %v3518, 7
    %v3520 = vsub.s32 0, %v3519
    %v3521 = vrot.slane %v3516, %v3520
    %v3523 = vadd.f32 %v3513, %v3521
    %v3524 = vadd.f32 %v3514, %v3521
    %v3525 = vld [vmem:[%s18] sm:$0x1]
    %v3526 = vld [vmem:[%s19] sm:$0x1]
    %v3527 = vsel %vm140, %v3523, 0.0
    %3528 = vadd.xlane.f32.xlu0 %v3527
    %v3529 = vpop.xlane.xlu0 %3528
    %v3530 = vsel %vm140, %v3524, 0.0
    %3531 = vadd.xlane.f32.xlu0 %v3530
    %v3532 = vpop.xlane.xlu0 %3531
    %v3533 = vmul.f32 %v3529, %v147
    %v3534 = vmul.f32 %v3532, %v147
    %v3535 = vsub.f32 %v3523, %v3533
    %v3536 = vsub.f32 %v3524, %v3534
    %v3537 = vmul.f32 %v3535, %v3535
    %v3538 = vmul.f32 %v3536, %v3536
    %v3539 = vsel %vm140, %v3537, 0.0
    %3540 = vadd.xlane.f32.xlu0 %v3539
    %v3541 = vpop.xlane.xlu0 %3540
    %v3542 = vsel %vm140, %v3538, 0.0
    %3543 = vadd.xlane.f32.xlu0 %v3542
    %v3544 = vpop.xlane.xlu0 %3543
    %v3545 = vmul.f32 %v3541, %v147
    %v3546 = vmul.f32 %v3544, %v147
    %v3547 = vadd.f32 %v3545, 1e-06
    %v3548 = vadd.f32 %v3546, 1e-06
    %v3549 = vrsqrt.pop %v3547
    %v3550 = vrsqrt.pop %v3548
    %v3551 = vmul.f32 %v3535, %v3549
    %v3552 = vmul.f32 %v3536, %v3550
    %v3554 = vlaneseq
    %v3555 = vshrl.u32 %v3554, 7
    %v3556 = vsub.s32 0, %v3555
    %v3557 = vrot.slane %v3525, %v3556
    %v3559 = vmul.f32 %v3551, %v3557
    %v3560 = vmul.f32 %v3552, %v3557
    %v3562 = vlaneseq
    %v3563 = vshrl.u32 %v3562, 7
    %v3564 = vsub.s32 0, %v3563
    %v3565 = vrot.slane %v3526, %v3564
    %v3567 = vadd.f32 %v3559, %v3565
    %v3568 = vadd.f32 %v3560, %v3565
    %3569 = vst.msk [vmem:[#allocation11] sm:$0xff] %vm140, %v3567
    %3570 = vst.msk [vmem:[#allocation11 + $0x8] sm:$0xff] %vm140, %v3568
    // Predicated region
    $region102: #{tpu_custom_call.1} parent=1 // pred_check
      _
    $region103: #{tpu_custom_call.1} parent=1 // pred_check_branch
      %3572 = sbr.rel (0) target = $region105
    $region104: #{tpu_custom_call.1} parent=1 // pred_region
      %s3574 = ssub.s32 256, 256
      %3575 = vsyncadd [#allocation4], %s3574
      %s3576 = sshll.u32 [#allocation11], 4
      %s3577 = int_to_ptr.vmem [resolvable:$true] %s3576
      %3582 = dma.vmem_to_hbm [thread:$0]  %s3577, 256, %s20, [#allocation4], 128, 128, 8
    $region105: #{tpu_custom_call.1} parent=1 // pred_fallthru
      _
    // Predicated region
    $region106: #{tpu_custom_call.1} parent=1 // pred_check
      _
    $region107: #{tpu_custom_call.1} parent=1 // pred_check_branch
      %3584 = sbr.rel (0) target = $region109
    $region108: #{tpu_custom_call.1} parent=1 // pred_region
      %3585 = dma.done [#allocation4], 256
    $region109: #{tpu_custom_call.1} parent=1 // pred_fallthru
      _
    %3586 = vsyncpa [#allocation3], 1
    %3587 = vsyncpa [#allocation6], 1
    %3588 = vsyncpa [#allocation9], 1
    %3589 = vsyncpa [#allocation4], 1

</llo_original>
